<compile_context>
chip_gen: v7x
topology: tpu7x:2x2x1
jax: 0.10.0
libtpu: 0.0.40
codegen_flags: <defaults>
</compile_context>

<pallas_src>
import numpy as np
import jax
import jax.numpy as jnp
from jax.experimental import pallas as pl
from jax.experimental.pallas import tpu as pltpu

NUM_HEADING_BIN = 12
NUM_SIZE_CLUSTER = 3
N_CLASSES = 3
OUT_DIM = 3 + NUM_HEADING_BIN * 2 + NUM_SIZE_CLUSTER * 4  # 39
OUT_PAD = 128                                             # lane-dense fc3 output width

# packed-bias lane offsets (all multiples of 128 -> tile-aligned slices)
B_OFF_B1, B_OFF_B2, B_OFF_B3 = 0, 128, 256
B_OFF_B4, B_OFF_FC2, B_OFF_FC3 = 512, 1024, 1280
B_PACK_W = 1408

G_TYPE_MEAN_SIZE = jnp.array(
    [[3.88311640418, 1.62856739989, 1.52563191462],
     [0.84422524, 0.66068622, 1.76255119],
     [1.76282397, 0.59706367, 1.73698127]], dtype=jnp.float32)


# ----------------------------------------------------------------------------
# Pallas kernel: fused trunk (conv1..4 + BN + ReLU), per-batch max-pool, FC head
# ----------------------------------------------------------------------------
def make_boxreg_kernel(bs, m):
    """bs = batch size, m = (padded, multiple-of-8) number of points / sample."""

    def kernel(x_ref,
               w1_ref, w2_ref, w3_ref, w4_ref,
               wf1_ref, wf2_ref, wf3_ref,
               bias_ref, bf1_ref,
               out_ref):
        # static lane-aligned slices of the packed bias row (f32)
        b1 = bias_ref[:, B_OFF_B1:B_OFF_B1 + 128]
        b2 = bias_ref[:, B_OFF_B2:B_OFF_B2 + 128]
        b3 = bias_ref[:, B_OFF_B3:B_OFF_B3 + 256]
        b4 = bias_ref[:, B_OFF_B4:B_OFF_B4 + 512]
        bfc2 = bias_ref[:, B_OFF_FC2:B_OFF_FC2 + 256]
        bf3 = bias_ref[:, B_OFF_FC3:B_OFF_FC3 + OUT_PAD]

        # ---- trunk: 1x1 convs == matmuls over all bs*m points at once -------
        # layer 1 kept in f32 (K=4, negligible MXU cost, full-precision coords);
        # layers 2..4 bf16 operands, f32 MXU accumulation; activations are
        # produced directly in bf16 so only one copy is live per layer.
        x = x_ref[...]                                               # [bs*m, 4] f32
        h = jnp.maximum(
            jnp.dot(x, w1_ref[...], preferred_element_type=jnp.float32) + b1,
            0.0).astype(jnp.bfloat16)
        h = jnp.maximum(
            jnp.dot(h, w2_ref[...], preferred_element_type=jnp.float32) + b2,
            0.0).astype(jnp.bfloat16)
        h = jnp.maximum(
            jnp.dot(h, w3_ref[...], preferred_element_type=jnp.float32) + b3,
            0.0).astype(jnp.bfloat16)
        h = jnp.maximum(
            jnp.dot(h, w4_ref[...], preferred_element_type=jnp.float32) + b4,
            0.0).astype(jnp.bfloat16)                                # [bs*m, 512] bf16

        # ---- per-batch global max pool: one sublane reduction ----------------
        # m is a multiple of 8, so the reshape does not cross (8,128) tiles.
        gf = jnp.max(h.reshape(bs, m, 512), axis=1)                  # [bs, 512] bf16

        # ---- FC head, batched over all bs rows -------------------------------
        # one-hot branch of fc1 is folded into the per-batch bias bf1 (exact,
        # since the ReLU comes after the add).
        z = jnp.maximum(
            jnp.dot(gf, wf1_ref[...], preferred_element_type=jnp.float32)
            + bf1_ref[...], 0.0).astype(jnp.bfloat16)
        z = jnp.maximum(
            jnp.dot(z, wf2_ref[...], preferred_element_type=jnp.float32)
            + bfc2, 0.0).astype(jnp.bfloat16)
        # fc3 padded to 128 lanes -> lane-dense store
        out_ref[...] = jnp.dot(z, wf3_ref[...],
                               preferred_element_type=jnp.float32) + bf3

    return kernel


# ----------------------------------------------------------------------------
# Parameter construction (deterministic) with BN folded into weights/biases
# ----------------------------------------------------------------------------
def make_params(key):
    keys = jax.random.split(key, 14)
    eps = 1e-5
    # BatchNorm defaults: gamma=1, beta=0, running_mean=0, running_var=1
    bn_scale = 1.0 / np.sqrt(1.0 + eps)

    def w(k, shape, scale=0.05):
        return jax.random.normal(k, shape, jnp.float32) * scale

    def b(k, n, scale=0.01):
        return jax.random.normal(k, (1, n), jnp.float32) * scale

    # conv trunk (folded BN)
    W1, B1 = w(keys[0], (4, 128)) * bn_scale,   b(keys[1], 128) * bn_scale
    W2, B2 = w(keys[2], (128, 128)) * bn_scale, b(keys[3], 128) * bn_scale
    W3, B3 = w(keys[4], (128, 256)) * bn_scale, b(keys[5], 256) * bn_scale
    W4, B4 = w(keys[6], (256, 512)) * bn_scale, b(keys[7], 512) * bn_scale

    # fc head
    Wfc1 = w(keys[8], (512 + N_CLASSES, 512)) * bn_scale
    Bfc1 = b(keys[9], 512) * bn_scale
    Wfc2 = w(keys[10], (512, 256)) * bn_scale
    Bfc2 = b(keys[11], 256) * bn_scale
    Wfc3 = w(keys[12], (256, OUT_DIM))
    Bfc3 = b(keys[13], OUT_DIM)

    return dict(W1=W1, B1=B1, W2=W2, B2=B2, W3=W3, B3=B3, W4=W4, B4=B4,
                Wfc1a=Wfc1[:512], Wfc1b=Wfc1[512:], Bfc1=Bfc1,
                Wfc2=Wfc2, Bfc2=Bfc2, Wfc3=Wfc3, Bfc3=Bfc3)


# ----------------------------------------------------------------------------
# One-time prep: bf16 casts, fc3 lane padding, bias packing (hoisted out of
# the per-call forward path).
# ----------------------------------------------------------------------------
def prepare_params(params):
    p = params
    bfc3_pad = jnp.zeros((1, OUT_PAD), jnp.float32).at[:, :OUT_DIM].set(p['Bfc3'])
    bias_packed = jnp.concatenate(
        [p['B1'], p['B2'], p['B3'], p['B4'], p['Bfc2'], bfc3_pad],
        axis=1)                                              # [1, 1408] f32
    assert bias_packed.shape == (1, B_PACK_W)
    wf3_pad = jnp.zeros((256, OUT_PAD), jnp.float32).at[:, :OUT_DIM].set(p['Wfc3'])

    bf16 = lambda a: a.astype(jnp.bfloat16)
    prep = dict(
        W1=p['W1'],                                  # layer 1 stays f32
        W2=bf16(p['W2']), W3=bf16(p['W3']), W4=bf16(p['W4']),
        Wfc1a=bf16(p['Wfc1a']), Wfc2=bf16(p['Wfc2']), Wfc3=bf16(wf3_pad),
        bias_packed=bias_packed,
        # kept f32 for the (tiny) per-call one-hot fold
        Bfc1=p['Bfc1'], Wfc1b=p['Wfc1b'],
    )
    # force materialization so per-call forwards just DMA existing arrays
    return jax.tree_util.tree_map(jax.block_until_ready, prep)


# ----------------------------------------------------------------------------
# Wrapper: pallas_call + plain-JAX glue for box assembly
# ----------------------------------------------------------------------------
def boxregnet_forward(prep, data_dict):
    points = data_dict['points']                     # [bs, 4, m]  (NCL, as in PyTorch)
    center = data_dict['center']                     # [bs, 3]
    bs, _, m = points.shape

    # channels-last, then pad m to a multiple of 8 (sublane) by repeating the
    # last point; duplicate points cannot change the per-batch max pool.
    m_pad = ((m + 7) // 8) * 8
    pts = jnp.transpose(points, (0, 2, 1)).astype(jnp.float32)       # [bs, m, 4]
    if m_pad != m:
        pad = jnp.broadcast_to(pts[:, -1:, :], (bs, m_pad - m, 4))
        pts = jnp.concatenate([pts, pad], axis=1)
    x_flat = pts.reshape(bs * m_pad, 4)                              # [bs*m_pad, 4] f32

    onehot = data_dict['cls_pred'].reshape(bs, N_CLASSES).astype(jnp.float32)
    # fold the one-hot branch of fc1 into a per-batch bias (tiny per-call matmul;
    # exact because the ReLU follows the add)
    bf1_eff = prep['Bfc1'] + onehot @ prep['Wfc1b']                  # [bs, 512] f32

    args = (x_flat,
            prep['W1'], prep['W2'], prep['W3'], prep['W4'],
            prep['Wfc1a'], prep['Wfc2'], prep['Wfc3'],
            prep['bias_packed'], bf1_eff)

    # advisory cost estimate so XLA can overlap this call with surrounding glue
    M = bs * m_pad
    flops = 2 * M * (4 * 128 + 128 * 128 + 128 * 256 + 256 * 512) \
        + 2 * bs * (512 * 512 + 512 * 256 + 256 * OUT_PAD)
    bytes_accessed = int(sum(np.prod(a.shape) * a.dtype.itemsize for a in args)
                         + bs * OUT_PAD * 4)

    vmem_spec = pl.BlockSpec(memory_space=pltpu.MemorySpace.VMEM)
    out_pad = pl.pallas_call(
        make_boxreg_kernel(bs, m_pad),
        out_shape=jax.ShapeDtypeStruct((bs, OUT_PAD), jnp.float32),
        in_specs=[vmem_spec] * len(args),
        out_specs=vmem_spec,
        cost_estimate=pl.CostEstimate(flops=flops, transcendentals=0,
                                      bytes_accessed=bytes_accessed),
    )(*args)
    # TODO(synk): for much larger bs*m, add an M-tiled grid (constant-index
    # weight BlockSpecs, 2-way "parallel" axis for v7x's 2 TensorCores, running
    # max in VMEM scratch + pl.when-gated FC head) and/or cross-call weight
    # prefetch; unnecessary at bs*m = 256 where the call is launch/DMA bound.

    # slice the real 39 regression outputs BEFORE any argmax / post-processing
    box_reg = out_pad[:, :OUT_DIM]                   # [bs, 39]

    # --------- post-processing (glue, matches torch semantics) ---------------
    center_delta = box_reg[:, :3]
    new_center = center + center_delta

    c = 3
    head_scores = box_reg[:, c:c + NUM_HEADING_BIN]
    c += NUM_HEADING_BIN
    head_res_norm = box_reg[:, c:c + NUM_HEADING_BIN]
    head_res = head_res_norm * (np.pi / NUM_HEADING_BIN)
    c += NUM_HEADING_BIN
    size_scores = box_reg[:, c:c + NUM_SIZE_CLUSTER]
    c += NUM_SIZE_CLUSTER
    size_res_norm = box_reg[:, c:c + 3 * NUM_SIZE_CLUSTER].reshape(bs, NUM_SIZE_CLUSTER, 3)
    size_res = size_res_norm * G_TYPE_MEAN_SIZE[None]

    heading_class = jnp.argmax(head_scores, axis=1)
    heading_residual = jnp.take_along_axis(head_res, heading_class[:, None], axis=1)[:, 0]
    size_class = jnp.argmax(size_scores, axis=1)
    size_residual = jnp.take_along_axis(size_res, size_class[:, None, None], axis=1)[:, 0, :]

    angle_per_class = 2.0 * np.pi / float(NUM_HEADING_BIN)
    angle = heading_class.astype(jnp.float32) * angle_per_class + heading_residual
    angle = jnp.where(angle > np.pi, angle - 2.0 * np.pi, angle)   # class2angle wrap

    box_size = G_TYPE_MEAN_SIZE[size_class] + size_residual
    # NOTE: original PyTorch code assembles box_pred with the PRE-update center
    box_pred = jnp.concatenate([center, box_size, angle[:, None]], axis=1)  # [bs, 7]

    out = dict(data_dict)
    out.update({'center_last': center,
                'center': new_center,
                'box_reg': box_reg,
                'box_pred': box_pred})
    return out


# ----------------------------------------------------------------------------
if __name__ == "__main__":
    bs, m = 2, 128
    key = jax.random.PRNGKey(0)
    kp, kx, kc, kcls = jax.random.split(key, 4)

    params = make_params(kp)
    prep = prepare_params(params)                    # one-time, hoisted out of forward

    points = jax.random.normal(kx, (bs, 4, m), jnp.float32)          # [bs, 4, m] (NCL)
    center = jax.random.normal(kc, (bs, 3), jnp.float32)
    cls_idx = jax.random.randint(kcls, (bs,), 0, N_CLASSES)
    cls_pred = jax.nn.one_hot(cls_idx, N_CLASSES, dtype=jnp.float32)  # [bs, 3]

    data_dict = {'batch_size': bs,
                 'points': points,
                 'cls_pred': cls_pred,
                 'center': center}

    out = boxregnet_forward(prep, data_dict)
    jax.block_until_ready(out['box_pred'])
    jax.block_until_ready(out['box_reg'])

    assert out['box_reg'].shape == (bs, OUT_DIM)
    assert out['box_pred'].shape == (bs, 7)
    assert out['center'].shape == (bs, 3)
    # TODO(synk): get_loss / huber_loss / get_box3d_corners* are training-only and
    # not part of the forward pass; they remain unimplemented here.
    print("KERNEL_OK")
</pallas_src>

<mosaic_0001>
module attributes {stable_mosaic.version = 11 : i64} {
  func.func @kernel(%arg0: memref<256x4xf32, #tpu.memory_space<vmem>>, %arg1: memref<4x128xf32, #tpu.memory_space<vmem>>, %arg2: memref<128x128xbf16, #tpu.memory_space<vmem>>, %arg3: memref<128x256xbf16, #tpu.memory_space<vmem>>, %arg4: memref<256x512xbf16, #tpu.memory_space<vmem>>, %arg5: memref<512x512xbf16, #tpu.memory_space<vmem>>, %arg6: memref<512x256xbf16, #tpu.memory_space<vmem>>, %arg7: memref<256x128xbf16, #tpu.memory_space<vmem>>, %arg8: memref<1x1408xf32, #tpu.memory_space<vmem>>, %arg9: memref<2x512xf32, #tpu.memory_space<vmem>>, %arg10: memref<2x128xf32, #tpu.memory_space<vmem>>) attributes {dimension_semantics = [], scalar_prefetch = 0 : i64, scratch_operands = 0 : i64, tpu.core_type = #tpu.core_type<tc>} {
    %c0 = arith.constant 0 : index
    %c0_0 = arith.constant 0 : index
    %0 = vector.load %arg8[%c0, %c0_0] : memref<1x1408xf32, #tpu.memory_space<vmem>>, vector<1x128xf32>
    %c0_1 = arith.constant 0 : index
    %c128 = arith.constant 128 : index
    %1 = vector.load %arg8[%c0_1, %c128] : memref<1x1408xf32, #tpu.memory_space<vmem>>, vector<1x128xf32>
    %c0_2 = arith.constant 0 : index
    %c256 = arith.constant 256 : index
    %2 = vector.load %arg8[%c0_2, %c256] : memref<1x1408xf32, #tpu.memory_space<vmem>>, vector<1x256xf32>
    %c0_3 = arith.constant 0 : index
    %c512 = arith.constant 512 : index
    %3 = vector.load %arg8[%c0_3, %c512] : memref<1x1408xf32, #tpu.memory_space<vmem>>, vector<1x512xf32>
    %c0_4 = arith.constant 0 : index
    %c1024 = arith.constant 1024 : index
    %4 = vector.load %arg8[%c0_4, %c1024] : memref<1x1408xf32, #tpu.memory_space<vmem>>, vector<1x256xf32>
    %c0_5 = arith.constant 0 : index
    %c1280 = arith.constant 1280 : index
    %5 = vector.load %arg8[%c0_5, %c1280] : memref<1x1408xf32, #tpu.memory_space<vmem>>, vector<1x128xf32>
    %c0_6 = arith.constant 0 : index
    %c0_7 = arith.constant 0 : index
    %6 = vector.load %arg0[%c0_6, %c0_7] : memref<256x4xf32, #tpu.memory_space<vmem>>, vector<256x4xf32>
    %c0_8 = arith.constant 0 : index
    %c0_9 = arith.constant 0 : index
    %7 = vector.load %arg1[%c0_8, %c0_9] : memref<4x128xf32, #tpu.memory_space<vmem>>, vector<4x128xf32>
    %cst = arith.constant dense<0.000000e+00> : vector<256x128xf32>
    %8 = tpu.matmul %6, %7, %cst {dimension_numbers = #tpu.dot_dimension_numbers<[1], [0], [0], [1], [0, 0, 1, 1], [], []>} : vector<256x4xf32>, vector<4x128xf32>, vector<256x128xf32> -> vector<256x128xf32>
    %9 = vector.broadcast %0 : vector<1x128xf32> to vector<256x128xf32>
    %10 = arith.addf %8, %9 : vector<256x128xf32>
    %cst_10 = arith.constant 0.000000e+00 : f32
    %11 = vector.broadcast %cst_10 : f32 to vector<256x128xf32>
    %12 = arith.maximumf %10, %11 : vector<256x128xf32>
    %13 = arith.truncf %12 : vector<256x128xf32> to vector<256x128xbf16>
    %c0_11 = arith.constant 0 : index
    %c0_12 = arith.constant 0 : index
    %14 = vector.load %arg2[%c0_11, %c0_12] : memref<128x128xbf16, #tpu.memory_space<vmem>>, vector<128x128xbf16>
    %cst_13 = arith.constant dense<0.000000e+00> : vector<256x128xf32>
    %15 = tpu.matmul %13, %14, %cst_13 {dimension_numbers = #tpu.dot_dimension_numbers<[1], [0], [0], [1], [0, 0, 1, 1], [], []>} : vector<256x128xbf16>, vector<128x128xbf16>, vector<256x128xf32> -> vector<256x128xf32>
    %16 = vector.broadcast %1 : vector<1x128xf32> to vector<256x128xf32>
    %17 = arith.addf %15, %16 : vector<256x128xf32>
    %cst_14 = arith.constant 0.000000e+00 : f32
    %18 = vector.broadcast %cst_14 : f32 to vector<256x128xf32>
    %19 = arith.maximumf %17, %18 : vector<256x128xf32>
    %20 = arith.truncf %19 : vector<256x128xf32> to vector<256x128xbf16>
    %c0_15 = arith.constant 0 : index
    %c0_16 = arith.constant 0 : index
    %21 = vector.load %arg3[%c0_15, %c0_16] : memref<128x256xbf16, #tpu.memory_space<vmem>>, vector<128x256xbf16>
    %cst_17 = arith.constant dense<0.000000e+00> : vector<256x256xf32>
    %22 = tpu.matmul %20, %21, %cst_17 {dimension_numbers = #tpu.dot_dimension_numbers<[1], [0], [0], [1], [0, 0, 1, 1], [], []>} : vector<256x128xbf16>, vector<128x256xbf16>, vector<256x256xf32> -> vector<256x256xf32>
    %23 = vector.broadcast %2 : vector<1x256xf32> to vector<256x256xf32>
    %24 = arith.addf %22, %23 : vector<256x256xf32>
    %cst_18 = arith.constant 0.000000e+00 : f32
    %25 = vector.broadcast %cst_18 : f32 to vector<256x256xf32>
    %26 = arith.maximumf %24, %25 : vector<256x256xf32>
    %27 = arith.truncf %26 : vector<256x256xf32> to vector<256x256xbf16>
    %c0_19 = arith.constant 0 : index
    %c0_20 = arith.constant 0 : index
    %28 = vector.load %arg4[%c0_19, %c0_20] : memref<256x512xbf16, #tpu.memory_space<vmem>>, vector<256x512xbf16>
    %cst_21 = arith.constant dense<0.000000e+00> : vector<256x512xf32>
    %29 = tpu.matmul %27, %28, %cst_21 {dimension_numbers = #tpu.dot_dimension_numbers<[1], [0], [0], [1], [0, 0, 1, 1], [], []>} : vector<256x256xbf16>, vector<256x512xbf16>, vector<256x512xf32> -> vector<256x512xf32>
    %30 = vector.broadcast %3 : vector<1x512xf32> to vector<256x512xf32>
    %31 = arith.addf %29, %30 : vector<256x512xf32>
    %cst_22 = arith.constant 0.000000e+00 : f32
    %32 = vector.broadcast %cst_22 : f32 to vector<256x512xf32>
    %33 = arith.maximumf %31, %32 : vector<256x512xf32>
    %34 = arith.truncf %33 : vector<256x512xf32> to vector<256x512xbf16>
    %35 = vector.shape_cast %34 : vector<256x512xbf16> to vector<2x128x512xbf16>
    %cst_23 = arith.constant dense<0xFF80> : vector<2x512xbf16>
    %36 = vector.multi_reduction <maximumf>, %35, %cst_23 [1] : vector<2x128x512xbf16> to vector<2x512xbf16>
    %c0_24 = arith.constant 0 : index
    %c0_25 = arith.constant 0 : index
    %37 = vector.load %arg5[%c0_24, %c0_25] : memref<512x512xbf16, #tpu.memory_space<vmem>>, vector<512x512xbf16>
    %cst_26 = arith.constant dense<0.000000e+00> : vector<2x512xf32>
    %38 = tpu.matmul %36, %37, %cst_26 {dimension_numbers = #tpu.dot_dimension_numbers<[1], [0], [0], [1], [0, 0, 1, 1], [], []>} : vector<2x512xbf16>, vector<512x512xbf16>, vector<2x512xf32> -> vector<2x512xf32>
    %c0_27 = arith.constant 0 : index
    %c0_28 = arith.constant 0 : index
    %39 = vector.load %arg9[%c0_27, %c0_28] : memref<2x512xf32, #tpu.memory_space<vmem>>, vector<2x512xf32>
    %40 = arith.addf %38, %39 : vector<2x512xf32>
    %cst_29 = arith.constant 0.000000e+00 : f32
    %41 = vector.broadcast %cst_29 : f32 to vector<2x512xf32>
    %42 = arith.maximumf %40, %41 : vector<2x512xf32>
    %43 = arith.truncf %42 : vector<2x512xf32> to vector<2x512xbf16>
    %c0_30 = arith.constant 0 : index
    %c0_31 = arith.constant 0 : index
    %44 = vector.load %arg6[%c0_30, %c0_31] : memref<512x256xbf16, #tpu.memory_space<vmem>>, vector<512x256xbf16>
    %cst_32 = arith.constant dense<0.000000e+00> : vector<2x256xf32>
    %45 = tpu.matmul %43, %44, %cst_32 {dimension_numbers = #tpu.dot_dimension_numbers<[1], [0], [0], [1], [0, 0, 1, 1], [], []>} : vector<2x512xbf16>, vector<512x256xbf16>, vector<2x256xf32> -> vector<2x256xf32>
    %46 = vector.broadcast %4 : vector<1x256xf32> to vector<2x256xf32>
    %47 = arith.addf %45, %46 : vector<2x256xf32>
    %cst_33 = arith.constant 0.000000e+00 : f32
    %48 = vector.broadcast %cst_33 : f32 to vector<2x256xf32>
    %49 = arith.maximumf %47, %48 : vector<2x256xf32>
    %50 = arith.truncf %49 : vector<2x256xf32> to vector<2x256xbf16>
    %c0_34 = arith.constant 0 : index
    %c0_35 = arith.constant 0 : index
    %51 = vector.load %arg7[%c0_34, %c0_35] : memref<256x128xbf16, #tpu.memory_space<vmem>>, vector<256x128xbf16>
    %cst_36 = arith.constant dense<0.000000e+00> : vector<2x128xf32>
    %52 = tpu.matmul %50, %51, %cst_36 {dimension_numbers = #tpu.dot_dimension_numbers<[1], [0], [0], [1], [0, 0, 1, 1], [], []>} : vector<2x256xbf16>, vector<256x128xbf16>, vector<2x128xf32> -> vector<2x128xf32>
    %53 = vector.broadcast %5 : vector<1x128xf32> to vector<2x128xf32>
    %54 = arith.addf %52, %53 : vector<2x128xf32>
    %c0_37 = arith.constant 0 : index
    %c0_38 = arith.constant 0 : index
    %55 = vector.load %arg10[%c0_37, %c0_38] : memref<2x128xf32, #tpu.memory_space<vmem>>, vector<2x128xf32>
    tpu.vector_store %arg10[%c0_37, %c0_38], %54 {strides = array<i32>} : memref<2x128xf32, #tpu.memory_space<vmem>>, vector<2x128xf32>,
    return
  }
}

</mosaic_0001>

<llo_original>
// kernel: tpu_custom_call.1
$region0: #{tpu_custom_call.1}
  #allocation0 [shape = 'u32[]', space=smem, size = 0x4, offset = 0x4, fixed_abs, tag = 'smem constant byte address 0x4 - core index']
  #allocation1 [shape = 'u32[144,128]{1,0:T(1,128)}', space=vmem, size = 0x12000, scoped, tag = 'internal scratch']
  %s0 = inlined_call_operand.vmem [shape: f32[256,4], index: 0, kind: input, shape index: {}]
  %s1 = inlined_call_operand.hbm [shape: f32[4,128], index: 1, kind: input, shape index: {}]
  %s2 = inlined_call_operand.hbm [shape: bf16[128,128], index: 2, kind: input, shape index: {}]
  %s3 = inlined_call_operand.vmem [shape: bf16[128,256], index: 3, kind: input, shape index: {}]
  %s4 = inlined_call_operand.hbm [shape: bf16[256,512], index: 4, kind: input, shape index: {}]
  %s5 = inlined_call_operand.hbm [shape: bf16[512,512], index: 5, kind: input, shape index: {}]
  %s6 = inlined_call_operand.hbm [shape: bf16[512,256], index: 6, kind: input, shape index: {}]
  %s7 = inlined_call_operand.vmem [shape: bf16[256,128], index: 7, kind: input, shape index: {}]
  %s8 = inlined_call_operand.vmem [shape: f32[1,1408], index: 8, kind: input, shape index: {}]
  %s9 = inlined_call_operand.vmem [shape: f32[2,512], index: 9, kind: input, shape index: {}]
  %s10 = inlined_call_operand.hbm [shape: f32[2,128], index: 10, kind: output, shape index: {}]
  %s11 = sld [smem:[#allocation0]]
  $region70: #{tpu_custom_call.1} parent=0
    _
  %s13 = ssub.s32 1, %s11
  %s14 = scalar_select 0, %s13, %s11
  $region1: #{tpu_custom_call.1} parent=0
    #allocation2 [shape = 'u8[2048]{0}', space=vmem, size = 0x800, scoped, tag = 'input window, operand 1, single buffered']
    #allocation3 [shape = 's32[1]{0}', space=sflag, size = 0x4, scoped, tag = 'scoped memory for tpu_custom_call.1']
    #allocation4 [shape = 's32[1]{0}', space=sflag, size = 0x4, scoped, tag = 'scoped memory for tpu_custom_call.1']
    #allocation5 [shape = 'u8[32768]{0}', space=vmem, size = 0x8000, scoped, tag = 'input window, operand 2, single buffered']
    #allocation6 [shape = 's32[1]{0}', space=sflag, size = 0x4, scoped, tag = 'scoped memory for tpu_custom_call.1']
    #allocation7 [shape = 'u8[262144]{0}', space=vmem, size = 0x40000, scoped, tag = 'input window, operand 4, single buffered']
    #allocation8 [shape = 'u8[524288]{0}', space=vmem, size = 0x80000, scoped, tag = 'input window, operand 5, single buffered']
    #allocation9 [shape = 's32[1]{0}', space=sflag, size = 0x4, scoped, tag = 'scoped memory for tpu_custom_call.1']
    #allocation10 [shape = 'u8[262144]{0}', space=vmem, size = 0x40000, scoped, tag = 'input window, operand 6, single buffered']
    #allocation11 [shape = 'u8[1024]{0}', space=vmem, size = 0x400, scoped, tag = 'output window, operand 0, single buffered']
    %15 = vsyncpa [#allocation3], 0
    %16 = vsyncpa [#allocation6], 0
    %17 = vsyncpa [#allocation9], 0
    %18 = vsyncpa [#allocation4], 0
    // Predicated region
    $region2: #{tpu_custom_call.1} parent=1 // pred_check
      _
    $region3: #{tpu_custom_call.1} parent=1 // pred_check_branch
      %20 = sbr.rel (0) target = $region5
    $region4: #{tpu_custom_call.1} parent=1 // pred_region
      _
    $region5: #{tpu_custom_call.1} parent=1 // pred_fallthru
      _
    // Predicated region
    $region6: #{tpu_custom_call.1} parent=1 // pred_check
      _
    $region7: #{tpu_custom_call.1} parent=1 // pred_check_branch
      %22 = sbr.rel (0) target = $region9
    $region8: #{tpu_custom_call.1} parent=1 // pred_region
      %s24 = ssub.s32 64, 64
      %25 = vsyncadd [#allocation3], %s24
      %s27 = sshll.u32 [#allocation2], 4
      %s28 = int_to_ptr.vmem [resolvable:$true] %s27
      %30 = dma.hbm_to_vmem [thread:$0]  %s1, 64, %s28, [#allocation3]
    $region9: #{tpu_custom_call.1} parent=1 // pred_fallthru
      _
    // Predicated region
    $region10: #{tpu_custom_call.1} parent=1 // pred_check
      _
    $region11: #{tpu_custom_call.1} parent=1 // pred_check_branch
      %32 = sbr.rel (0) target = $region13
    $region12: #{tpu_custom_call.1} parent=1 // pred_region
      %s34 = ssub.s32 1024, 1024
      %35 = vsyncadd [#allocation6], %s34
      %s36 = sshll.u32 [#allocation5], 4
      %s37 = int_to_ptr.vmem [resolvable:$true] %s36
      %42 = dma.hbm_to_vmem [thread:$0]  %s2, 1024, %s37, [#allocation6], 64, 64, 4
    $region13: #{tpu_custom_call.1} parent=1 // pred_fallthru
      _
    // Predicated region
    $region14: #{tpu_custom_call.1} parent=1 // pred_check
      _
    $region15: #{tpu_custom_call.1} parent=1 // pred_check_branch
      %44 = sbr.rel (0) target = $region17
    $region16: #{tpu_custom_call.1} parent=1 // pred_region
      _
    $region17: #{tpu_custom_call.1} parent=1 // pred_fallthru
      _
    // Predicated region
    $region18: #{tpu_custom_call.1} parent=1 // pred_check
      _
    $region19: #{tpu_custom_call.1} parent=1 // pred_check_branch
      %46 = sbr.rel (0) target = $region21
    $region20: #{tpu_custom_call.1} parent=1 // pred_region
      %s48 = ssub.s32 8192, 8192
      %49 = vsyncadd [#allocation6], %s48
      %s50 = sshll.u32 [#allocation7], 4
      %s51 = int_to_ptr.vmem [resolvable:$true] %s50
      %56 = dma.hbm_to_vmem [thread:$0]  %s4, 8192, %s51, [#allocation6], 256, 256, 16
    $region21: #{tpu_custom_call.1} parent=1 // pred_fallthru
      _
    // Predicated region
    $region22: #{tpu_custom_call.1} parent=1 // pred_check
      _
    $region23: #{tpu_custom_call.1} parent=1 // pred_check_branch
      %58 = sbr.rel (0) target = $region25
    $region24: #{tpu_custom_call.1} parent=1 // pred_region
      %s60 = ssub.s32 16384, 16384
      %61 = vsyncadd [#allocation9], %s60
      %s62 = sshll.u32 [#allocation8], 4
      %s63 = int_to_ptr.vmem [resolvable:$true] %s62
      %68 = dma.hbm_to_vmem [thread:$0]  %s5, 16384, %s63, [#allocation9], 256, 256, 16
    $region25: #{tpu_custom_call.1} parent=1 // pred_fallthru
      _
    // Predicated region
    $region26: #{tpu_custom_call.1} parent=1 // pred_check
      _
    $region27: #{tpu_custom_call.1} parent=1 // pred_check_branch
      %70 = sbr.rel (0) target = $region29
    $region28: #{tpu_custom_call.1} parent=1 // pred_region
      %s72 = ssub.s32 8192, 8192
      %73 = vsyncadd [#allocation9], %s72
      %s74 = sshll.u32 [#allocation10], 4
      %s75 = int_to_ptr.vmem [resolvable:$true] %s74
      %80 = dma.hbm_to_vmem [thread:$0]  %s6, 8192, %s75, [#allocation9], 128, 128, 8
    $region29: #{tpu_custom_call.1} parent=1 // pred_fallthru
      _
    // Predicated region
    $region30: #{tpu_custom_call.1} parent=1 // pred_check
      _
    $region31: #{tpu_custom_call.1} parent=1 // pred_check_branch
      %82 = sbr.rel (0) target = $region33
    $region32: #{tpu_custom_call.1} parent=1 // pred_region
      _
    $region33: #{tpu_custom_call.1} parent=1 // pred_fallthru
      _
    // Predicated region
    $region34: #{tpu_custom_call.1} parent=1 // pred_check
      _
    $region35: #{tpu_custom_call.1} parent=1 // pred_check_branch
      %84 = sbr.rel (0) target = $region37
    $region36: #{tpu_custom_call.1} parent=1 // pred_region
      _
    $region37: #{tpu_custom_call.1} parent=1 // pred_fallthru
      _
    // Predicated region
    $region38: #{tpu_custom_call.1} parent=1 // pred_check
      _
    $region39: #{tpu_custom_call.1} parent=1 // pred_check_branch
      %86 = sbr.rel (0) target = $region41
    $region40: #{tpu_custom_call.1} parent=1 // pred_region
      _
    $region41: #{tpu_custom_call.1} parent=1 // pred_fallthru
      _
    // Predicated region
    $region42: #{tpu_custom_call.1} parent=1 // pred_check
      _
    $region43: #{tpu_custom_call.1} parent=1 // pred_check_branch
      %88 = sbr.rel (0) target = $region45
    $region44: #{tpu_custom_call.1} parent=1 // pred_region
      %89 = dma.done [#allocation3], 64
    $region45: #{tpu_custom_call.1} parent=1 // pred_fallthru
      _
    // Predicated region
    $region46: #{tpu_custom_call.1} parent=1 // pred_check
      _
    $region47: #{tpu_custom_call.1} parent=1 // pred_check_branch
      %91 = sbr.rel (0) target = $region49
    $region48: #{tpu_custom_call.1} parent=1 // pred_region
      %92 = dma.done [#allocation6], 1024
    $region49: #{tpu_custom_call.1} parent=1 // pred_fallthru
      _
    // Predicated region
    $region50: #{tpu_custom_call.1} parent=1 // pred_check
      _
    $region51: #{tpu_custom_call.1} parent=1 // pred_check_branch
      %94 = sbr.rel (0) target = $region53
    $region52: #{tpu_custom_call.1} parent=1 // pred_region
      %95 = dma.done [#allocation6], 8192
    $region53: #{tpu_custom_call.1} parent=1 // pred_fallthru
      _
    // Predicated region
    $region54: #{tpu_custom_call.1} parent=1 // pred_check
      _
    $region55: #{tpu_custom_call.1} parent=1 // pred_check_branch
      %97 = sbr.rel (0) target = $region57
    $region56: #{tpu_custom_call.1} parent=1 // pred_region
      %98 = dma.done [#allocation9], 16384
    $region57: #{tpu_custom_call.1} parent=1 // pred_fallthru
      _
    // Predicated region
    $region58: #{tpu_custom_call.1} parent=1 // pred_check
      _
    $region59: #{tpu_custom_call.1} parent=1 // pred_check_branch
      %100 = sbr.rel (0) target = $region61
    $region60: #{tpu_custom_call.1} parent=1 // pred_region
      %101 = dma.done [#allocation9], 8192
    $region61: #{tpu_custom_call.1} parent=1 // pred_fallthru
      _
    %v103 = vld [vmem:[%s8] sm:$0x1]
    %v104 = vld [vmem:[%s8 + $0x1] sm:$0x1]
    %v105 = vld [vmem:[%s8 + $0x2] sm:$0x3]
    %v106 = vld [vmem:[%s8 + $0x4] sm:$0xf]
    %v107 = vld [vmem:[%s8 + $0x8] sm:$0x3]
    %v108 = vld [vmem:[%s8 + $0xa] sm:$0x1]
    %v109 = vld [vmem:[%s0] sm:$0xff]
    %v110 = vld [vmem:[%s0 + $0x8] sm:$0xff]
    %v111 = vld [vmem:[%s0 + $0x10] sm:$0xff]
    %v112 = vld [vmem:[%s0 + $0x18] sm:$0xff]
    %v113 = vld [vmem:[%s0 + $0x20] sm:$0xff]
    %v114 = vld [vmem:[%s0 + $0x28] sm:$0xff]
    %v115 = vld [vmem:[%s0 + $0x30] sm:$0xff]
    %v116 = vld [vmem:[%s0 + $0x38] sm:$0xff]
    %v117 = vld [vmem:[%s0 + $0x40] sm:$0xff]
    %v118 = vld [vmem:[%s0 + $0x48] sm:$0xff]
    %v119 = vld [vmem:[%s0 + $0x50] sm:$0xff]
    %v120 = vld [vmem:[%s0 + $0x58] sm:$0xff]
    %v121 = vld [vmem:[%s0 + $0x60] sm:$0xff]
    %v122 = vld [vmem:[%s0 + $0x68] sm:$0xff]
    %v123 = vld [vmem:[%s0 + $0x70] sm:$0xff]
    %v124 = vld [vmem:[%s0 + $0x78] sm:$0xff]
    %v125 = vld [vmem:[%s0 + $0x80] sm:$0xff]
    %v126 = vld [vmem:[%s0 + $0x88] sm:$0xff]
    %v127 = vld [vmem:[%s0 + $0x90] sm:$0xff]
    %v128 = vld [vmem:[%s0 + $0x98] sm:$0xff]
    %v129 = vld [vmem:[%s0 + $0xa0] sm:$0xff]
    %v130 = vld [vmem:[%s0 + $0xa8] sm:$0xff]
    %v131 = vld [vmem:[%s0 + $0xb0] sm:$0xff]
    %v132 = vld [vmem:[%s0 + $0xb8] sm:$0xff]
    %v133 = vld [vmem:[%s0 + $0xc0] sm:$0xff]
    %v134 = vld [vmem:[%s0 + $0xc8] sm:$0xff]
    %v135 = vld [vmem:[%s0 + $0xd0] sm:$0xff]
    %v136 = vld [vmem:[%s0 + $0xd8] sm:$0xff]
    %v137 = vld [vmem:[%s0 + $0xe0] sm:$0xff]
    %v138 = vld [vmem:[%s0 + $0xe8] sm:$0xff]
    %v139 = vld [vmem:[%s0 + $0xf0] sm:$0xff]
    %v140 = vld [vmem:[%s0 + $0xf8] sm:$0xff]
    %v141 = vld [vmem:[#allocation2] sm:$0xf]
    %v143 = vlaneseq
    %v144 = vshrl.u32 %v143, 7
    %v145 = vsub.s32 0, %v144
    %v146 = vrot.slane %v103, %v145
    %vm148 = vcmask 31744
    %v150 = vsel %vm148, %v109, 0
    %v153 = vsel %vm148, %v110, 0
    %v156 = vsel %vm148, %v111, 0
    %v159 = vsel %vm148, %v112, 0
    %v162 = vsel %vm148, %v113, 0
    %v165 = vsel %vm148, %v114, 0
    %v168 = vsel %vm148, %v115, 0
    %v171 = vsel %vm148, %v116, 0
    %v174 = vsel %vm148, %v117, 0
    %v177 = vsel %vm148, %v118, 0
    %v180 = vsel %vm148, %v119, 0
    %v183 = vsel %vm148, %v120, 0
    %v186 = vsel %vm148, %v121, 0
    %v189 = vsel %vm148, %v122, 0
    %v192 = vsel %vm148, %v123, 0
    %v195 = vsel %vm148, %v124, 0
    %v198 = vsel %vm148, %v125, 0
    %v201 = vsel %vm148, %v126, 0
    %v204 = vsel %vm148, %v127, 0
    %v207 = vsel %vm148, %v128, 0
    %v210 = vsel %vm148, %v129, 0
    %v213 = vsel %vm148, %v130, 0
    %v216 = vsel %vm148, %v131, 0
    %v219 = vsel %vm148, %v132, 0
    %v222 = vsel %vm148, %v133, 0
    %v225 = vsel %vm148, %v134, 0
    %v228 = vsel %vm148, %v135, 0
    %v231 = vsel %vm148, %v136, 0
    %v234 = vsel %vm148, %v137, 0
    %v237 = vsel %vm148, %v138, 0
    %v240 = vsel %vm148, %v139, 0
    %v243 = vsel %vm148, %v140, 0
    %vm245 = vcmask 1043456
    %v247 = vsel %vm245, %v141, 0
    %249 = vmatprep.subr.mxu0 0.0
    %250 = vmatpush1.msra.mxu0 %v247
    %251 = vmatprep.subr.mxu0 0.0
    %252 = vmatpush1.msra.mxu0 0.0
    %253 = vmatprep.subr.mxu0 0.0
    %254 = vmatpush1.msra.mxu0 0.0
    %255 = vmatprep.subr.mxu0 0.0
    %256 = vmatpush1.msra.mxu0 0.0
    %257 = vmatprep.subr.mxu0 0.0
    %258 = vmatpush1.msra.mxu0 0.0
    %259 = vmatprep.subr.mxu0 0.0
    %260 = vmatpush1.msra.mxu0 0.0
    %261 = vmatprep.subr.mxu0 0.0
    %262 = vmatpush1.msra.mxu0 0.0
    %263 = vmatprep.subr.mxu0 0.0
    %264 = vmatpush1.msra.mxu0 0.0
    %265 = vmatprep.subr.mxu0 0.0
    %266 = vmatpush1.msra.mxu0 0.0
    %267 = vmatprep.subr.mxu0 0.0
    %268 = vmatpush1.msra.mxu0 0.0
    %269 = vmatprep.subr.mxu0 0.0
    %270 = vmatpush1.msra.mxu0 0.0
    %271 = vmatprep.subr.mxu0 0.0
    %272 = vmatpush1.msra.mxu0 0.0
    %273 = vmatprep.subr.mxu0 0.0
    %274 = vmatpush1.msra.mxu0 0.0
    %275 = vmatprep.subr.mxu0 0.0
    %276 = vmatpush1.msra.mxu0 0.0
    %277 = vmatprep.subr.mxu0 0.0
    %278 = vmatpush1.msra.mxu0 0.0
    %279 = vmatprep.subr.mxu0 0.0
    %280 = vmatpush1.msra.mxu0 0.0
    %281 = vmatprep.subr.mxu0 0.0
    %282 = vmatpush1.msra.mxu0 0.0
    %283 = vmatprep.subr.mxu0 0.0
    %284 = vmatpush1.msra.mxu0 0.0
    %285 = vmatprep.subr.mxu0 0.0
    %286 = vmatpush1.msra.mxu0 0.0
    %287 = vmatprep.subr.mxu0 0.0
    %288 = vmatpush1.msra.mxu0 0.0
    %289 = vmatprep.subr.mxu0 0.0
    %290 = vmatpush1.msra.mxu0 0.0
    %291 = vmatprep.subr.mxu0 0.0
    %292 = vmatpush1.msra.mxu0 0.0
    %293 = vmatprep.subr.mxu0 0.0
    %294 = vmatpush1.msra.mxu0 0.0
    %295 = vmatprep.subr.mxu0 0.0
    %296 = vmatpush1.msra.mxu0 0.0
    %297 = vmatprep.subr.mxu0 0.0
    %298 = vmatpush1.msra.mxu0 0.0
    %299 = vmatprep.subr.mxu0 0.0
    %300 = vmatpush1.msra.mxu0 0.0
    %301 = vmatprep.subr.mxu0 0.0
    %302 = vmatpush1.msra.mxu0 0.0
    %303 = vmatprep.subr.mxu0 0.0
    %304 = vmatpush1.msra.mxu0 0.0
    %305 = vmatprep.subr.mxu0 0.0
    %306 = vmatpush1.msra.mxu0 0.0
    %307 = vmatprep.subr.mxu0 0.0
    %308 = vmatpush1.msra.mxu0 0.0
    %309 = vmatprep.subr.mxu0 0.0
    %310 = vmatpush1.msra.mxu0 0.0
    %311 = vmatprep.subr.mxu0 0.0
    %312 = vmatpush1.msra.mxu0 0.0
    %313 = vmatprep.mubr.f32.mxu0 0.0
    %314 = vmatmul.mubr.f32.gmra.mrb[0].mxu0 %v150
    %v315 = vpop.f32.mrb[0].mxu0
    %v316 = vadd.f32 %v146, %v315
    %v317 = vpop.f32.mrb[0].mxu0
    %318 = vmatprep.mubr.f32.mxu0 0.0
    %319 = vmatmul.mubr.f32.gmra.mrb[0].mxu0 %v153
    %v320 = vpop.f32.mrb[0].mxu0
    %v321 = vadd.f32 %v146, %v320
    %v322 = vpop.f32.mrb[0].mxu0
    %323 = vmatprep.mubr.f32.mxu0 0.0
    %324 = vmatmul.mubr.f32.gmra.mrb[0].mxu0 %v156
    %v325 = vpop.f32.mrb[0].mxu0
    %v326 = vadd.f32 %v146, %v325
    %v327 = vpop.f32.mrb[0].mxu0
    %328 = vmatprep.mubr.f32.mxu0 0.0
    %329 = vmatmul.mubr.f32.gmra.mrb[0].mxu0 %v159
    %v330 = vpop.f32.mrb[0].mxu0
    %v331 = vadd.f32 %v146, %v330
    %v332 = vpop.f32.mrb[0].mxu0
    %333 = vmatprep.mubr.f32.mxu0 0.0
    %334 = vmatmul.mubr.f32.gmra.mrb[0].mxu0 %v162
    %v335 = vpop.f32.mrb[0].mxu0
    %v336 = vadd.f32 %v146, %v335
    %v337 = vpop.f32.mrb[0].mxu0
    %338 = vmatprep.mubr.f32.mxu0 0.0
    %339 = vmatmul.mubr.f32.gmra.mrb[0].mxu0 %v165
    %v340 = vpop.f32.mrb[0].mxu0
    %v341 = vadd.f32 %v146, %v340
    %v342 = vpop.f32.mrb[0].mxu0
    %343 = vmatprep.mubr.f32.mxu0 0.0
    %344 = vmatmul.mubr.f32.gmra.mrb[0].mxu0 %v168
    %v345 = vpop.f32.mrb[0].mxu0
    %v346 = vadd.f32 %v146, %v345
    %v347 = vpop.f32.mrb[0].mxu0
    %348 = vmatprep.mubr.f32.mxu0 0.0
    %349 = vmatmul.mubr.f32.gmra.mrb[0].mxu0 %v171
    %v350 = vpop.f32.mrb[0].mxu0
    %v351 = vadd.f32 %v146, %v350
    %v352 = vpop.f32.mrb[0].mxu0
    %353 = vmatprep.mubr.f32.mxu0 0.0
    %354 = vmatmul.mubr.f32.gmra.mrb[0].mxu0 %v174
    %v355 = vpop.f32.mrb[0].mxu0
    %v356 = vadd.f32 %v146, %v355
    %v357 = vpop.f32.mrb[0].mxu0
    %358 = vmatprep.mubr.f32.mxu0 0.0
    %359 = vmatmul.mubr.f32.gmra.mrb[0].mxu0 %v177
    %v360 = vpop.f32.mrb[0].mxu0
    %v361 = vadd.f32 %v146, %v360
    %v362 = vpop.f32.mrb[0].mxu0
    %363 = vmatprep.mubr.f32.mxu0 0.0
    %364 = vmatmul.mubr.f32.gmra.mrb[0].mxu0 %v180
    %v365 = vpop.f32.mrb[0].mxu0
    %v366 = vadd.f32 %v146, %v365
    %v367 = vpop.f32.mrb[0].mxu0
    %368 = vmatprep.mubr.f32.mxu0 0.0
    %369 = vmatmul.mubr.f32.gmra.mrb[0].mxu0 %v183
    %v370 = vpop.f32.mrb[0].mxu0
    %v371 = vadd.f32 %v146, %v370
    %v372 = vpop.f32.mrb[0].mxu0
    %373 = vmatprep.mubr.f32.mxu0 0.0
    %374 = vmatmul.mubr.f32.gmra.mrb[0].mxu0 %v186
    %v375 = vpop.f32.mrb[0].mxu0
    %v376 = vadd.f32 %v146, %v375
    %v377 = vpop.f32.mrb[0].mxu0
    %378 = vmatprep.mubr.f32.mxu0 0.0
    %379 = vmatmul.mubr.f32.gmra.mrb[0].mxu0 %v189
    %v380 = vpop.f32.mrb[0].mxu0
    %v381 = vadd.f32 %v146, %v380
    %v382 = vpop.f32.mrb[0].mxu0
    %383 = vmatprep.mubr.f32.mxu0 0.0
    %384 = vmatmul.mubr.f32.gmra.mrb[0].mxu0 %v192
    %v385 = vpop.f32.mrb[0].mxu0
    %v386 = vadd.f32 %v146, %v385
    %v387 = vpop.f32.mrb[0].mxu0
    %388 = vmatprep.mubr.f32.mxu0 0.0
    %389 = vmatmul.mubr.f32.gmra.mrb[0].mxu0 %v195
    %v390 = vpop.f32.mrb[0].mxu0
    %v391 = vadd.f32 %v146, %v390
    %v392 = vpop.f32.mrb[0].mxu0
    %393 = vmatprep.mubr.f32.mxu0 0.0
    %394 = vmatmul.mubr.f32.gmra.mrb[0].mxu0 %v198
    %v395 = vpop.f32.mrb[0].mxu0
    %v396 = vadd.f32 %v146, %v395
    %v397 = vpop.f32.mrb[0].mxu0
    %398 = vmatprep.mubr.f32.mxu0 0.0
    %399 = vmatmul.mubr.f32.gmra.mrb[0].mxu0 %v201
    %v400 = vpop.f32.mrb[0].mxu0
    %v401 = vadd.f32 %v146, %v400
    %v402 = vpop.f32.mrb[0].mxu0
    %403 = vmatprep.mubr.f32.mxu0 0.0
    %404 = vmatmul.mubr.f32.gmra.mrb[0].mxu0 %v204
    %v405 = vpop.f32.mrb[0].mxu0
    %v406 = vadd.f32 %v146, %v405
    %v407 = vpop.f32.mrb[0].mxu0
    %408 = vmatprep.mubr.f32.mxu0 0.0
    %409 = vmatmul.mubr.f32.gmra.mrb[0].mxu0 %v207
    %v410 = vpop.f32.mrb[0].mxu0
    %v411 = vadd.f32 %v146, %v410
    %v412 = vpop.f32.mrb[0].mxu0
    %413 = vmatprep.mubr.f32.mxu0 0.0
    %414 = vmatmul.mubr.f32.gmra.mrb[0].mxu0 %v210
    %v415 = vpop.f32.mrb[0].mxu0
    %v416 = vadd.f32 %v146, %v415
    %v417 = vpop.f32.mrb[0].mxu0
    %418 = vmatprep.mubr.f32.mxu0 0.0
    %419 = vmatmul.mubr.f32.gmra.mrb[0].mxu0 %v213
    %v420 = vpop.f32.mrb[0].mxu0
    %v421 = vadd.f32 %v146, %v420
    %v422 = vpop.f32.mrb[0].mxu0
    %423 = vmatprep.mubr.f32.mxu0 0.0
    %424 = vmatmul.mubr.f32.gmra.mrb[0].mxu0 %v216
    %v425 = vpop.f32.mrb[0].mxu0
    %v426 = vadd.f32 %v146, %v425
    %v427 = vpop.f32.mrb[0].mxu0
    %428 = vmatprep.mubr.f32.mxu0 0.0
    %429 = vmatmul.mubr.f32.gmra.mrb[0].mxu0 %v219
    %v430 = vpop.f32.mrb[0].mxu0
    %v431 = vadd.f32 %v146, %v430
    %v432 = vpop.f32.mrb[0].mxu0
    %433 = vmatprep.mubr.f32.mxu0 0.0
    %434 = vmatmul.mubr.f32.gmra.mrb[0].mxu0 %v222
    %v435 = vpop.f32.mrb[0].mxu0
    %v436 = vadd.f32 %v146, %v435
    %v437 = vpop.f32.mrb[0].mxu0
    %438 = vmatprep.mubr.f32.mxu0 0.0
    %439 = vmatmul.mubr.f32.gmra.mrb[0].mxu0 %v225
    %v440 = vpop.f32.mrb[0].mxu0
    %v441 = vadd.f32 %v146, %v440
    %v442 = vpop.f32.mrb[0].mxu0
    %443 = vmatprep.mubr.f32.mxu0 0.0
    %444 = vmatmul.mubr.f32.gmra.mrb[0].mxu0 %v228
    %v445 = vpop.f32.mrb[0].mxu0
    %v446 = vadd.f32 %v146, %v445
    %v447 = vpop.f32.mrb[0].mxu0
    %448 = vmatprep.mubr.f32.mxu0 0.0
    %449 = vmatmul.mubr.f32.gmra.mrb[0].mxu0 %v231
    %v450 = vpop.f32.mrb[0].mxu0
    %v451 = vadd.f32 %v146, %v450
    %v452 = vpop.f32.mrb[0].mxu0
    %453 = vmatprep.mubr.f32.mxu0 0.0
    %454 = vmatmul.mubr.f32.gmra.mrb[0].mxu0 %v234
    %v455 = vpop.f32.mrb[0].mxu0
    %v456 = vadd.f32 %v146, %v455
    %v457 = vpop.f32.mrb[0].mxu0
    %458 = vmatprep.mubr.f32.mxu0 0.0
    %459 = vmatmul.mubr.f32.gmra.mrb[0].mxu0 %v237
    %v460 = vpop.f32.mrb[0].mxu0
    %v461 = vadd.f32 %v146, %v460
    %v462 = vpop.f32.mrb[0].mxu0
    %463 = vmatprep.mubr.f32.mxu0 0.0
    %464 = vmatmul.mubr.f32.gmra.mrb[0].mxu0 %v240
    %v465 = vpop.f32.mrb[0].mxu0
    %v466 = vadd.f32 %v146, %v465
    %v467 = vpop.f32.mrb[0].mxu0
    %468 = vmatprep.mubr.f32.mxu0 0.0
    %469 = vmatmul.mubr.f32.gmra.mrb[0].mxu0 %v243
    %v470 = vpop.f32.mrb[0].mxu0
    %v471 = vadd.f32 %v146, %v470
    %v472 = vpop.f32.mrb[0].mxu0
    %473 = vdwg.mxu0
    %v474 = vmax.f32 %v316, 0.0
    %v475 = vmax.f32 %v321, 0.0
    %v476 = vmax.f32 %v326, 0.0
    %v477 = vmax.f32 %v331, 0.0
    %v478 = vmax.f32 %v336, 0.0
    %v479 = vmax.f32 %v341, 0.0
    %v480 = vmax.f32 %v346, 0.0
    %v481 = vmax.f32 %v351, 0.0
    %v482 = vmax.f32 %v356, 0.0
    %v483 = vmax.f32 %v361, 0.0
    %v484 = vmax.f32 %v366, 0.0
    %v485 = vmax.f32 %v371, 0.0
    %v486 = vmax.f32 %v376, 0.0
    %v487 = vmax.f32 %v381, 0.0
    %v488 = vmax.f32 %v386, 0.0
    %v489 = vmax.f32 %v391, 0.0
    %v490 = vmax.f32 %v396, 0.0
    %v491 = vmax.f32 %v401, 0.0
    %v492 = vmax.f32 %v406, 0.0
    %v493 = vmax.f32 %v411, 0.0
    %v494 = vmax.f32 %v416, 0.0
    %v495 = vmax.f32 %v421, 0.0
    %v496 = vmax.f32 %v426, 0.0
    %v497 = vmax.f32 %v431, 0.0
    %v498 = vmax.f32 %v436, 0.0
    %v499 = vmax.f32 %v441, 0.0
    %v500 = vmax.f32 %v446, 0.0
    %v501 = vmax.f32 %v451, 0.0
    %v502 = vmax.f32 %v456, 0.0
    %v503 = vmax.f32 %v461, 0.0
    %v504 = vmax.f32 %v466, 0.0
    %v505 = vmax.f32 %v471, 0.0
    %v506 = vpack.c.bf16 %v475, %v474
    %v507 = vpack.c.bf16 %v477, %v476
    %v508 = vpack.c.bf16 %v479, %v478
    %v509 = vpack.c.bf16 %v481, %v480
    %v510 = vpack.c.bf16 %v483, %v482
    %v511 = vpack.c.bf16 %v485, %v484
    %v512 = vpack.c.bf16 %v487, %v486
    %v513 = vpack.c.bf16 %v489, %v488
    %v514 = vpack.c.bf16 %v491, %v490
    %v515 = vpack.c.bf16 %v493, %v492
    %v516 = vpack.c.bf16 %v495, %v494
    %v517 = vpack.c.bf16 %v497, %v496
    %v518 = vpack.c.bf16 %v499, %v498
    %v519 = vpack.c.bf16 %v501, %v500
    %v520 = vpack.c.bf16 %v503, %v502
    %v521 = vpack.c.bf16 %v505, %v504
    %v522 = vld [vmem:[#allocation5] sm:$0xf]
    %v523 = vld [vmem:[#allocation5 + $0x4] sm:$0xf]
    %v524 = vld [vmem:[#allocation5 + $0x8] sm:$0xf]
    %v525 = vld [vmem:[#allocation5 + $0xc] sm:$0xf]
    %v526 = vld [vmem:[#allocation5 + $0x10] sm:$0xf]
    %v527 = vld [vmem:[#allocation5 + $0x14] sm:$0xf]
    %v528 = vld [vmem:[#allocation5 + $0x18] sm:$0xf]
    %v529 = vld [vmem:[#allocation5 + $0x1c] sm:$0xf]
    %v530 = vld [vmem:[#allocation5 + $0x20] sm:$0xf]
    %v531 = vld [vmem:[#allocation5 + $0x24] sm:$0xf]
    %v532 = vld [vmem:[#allocation5 + $0x28] sm:$0xf]
    %v533 = vld [vmem:[#allocation5 + $0x2c] sm:$0xf]
    %v534 = vld [vmem:[#allocation5 + $0x30] sm:$0xf]
    %v535 = vld [vmem:[#allocation5 + $0x34] sm:$0xf]
    %v536 = vld [vmem:[#allocation5 + $0x38] sm:$0xf]
    %v537 = vld [vmem:[#allocation5 + $0x3c] sm:$0xf]
    %v539 = vlaneseq
    %v540 = vshrl.u32 %v539, 7
    %v541 = vsub.s32 0, %v540
    %v542 = vrot.slane %v104, %v541
    %v560 = vunpack.c.l.b16 %v522
    %v561 = vunpack.c.l.b16 %v523
    %v562 = vunpack.c.l.b16 %v524
    %v563 = vunpack.c.l.b16 %v525
    %v564 = vunpack.c.l.b16 %v526
    %v565 = vunpack.c.l.b16 %v527
    %v566 = vunpack.c.l.b16 %v528
    %v567 = vunpack.c.l.b16 %v529
    %v568 = vunpack.c.l.b16 %v530
    %v569 = vunpack.c.l.b16 %v531
    %v570 = vunpack.c.l.b16 %v532
    %v571 = vunpack.c.l.b16 %v533
    %v572 = vunpack.c.l.b16 %v534
    %v573 = vunpack.c.l.b16 %v535
    %v574 = vunpack.c.l.b16 %v536
    %v575 = vunpack.c.l.b16 %v537
    %v576 = vpack.c.b16 %v561, %v560
    %v577 = vpack.c.b16 %v563, %v562
    %v578 = vpack.c.b16 %v565, %v564
    %v579 = vpack.c.b16 %v567, %v566
    %v580 = vpack.c.b16 %v569, %v568
    %v581 = vpack.c.b16 %v571, %v570
    %v582 = vpack.c.b16 %v573, %v572
    %v583 = vpack.c.b16 %v575, %v574
    %592 = vmatprep.subr.bf16.mxu0 0
    %593 = vmatpush1.bf16.msra.mxu0 %v576
    %594 = vmatprep.subr.bf16.mxu0 0
    %595 = vmatpush1.bf16.msra.mxu0 %v577
    %596 = vmatprep.subr.bf16.mxu0 0
    %597 = vmatpush1.bf16.msra.mxu0 %v578
    %598 = vmatprep.subr.bf16.mxu0 0
    %599 = vmatpush1.bf16.msra.mxu0 %v579
    %600 = vmatprep.subr.bf16.mxu0 0
    %601 = vmatpush1.bf16.msra.mxu0 %v580
    %602 = vmatprep.subr.bf16.mxu0 0
    %603 = vmatpush1.bf16.msra.mxu0 %v581
    %604 = vmatprep.subr.bf16.mxu0 0
    %605 = vmatpush1.bf16.msra.mxu0 %v582
    %606 = vmatprep.subr.bf16.mxu0 0
    %607 = vmatpush1.bf16.msra.mxu0 %v583
    %608 = vmatprep.subr.bf16.mxu0 0
    %609 = vmatpush1.bf16.msra.mxu0 0
    %610 = vmatprep.subr.bf16.mxu0 0
    %611 = vmatpush1.bf16.msra.mxu0 0
    %612 = vmatprep.subr.bf16.mxu0 0
    %613 = vmatpush1.bf16.msra.mxu0 0
    %614 = vmatprep.subr.bf16.mxu0 0
    %615 = vmatpush1.bf16.msra.mxu0 0
    %616 = vmatprep.subr.bf16.mxu0 0
    %617 = vmatpush1.bf16.msra.mxu0 0
    %618 = vmatprep.subr.bf16.mxu0 0
    %619 = vmatpush1.bf16.msra.mxu0 0
    %620 = vmatprep.subr.bf16.mxu0 0
    %621 = vmatpush1.bf16.msra.mxu0 0
    %622 = vmatprep.subr.bf16.mxu0 0
    %623 = vmatpush1.bf16.msra.mxu0 0
    %624 = vmatprep.mubr.bf16.mxu0 0
    %625 = vmatmul.mubr.bf16.gmra.mrb[0].mxu0 %v506
    %v626 = vpop.f32.mrb[0].mxu0
    %v627 = vadd.f32 %v542, %v626
    %v628 = vpop.f32.mrb[0].mxu0
    %v629 = vpop.f32.mrb[0].mxu0
    %v630 = vadd.f32 %v542, %v629
    %v631 = vpop.f32.mrb[0].mxu0
    %632 = vmatprep.mubr.bf16.mxu0 0
    %633 = vmatmul.mubr.bf16.gmra.mrb[0].mxu0 %v507
    %v634 = vpop.f32.mrb[0].mxu0
    %v635 = vadd.f32 %v542, %v634
    %v636 = vpop.f32.mrb[0].mxu0
    %v637 = vpop.f32.mrb[0].mxu0
    %v638 = vadd.f32 %v542, %v637
    %v639 = vpop.f32.mrb[0].mxu0
    %640 = vmatprep.mubr.bf16.mxu0 0
    %641 = vmatmul.mubr.bf16.gmra.mrb[0].mxu0 %v508
    %v642 = vpop.f32.mrb[0].mxu0
    %v643 = vadd.f32 %v542, %v642
    %v644 = vpop.f32.mrb[0].mxu0
    %v645 = vpop.f32.mrb[0].mxu0
    %v646 = vadd.f32 %v542, %v645
    %v647 = vpop.f32.mrb[0].mxu0
    %648 = vmatprep.mubr.bf16.mxu0 0
    %649 = vmatmul.mubr.bf16.gmra.mrb[0].mxu0 %v509
    %v650 = vpop.f32.mrb[0].mxu0
    %v651 = vadd.f32 %v542, %v650
    %v652 = vpop.f32.mrb[0].mxu0
    %v653 = vpop.f32.mrb[0].mxu0
    %v654 = vadd.f32 %v542, %v653
    %v655 = vpop.f32.mrb[0].mxu0
    %656 = vmatprep.mubr.bf16.mxu0 0
    %657 = vmatmul.mubr.bf16.gmra.mrb[0].mxu0 %v510
    %v658 = vpop.f32.mrb[0].mxu0
    %v659 = vadd.f32 %v542, %v658
    %v660 = vpop.f32.mrb[0].mxu0
    %v661 = vpop.f32.mrb[0].mxu0
    %v662 = vadd.f32 %v542, %v661
    %v663 = vpop.f32.mrb[0].mxu0
    %664 = vmatprep.mubr.bf16.mxu0 0
    %665 = vmatmul.mubr.bf16.gmra.mrb[0].mxu0 %v511
    %v666 = vpop.f32.mrb[0].mxu0
    %v667 = vadd.f32 %v542, %v666
    %v668 = vpop.f32.mrb[0].mxu0
    %v669 = vpop.f32.mrb[0].mxu0
    %v670 = vadd.f32 %v542, %v669
    %v671 = vpop.f32.mrb[0].mxu0
    %672 = vmatprep.mubr.bf16.mxu0 0
    %673 = vmatmul.mubr.bf16.gmra.mrb[0].mxu0 %v512
    %v674 = vpop.f32.mrb[0].mxu0
    %v675 = vadd.f32 %v542, %v674
    %v676 = vpop.f32.mrb[0].mxu0
    %v677 = vpop.f32.mrb[0].mxu0
    %v678 = vadd.f32 %v542, %v677
    %v679 = vpop.f32.mrb[0].mxu0
    %680 = vmatprep.mubr.bf16.mxu0 0
    %681 = vmatmul.mubr.bf16.gmra.mrb[0].mxu0 %v513
    %v682 = vpop.f32.mrb[0].mxu0
    %v683 = vadd.f32 %v542, %v682
    %v684 = vpop.f32.mrb[0].mxu0
    %v685 = vpop.f32.mrb[0].mxu0
    %v686 = vadd.f32 %v542, %v685
    %v687 = vpop.f32.mrb[0].mxu0
    %688 = vmatprep.mubr.bf16.mxu0 0
    %689 = vmatmul.mubr.bf16.gmra.mrb[0].mxu0 %v514
    %v690 = vpop.f32.mrb[0].mxu0
    %v691 = vadd.f32 %v542, %v690
    %v692 = vpop.f32.mrb[0].mxu0
    %v693 = vpop.f32.mrb[0].mxu0
    %v694 = vadd.f32 %v542, %v693
    %v695 = vpop.f32.mrb[0].mxu0
    %696 = vmatprep.mubr.bf16.mxu0 0
    %697 = vmatmul.mubr.bf16.gmra.mrb[0].mxu0 %v515
    %v698 = vpop.f32.mrb[0].mxu0
    %v699 = vadd.f32 %v542, %v698
    %v700 = vpop.f32.mrb[0].mxu0
    %v701 = vpop.f32.mrb[0].mxu0
    %v702 = vadd.f32 %v542, %v701
    %v703 = vpop.f32.mrb[0].mxu0
    %704 = vmatprep.mubr.bf16.mxu0 0
    %705 = vmatmul.mubr.bf16.gmra.mrb[0].mxu0 %v516
    %v706 = vpop.f32.mrb[0].mxu0
    %v707 = vadd.f32 %v542, %v706
    %v708 = vpop.f32.mrb[0].mxu0
    %v709 = vpop.f32.mrb[0].mxu0
    %v710 = vadd.f32 %v542, %v709
    %v711 = vpop.f32.mrb[0].mxu0
    %712 = vmatprep.mubr.bf16.mxu0 0
    %713 = vmatmul.mubr.bf16.gmra.mrb[0].mxu0 %v517
    %v714 = vpop.f32.mrb[0].mxu0
    %v715 = vadd.f32 %v542, %v714
    %v716 = vpop.f32.mrb[0].mxu0
    %v717 = vpop.f32.mrb[0].mxu0
    %v718 = vadd.f32 %v542, %v717
    %v719 = vpop.f32.mrb[0].mxu0
    %720 = vmatprep.mubr.bf16.mxu0 0
    %721 = vmatmul.mubr.bf16.gmra.mrb[0].mxu0 %v518
    %v722 = vpop.f32.mrb[0].mxu0
    %v723 = vadd.f32 %v542, %v722
    %v724 = vpop.f32.mrb[0].mxu0
    %v725 = vpop.f32.mrb[0].mxu0
    %v726 = vadd.f32 %v542, %v725
    %v727 = vpop.f32.mrb[0].mxu0
    %728 = vmatprep.mubr.bf16.mxu0 0
    %729 = vmatmul.mubr.bf16.gmra.mrb[0].mxu0 %v519
    %v730 = vpop.f32.mrb[0].mxu0
    %v731 = vadd.f32 %v542, %v730
    %v732 = vpop.f32.mrb[0].mxu0
    %v733 = vpop.f32.mrb[0].mxu0
    %v734 = vadd.f32 %v542, %v733
    %v735 = vpop.f32.mrb[0].mxu0
    %736 = vmatprep.mubr.bf16.mxu0 0
    %737 = vmatmul.mubr.bf16.gmra.mrb[0].mxu0 %v520
    %v738 = vpop.f32.mrb[0].mxu0
    %v739 = vadd.f32 %v542, %v738
    %v740 = vpop.f32.mrb[0].mxu0
    %v741 = vpop.f32.mrb[0].mxu0
    %v742 = vadd.f32 %v542, %v741
    %v743 = vpop.f32.mrb[0].mxu0
    %744 = vmatprep.mubr.bf16.mxu0 0
    %745 = vmatmul.mubr.bf16.gmra.mrb[0].mxu0 %v521
    %v746 = vpop.f32.mrb[0].mxu0
    %v747 = vadd.f32 %v542, %v746
    %v748 = vpop.f32.mrb[0].mxu0
    %v749 = vpop.f32.mrb[0].mxu0
    %v750 = vadd.f32 %v542, %v749
    %v751 = vpop.f32.mrb[0].mxu0
    %752 = vdwg.mxu0
    %v753 = vmax.f32 %v627, 0.0
    %v754 = vmax.f32 %v630, 0.0
    %v755 = vmax.f32 %v635, 0.0
    %v756 = vmax.f32 %v638, 0.0
    %v757 = vmax.f32 %v643, 0.0
    %v758 = vmax.f32 %v646, 0.0
    %v759 = vmax.f32 %v651, 0.0
    %v760 = vmax.f32 %v654, 0.0
    %v761 = vmax.f32 %v659, 0.0
    %v762 = vmax.f32 %v662, 0.0
    %v763 = vmax.f32 %v667, 0.0
    %v764 = vmax.f32 %v670, 0.0
    %v765 = vmax.f32 %v675, 0.0
    %v766 = vmax.f32 %v678, 0.0
    %v767 = vmax.f32 %v683, 0.0
    %v768 = vmax.f32 %v686, 0.0
    %v769 = vmax.f32 %v691, 0.0
    %v770 = vmax.f32 %v694, 0.0
    %v771 = vmax.f32 %v699, 0.0
    %v772 = vmax.f32 %v702, 0.0
    %v773 = vmax.f32 %v707, 0.0
    %v774 = vmax.f32 %v710, 0.0
    %v775 = vmax.f32 %v715, 0.0
    %v776 = vmax.f32 %v718, 0.0
    %v777 = vmax.f32 %v723, 0.0
    %v778 = vmax.f32 %v726, 0.0
    %v779 = vmax.f32 %v731, 0.0
    %v780 = vmax.f32 %v734, 0.0
    %v781 = vmax.f32 %v739, 0.0
    %v782 = vmax.f32 %v742, 0.0
    %v783 = vmax.f32 %v747, 0.0
    %v784 = vmax.f32 %v750, 0.0
    %v785 = vpack.c.bf16 %v754, %v753
    %v786 = vpack.c.bf16 %v756, %v755
    %v787 = vpack.c.bf16 %v758, %v757
    %v788 = vpack.c.bf16 %v760, %v759
    %v789 = vpack.c.bf16 %v762, %v761
    %v790 = vpack.c.bf16 %v764, %v763
    %v791 = vpack.c.bf16 %v766, %v765
    %v792 = vpack.c.bf16 %v768, %v767
    %v793 = vpack.c.bf16 %v770, %v769
    %v794 = vpack.c.bf16 %v772, %v771
    %v795 = vpack.c.bf16 %v774, %v773
    %v796 = vpack.c.bf16 %v776, %v775
    %v797 = vpack.c.bf16 %v778, %v777
    %v798 = vpack.c.bf16 %v780, %v779
    %v799 = vpack.c.bf16 %v782, %v781
    %v800 = vpack.c.bf16 %v784, %v783
    %v801 = vld [vmem:[%s3] sm:$0xff]
    %v802 = vld [vmem:[%s3 + $0x8] sm:$0xff]
    %v803 = vld [vmem:[%s3 + $0x10] sm:$0xff]
    %v804 = vld [vmem:[%s3 + $0x18] sm:$0xff]
    %v805 = vld [vmem:[%s3 + $0x20] sm:$0xff]
    %v806 = vld [vmem:[%s3 + $0x28] sm:$0xff]
    %v807 = vld [vmem:[%s3 + $0x30] sm:$0xff]
    %v808 = vld [vmem:[%s3 + $0x38] sm:$0xff]
    %v809 = vld [vmem:[%s3 + $0x40] sm:$0xff]
    %v810 = vld [vmem:[%s3 + $0x48] sm:$0xff]
    %v811 = vld [vmem:[%s3 + $0x50] sm:$0xff]
    %v812 = vld [vmem:[%s3 + $0x58] sm:$0xff]
    %v813 = vld [vmem:[%s3 + $0x60] sm:$0xff]
    %v814 = vld [vmem:[%s3 + $0x68] sm:$0xff]
    %v815 = vld [vmem:[%s3 + $0x70] sm:$0xff]
    %v816 = vld [vmem:[%s3 + $0x78] sm:$0xff]
    %v818 = vlaneseq
    %v819 = vshrl.u32 %v818, 7
    %v820 = vsub.s32 0, %v819
    %v821 = vrot.slane %v105, %v820
    %v822 = vlaneseq
    %v823 = vshrl.u32 %v822, 7
    %v824 = vsub.s32 1, %v823
    %v825 = vrot.slane %v105, %v824
    %v844 = vunpack.c.l.b16 %v801
    %v845 = vunpack.c.h.b16 %v801
    %v846 = vunpack.c.l.b16 %v802
    %v847 = vunpack.c.h.b16 %v802
    %v848 = vunpack.c.l.b16 %v803
    %v849 = vunpack.c.h.b16 %v803
    %v850 = vunpack.c.l.b16 %v804
    %v851 = vunpack.c.h.b16 %v804
    %v852 = vunpack.c.l.b16 %v805
    %v853 = vunpack.c.h.b16 %v805
    %v854 = vunpack.c.l.b16 %v806
    %v855 = vunpack.c.h.b16 %v806
    %v856 = vunpack.c.l.b16 %v807
    %v857 = vunpack.c.h.b16 %v807
    %v858 = vunpack.c.l.b16 %v808
    %v859 = vunpack.c.h.b16 %v808
    %v860 = vunpack.c.l.b16 %v809
    %v861 = vunpack.c.h.b16 %v809
    %v862 = vunpack.c.l.b16 %v810
    %v863 = vunpack.c.h.b16 %v810
    %v864 = vunpack.c.l.b16 %v811
    %v865 = vunpack.c.h.b16 %v811
    %v866 = vunpack.c.l.b16 %v812
    %v867 = vunpack.c.h.b16 %v812
    %v868 = vunpack.c.l.b16 %v813
    %v869 = vunpack.c.h.b16 %v813
    %v870 = vunpack.c.l.b16 %v814
    %v871 = vunpack.c.h.b16 %v814
    %v872 = vunpack.c.l.b16 %v815
    %v873 = vunpack.c.h.b16 %v815
    %v874 = vunpack.c.l.b16 %v816
    %v875 = vunpack.c.h.b16 %v816
    %v876 = vpack.c.b16 %v846, %v844
    %v877 = vpack.c.b16 %v847, %v845
    %v878 = vpack.c.b16 %v850, %v848
    %v879 = vpack.c.b16 %v851, %v849
    %v880 = vpack.c.b16 %v854, %v852
    %v881 = vpack.c.b16 %v855, %v853
    %v882 = vpack.c.b16 %v858, %v856
    %v883 = vpack.c.b16 %v859, %v857
    %v884 = vpack.c.b16 %v862, %v860
    %v885 = vpack.c.b16 %v863, %v861
    %v886 = vpack.c.b16 %v866, %v864
    %v887 = vpack.c.b16 %v867, %v865
    %v888 = vpack.c.b16 %v870, %v868
    %v889 = vpack.c.b16 %v871, %v869
    %v890 = vpack.c.b16 %v874, %v872
    %v891 = vpack.c.b16 %v875, %v873
    %908 = vmatprep.subr.bf16.mxu0 %v877
    %909 = vmatpush1.bf16.msra.mxu0 %v876
    %910 = vmatprep.subr.bf16.mxu0 %v879
    %911 = vmatpush1.bf16.msra.mxu0 %v878
    %912 = vmatprep.subr.bf16.mxu0 %v881
    %913 = vmatpush1.bf16.msra.mxu0 %v880
    %914 = vmatprep.subr.bf16.mxu0 %v883
    %915 = vmatpush1.bf16.msra.mxu0 %v882
    %916 = vmatprep.subr.bf16.mxu0 %v885
    %917 = vmatpush1.bf16.msra.mxu0 %v884
    %918 = vmatprep.subr.bf16.mxu0 %v887
    %919 = vmatpush1.bf16.msra.mxu0 %v886
    %920 = vmatprep.subr.bf16.mxu0 %v889
    %921 = vmatpush1.bf16.msra.mxu0 %v888
    %922 = vmatprep.subr.bf16.mxu0 %v891
    %923 = vmatpush1.bf16.msra.mxu0 %v890
    %924 = vmatprep.subr.bf16.mxu0 0
    %925 = vmatpush1.bf16.msra.mxu0 0
    %926 = vmatprep.subr.bf16.mxu0 0
    %927 = vmatpush1.bf16.msra.mxu0 0
    %928 = vmatprep.subr.bf16.mxu0 0
    %929 = vmatpush1.bf16.msra.mxu0 0
    %930 = vmatprep.subr.bf16.mxu0 0
    %931 = vmatpush1.bf16.msra.mxu0 0
    %932 = vmatprep.subr.bf16.mxu0 0
    %933 = vmatpush1.bf16.msra.mxu0 0
    %934 = vmatprep.subr.bf16.mxu0 0
    %935 = vmatpush1.bf16.msra.mxu0 0
    %936 = vmatprep.subr.bf16.mxu0 0
    %937 = vmatpush1.bf16.msra.mxu0 0
    %938 = vmatprep.subr.bf16.mxu0 0
    %939 = vmatpush1.bf16.msra.mxu0 0
    %940 = vmatprep.mubr.bf16.mxu0 0
    %941 = vmatmul.mubr.bf16.gmra.mrb[0].mxu0 %v785
    %v942 = vpop.f32.mrb[0].mxu0
    %v943 = vadd.f32 %v821, %v942
    %v944 = vpop.f32.mrb[0].mxu0
    %v945 = vadd.f32 %v825, %v944
    %v946 = vpop.f32.mrb[0].mxu0
    %v947 = vadd.f32 %v821, %v946
    %v948 = vpop.f32.mrb[0].mxu0
    %v949 = vadd.f32 %v825, %v948
    %950 = vmatprep.mubr.bf16.mxu0 0
    %951 = vmatmul.mubr.bf16.gmra.mrb[0].mxu0 %v786
    %v952 = vpop.f32.mrb[0].mxu0
    %v953 = vadd.f32 %v821, %v952
    %v954 = vpop.f32.mrb[0].mxu0
    %v955 = vadd.f32 %v825, %v954
    %v956 = vpop.f32.mrb[0].mxu0
    %v957 = vadd.f32 %v821, %v956
    %v958 = vpop.f32.mrb[0].mxu0
    %v959 = vadd.f32 %v825, %v958
    %960 = vmatprep.mubr.bf16.mxu0 0
    %961 = vmatmul.mubr.bf16.gmra.mrb[0].mxu0 %v787
    %v962 = vpop.f32.mrb[0].mxu0
    %v963 = vadd.f32 %v821, %v962
    %v964 = vpop.f32.mrb[0].mxu0
    %v965 = vadd.f32 %v825, %v964
    %v966 = vpop.f32.mrb[0].mxu0
    %v967 = vadd.f32 %v821, %v966
    %v968 = vpop.f32.mrb[0].mxu0
    %v969 = vadd.f32 %v825, %v968
    %970 = vmatprep.mubr.bf16.mxu0 0
    %971 = vmatmul.mubr.bf16.gmra.mrb[0].mxu0 %v788
    %v972 = vpop.f32.mrb[0].mxu0
    %v973 = vadd.f32 %v821, %v972
    %v974 = vpop.f32.mrb[0].mxu0
    %v975 = vadd.f32 %v825, %v974
    %v976 = vpop.f32.mrb[0].mxu0
    %v977 = vadd.f32 %v821, %v976
    %v978 = vpop.f32.mrb[0].mxu0
    %v979 = vadd.f32 %v825, %v978
    %980 = vmatprep.mubr.bf16.mxu0 0
    %981 = vmatmul.mubr.bf16.gmra.mrb[0].mxu0 %v789
    %v982 = vpop.f32.mrb[0].mxu0
    %v983 = vadd.f32 %v821, %v982
    %v984 = vpop.f32.mrb[0].mxu0
    %v985 = vadd.f32 %v825, %v984
    %v986 = vpop.f32.mrb[0].mxu0
    %v987 = vadd.f32 %v821, %v986
    %v988 = vpop.f32.mrb[0].mxu0
    %v989 = vadd.f32 %v825, %v988
    %990 = vmatprep.mubr.bf16.mxu0 0
    %991 = vmatmul.mubr.bf16.gmra.mrb[0].mxu0 %v790
    %v992 = vpop.f32.mrb[0].mxu0
    %v993 = vadd.f32 %v821, %v992
    %v994 = vpop.f32.mrb[0].mxu0
    %v995 = vadd.f32 %v825, %v994
    %v996 = vpop.f32.mrb[0].mxu0
    %v997 = vadd.f32 %v821, %v996
    %v998 = vpop.f32.mrb[0].mxu0
    %v999 = vadd.f32 %v825, %v998
    %1000 = vmatprep.mubr.bf16.mxu0 0
    %1001 = vmatmul.mubr.bf16.gmra.mrb[0].mxu0 %v791
    %v1002 = vpop.f32.mrb[0].mxu0
    %v1003 = vadd.f32 %v821, %v1002
    %v1004 = vpop.f32.mrb[0].mxu0
    %v1005 = vadd.f32 %v825, %v1004
    %v1006 = vpop.f32.mrb[0].mxu0
    %v1007 = vadd.f32 %v821, %v1006
    %v1008 = vpop.f32.mrb[0].mxu0
    %v1009 = vadd.f32 %v825, %v1008
    %1010 = vmatprep.mubr.bf16.mxu0 0
    %1011 = vmatmul.mubr.bf16.gmra.mrb[0].mxu0 %v792
    %v1012 = vpop.f32.mrb[0].mxu0
    %v1013 = vadd.f32 %v821, %v1012
    %v1014 = vpop.f32.mrb[0].mxu0
    %v1015 = vadd.f32 %v825, %v1014
    %v1016 = vpop.f32.mrb[0].mxu0
    %v1017 = vadd.f32 %v821, %v1016
    %v1018 = vpop.f32.mrb[0].mxu0
    %v1019 = vadd.f32 %v825, %v1018
    %1020 = vmatprep.mubr.bf16.mxu0 0
    %1021 = vmatmul.mubr.bf16.gmra.mrb[0].mxu0 %v793
    %v1022 = vpop.f32.mrb[0].mxu0
    %v1023 = vadd.f32 %v821, %v1022
    %v1024 = vpop.f32.mrb[0].mxu0
    %v1025 = vadd.f32 %v825, %v1024
    %v1026 = vpop.f32.mrb[0].mxu0
    %v1027 = vadd.f32 %v821, %v1026
    %v1028 = vpop.f32.mrb[0].mxu0
    %v1029 = vadd.f32 %v825, %v1028
    %1030 = vmatprep.mubr.bf16.mxu0 0
    %1031 = vmatmul.mubr.bf16.gmra.mrb[0].mxu0 %v794
    %v1032 = vpop.f32.mrb[0].mxu0
    %v1033 = vadd.f32 %v821, %v1032
    %v1034 = vpop.f32.mrb[0].mxu0
    %v1035 = vadd.f32 %v825, %v1034
    %v1036 = vpop.f32.mrb[0].mxu0
    %v1037 = vadd.f32 %v821, %v1036
    %v1038 = vpop.f32.mrb[0].mxu0
    %v1039 = vadd.f32 %v825, %v1038
    %1040 = vmatprep.mubr.bf16.mxu0 0
    %1041 = vmatmul.mubr.bf16.gmra.mrb[0].mxu0 %v795
    %v1042 = vpop.f32.mrb[0].mxu0
    %v1043 = vadd.f32 %v821, %v1042
    %v1044 = vpop.f32.mrb[0].mxu0
    %v1045 = vadd.f32 %v825, %v1044
    %v1046 = vpop.f32.mrb[0].mxu0
    %v1047 = vadd.f32 %v821, %v1046
    %v1048 = vpop.f32.mrb[0].mxu0
    %v1049 = vadd.f32 %v825, %v1048
    %1050 = vmatprep.mubr.bf16.mxu0 0
    %1051 = vmatmul.mubr.bf16.gmra.mrb[0].mxu0 %v796
    %v1052 = vpop.f32.mrb[0].mxu0
    %v1053 = vadd.f32 %v821, %v1052
    %v1054 = vpop.f32.mrb[0].mxu0
    %v1055 = vadd.f32 %v825, %v1054
    %v1056 = vpop.f32.mrb[0].mxu0
    %v1057 = vadd.f32 %v821, %v1056
    %v1058 = vpop.f32.mrb[0].mxu0
    %v1059 = vadd.f32 %v825, %v1058
    %1060 = vmatprep.mubr.bf16.mxu0 0
    %1061 = vmatmul.mubr.bf16.gmra.mrb[0].mxu0 %v797
    %v1062 = vpop.f32.mrb[0].mxu0
    %v1063 = vadd.f32 %v821, %v1062
    %v1064 = vpop.f32.mrb[0].mxu0
    %v1065 = vadd.f32 %v825, %v1064
    %v1066 = vpop.f32.mrb[0].mxu0
    %v1067 = vadd.f32 %v821, %v1066
    %v1068 = vpop.f32.mrb[0].mxu0
    %v1069 = vadd.f32 %v825, %v1068
    %1070 = vmatprep.mubr.bf16.mxu0 0
    %1071 = vmatmul.mubr.bf16.gmra.mrb[0].mxu0 %v798
    %v1072 = vpop.f32.mrb[0].mxu0
    %v1073 = vadd.f32 %v821, %v1072
    %v1074 = vpop.f32.mrb[0].mxu0
    %v1075 = vadd.f32 %v825, %v1074
    %v1076 = vpop.f32.mrb[0].mxu0
    %v1077 = vadd.f32 %v821, %v1076
    %v1078 = vpop.f32.mrb[0].mxu0
    %v1079 = vadd.f32 %v825, %v1078
    %1080 = vmatprep.mubr.bf16.mxu0 0
    %1081 = vmatmul.mubr.bf16.gmra.mrb[0].mxu0 %v799
    %v1082 = vpop.f32.mrb[0].mxu0
    %v1083 = vadd.f32 %v821, %v1082
    %v1084 = vpop.f32.mrb[0].mxu0
    %v1085 = vadd.f32 %v825, %v1084
    %v1086 = vpop.f32.mrb[0].mxu0
    %v1087 = vadd.f32 %v821, %v1086
    %v1088 = vpop.f32.mrb[0].mxu0
    %v1089 = vadd.f32 %v825, %v1088
    %1090 = vmatprep.mubr.bf16.mxu0 0
    %1091 = vmatmul.mubr.bf16.gmra.mrb[0].mxu0 %v800
    %v1092 = vpop.f32.mrb[0].mxu0
    %v1093 = vadd.f32 %v821, %v1092
    %v1094 = vpop.f32.mrb[0].mxu0
    %v1095 = vadd.f32 %v825, %v1094
    %v1096 = vpop.f32.mrb[0].mxu0
    %v1097 = vadd.f32 %v821, %v1096
    %v1098 = vpop.f32.mrb[0].mxu0
    %v1099 = vadd.f32 %v825, %v1098
    %1100 = vdwg.mxu0
    %v1101 = vmax.f32 %v943, 0.0
    %v1102 = vmax.f32 %v945, 0.0
    %v1103 = vmax.f32 %v947, 0.0
    %v1104 = vmax.f32 %v949, 0.0
    %v1105 = vmax.f32 %v953, 0.0
    %v1106 = vmax.f32 %v955, 0.0
    %v1107 = vmax.f32 %v957, 0.0
    %v1108 = vmax.f32 %v959, 0.0
    %v1109 = vmax.f32 %v963, 0.0
    %v1110 = vmax.f32 %v965, 0.0
    %v1111 = vmax.f32 %v967, 0.0
    %v1112 = vmax.f32 %v969, 0.0
    %v1113 = vmax.f32 %v973, 0.0
    %v1114 = vmax.f32 %v975, 0.0
    %v1115 = vmax.f32 %v977, 0.0
    %v1116 = vmax.f32 %v979, 0.0
    %v1117 = vmax.f32 %v983, 0.0
    %v1118 = vmax.f32 %v985, 0.0
    %v1119 = vmax.f32 %v987, 0.0
    %v1120 = vmax.f32 %v989, 0.0
    %v1121 = vmax.f32 %v993, 0.0
    %v1122 = vmax.f32 %v995, 0.0
    %v1123 = vmax.f32 %v997, 0.0
    %v1124 = vmax.f32 %v999, 0.0
    %v1125 = vmax.f32 %v1003, 0.0
    %v1126 = vmax.f32 %v1005, 0.0
    %v1127 = vmax.f32 %v1007, 0.0
    %v1128 = vmax.f32 %v1009, 0.0
    %v1129 = vmax.f32 %v1013, 0.0
    %v1130 = vmax.f32 %v1015, 0.0
    %v1131 = vmax.f32 %v1017, 0.0
    %v1132 = vmax.f32 %v1019, 0.0
    %v1133 = vmax.f32 %v1023, 0.0
    %v1134 = vmax.f32 %v1025, 0.0
    %v1135 = vmax.f32 %v1027, 0.0
    %v1136 = vmax.f32 %v1029, 0.0
    %v1137 = vmax.f32 %v1033, 0.0
    %v1138 = vmax.f32 %v1035, 0.0
    %v1139 = vmax.f32 %v1037, 0.0
    %v1140 = vmax.f32 %v1039, 0.0
    %v1141 = vmax.f32 %v1043, 0.0
    %v1142 = vmax.f32 %v1045, 0.0
    %v1143 = vmax.f32 %v1047, 0.0
    %v1144 = vmax.f32 %v1049, 0.0
    %v1145 = vmax.f32 %v1053, 0.0
    %v1146 = vmax.f32 %v1055, 0.0
    %v1147 = vmax.f32 %v1057, 0.0
    %v1148 = vmax.f32 %v1059, 0.0
    %v1149 = vmax.f32 %v1063, 0.0
    %v1150 = vmax.f32 %v1065, 0.0
    %v1151 = vmax.f32 %v1067, 0.0
    %v1152 = vmax.f32 %v1069, 0.0
    %v1153 = vmax.f32 %v1073, 0.0
    %v1154 = vmax.f32 %v1075, 0.0
    %v1155 = vmax.f32 %v1077, 0.0
    %v1156 = vmax.f32 %v1079, 0.0
    %v1157 = vmax.f32 %v1083, 0.0
    %v1158 = vmax.f32 %v1085, 0.0
    %v1159 = vmax.f32 %v1087, 0.0
    %v1160 = vmax.f32 %v1089, 0.0
    %v1161 = vmax.f32 %v1093, 0.0
    %v1162 = vmax.f32 %v1095, 0.0
    %v1163 = vmax.f32 %v1097, 0.0
    %v1164 = vmax.f32 %v1099, 0.0
    %v1165 = vpack.c.bf16 %v1103, %v1101
    %v1166 = vpack.c.bf16 %v1104, %v1102
    %v1167 = vpack.c.bf16 %v1107, %v1105
    %v1168 = vpack.c.bf16 %v1108, %v1106
    %v1169 = vpack.c.bf16 %v1111, %v1109
    %v1170 = vpack.c.bf16 %v1112, %v1110
    %v1171 = vpack.c.bf16 %v1115, %v1113
    %v1172 = vpack.c.bf16 %v1116, %v1114
    %v1173 = vpack.c.bf16 %v1119, %v1117
    %v1174 = vpack.c.bf16 %v1120, %v1118
    %v1175 = vpack.c.bf16 %v1123, %v1121
    %v1176 = vpack.c.bf16 %v1124, %v1122
    %v1177 = vpack.c.bf16 %v1127, %v1125
    %v1178 = vpack.c.bf16 %v1128, %v1126
    %v1179 = vpack.c.bf16 %v1131, %v1129
    %v1180 = vpack.c.bf16 %v1132, %v1130
    %v1181 = vpack.c.bf16 %v1135, %v1133
    %v1182 = vpack.c.bf16 %v1136, %v1134
    %v1183 = vpack.c.bf16 %v1139, %v1137
    %v1184 = vpack.c.bf16 %v1140, %v1138
    %v1185 = vpack.c.bf16 %v1143, %v1141
    %v1186 = vpack.c.bf16 %v1144, %v1142
    %v1187 = vpack.c.bf16 %v1147, %v1145
    %v1188 = vpack.c.bf16 %v1148, %v1146
    %v1189 = vpack.c.bf16 %v1151, %v1149
    %v1190 = vpack.c.bf16 %v1152, %v1150
    %v1191 = vpack.c.bf16 %v1155, %v1153
    %v1192 = vpack.c.bf16 %v1156, %v1154
    %v1193 = vpack.c.bf16 %v1159, %v1157
    %v1194 = vpack.c.bf16 %v1160, %v1158
    %v1195 = vpack.c.bf16 %v1163, %v1161
    %v1196 = vpack.c.bf16 %v1164, %v1162
    %v1197 = vld [vmem:[#allocation7] sm:$0xff]
    %v1198 = vld [vmem:[#allocation7 + $0x8] sm:$0xff]
    %v1199 = vld [vmem:[#allocation7 + $0x10] sm:$0xff]
    %v1200 = vld [vmem:[#allocation7 + $0x18] sm:$0xff]
    %v1201 = vld [vmem:[#allocation7 + $0x20] sm:$0xff]
    %v1202 = vld [vmem:[#allocation7 + $0x28] sm:$0xff]
    %v1203 = vld [vmem:[#allocation7 + $0x30] sm:$0xff]
    %v1204 = vld [vmem:[#allocation7 + $0x38] sm:$0xff]
    %v1205 = vld [vmem:[#allocation7 + $0x40] sm:$0xff]
    %v1206 = vld [vmem:[#allocation7 + $0x48] sm:$0xff]
    %v1207 = vld [vmem:[#allocation7 + $0x50] sm:$0xff]
    %v1208 = vld [vmem:[#allocation7 + $0x58] sm:$0xff]
    %v1209 = vld [vmem:[#allocation7 + $0x60] sm:$0xff]
    %v1210 = vld [vmem:[#allocation7 + $0x68] sm:$0xff]
    %v1211 = vld [vmem:[#allocation7 + $0x70] sm:$0xff]
    %v1212 = vld [vmem:[#allocation7 + $0x78] sm:$0xff]
    %v1213 = vld [vmem:[#allocation7 + $0x80] sm:$0xff]
    %v1214 = vld [vmem:[#allocation7 + $0x88] sm:$0xff]
    %v1215 = vld [vmem:[#allocation7 + $0x90] sm:$0xff]
    %v1216 = vld [vmem:[#allocation7 + $0x98] sm:$0xff]
    %v1217 = vld [vmem:[#allocation7 + $0xa0] sm:$0xff]
    %v1218 = vld [vmem:[#allocation7 + $0xa8] sm:$0xff]
    %v1219 = vld [vmem:[#allocation7 + $0xb0] sm:$0xff]
    %v1220 = vld [vmem:[#allocation7 + $0xb8] sm:$0xff]
    %v1221 = vld [vmem:[#allocation7 + $0xc0] sm:$0xff]
    %v1222 = vld [vmem:[#allocation7 + $0xc8] sm:$0xff]
    %v1223 = vld [vmem:[#allocation7 + $0xd0] sm:$0xff]
    %v1224 = vld [vmem:[#allocation7 + $0xd8] sm:$0xff]
    %v1225 = vld [vmem:[#allocation7 + $0xe0] sm:$0xff]
    %v1226 = vld [vmem:[#allocation7 + $0xe8] sm:$0xff]
    %v1227 = vld [vmem:[#allocation7 + $0xf0] sm:$0xff]
    %v1228 = vld [vmem:[#allocation7 + $0xf8] sm:$0xff]
    %v1229 = vld [vmem:[#allocation7 + $0x100] sm:$0xff]
    %v1230 = vld [vmem:[#allocation7 + $0x108] sm:$0xff]
    %v1231 = vld [vmem:[#allocation7 + $0x110] sm:$0xff]
    %v1232 = vld [vmem:[#allocation7 + $0x118] sm:$0xff]
    %v1233 = vld [vmem:[#allocation7 + $0x120] sm:$0xff]
    %v1234 = vld [vmem:[#allocation7 + $0x128] sm:$0xff]
    %v1235 = vld [vmem:[#allocation7 + $0x130] sm:$0xff]
    %v1236 = vld [vmem:[#allocation7 + $0x138] sm:$0xff]
    %v1237 = vld [vmem:[#allocation7 + $0x140] sm:$0xff]
    %v1238 = vld [vmem:[#allocation7 + $0x148] sm:$0xff]
    %v1239 = vld [vmem:[#allocation7 + $0x150] sm:$0xff]
    %v1240 = vld [vmem:[#allocation7 + $0x158] sm:$0xff]
    %v1241 = vld [vmem:[#allocation7 + $0x160] sm:$0xff]
    %v1242 = vld [vmem:[#allocation7 + $0x168] sm:$0xff]
    %v1243 = vld [vmem:[#allocation7 + $0x170] sm:$0xff]
    %v1244 = vld [vmem:[#allocation7 + $0x178] sm:$0xff]
    %v1245 = vld [vmem:[#allocation7 + $0x180] sm:$0xff]
    %v1246 = vld [vmem:[#allocation7 + $0x188] sm:$0xff]
    %v1247 = vld [vmem:[#allocation7 + $0x190] sm:$0xff]
    %v1248 = vld [vmem:[#allocation7 + $0x198] sm:$0xff]
    %v1249 = vld [vmem:[#allocation7 + $0x1a0] sm:$0xff]
    %v1250 = vld [vmem:[#allocation7 + $0x1a8] sm:$0xff]
    %v1251 = vld [vmem:[#allocation7 + $0x1b0] sm:$0xff]
    %v1252 = vld [vmem:[#allocation7 + $0x1b8] sm:$0xff]
    %v1253 = vld [vmem:[#allocation7 + $0x1c0] sm:$0xff]
    %v1254 = vld [vmem:[#allocation7 + $0x1c8] sm:$0xff]
    %v1255 = vld [vmem:[#allocation7 + $0x1d0] sm:$0xff]
    %v1256 = vld [vmem:[#allocation7 + $0x1d8] sm:$0xff]
    %v1257 = vld [vmem:[#allocation7 + $0x1e0] sm:$0xff]
    %v1258 = vld [vmem:[#allocation7 + $0x1e8] sm:$0xff]
    %v1259 = vld [vmem:[#allocation7 + $0x1f0] sm:$0xff]
    %v1260 = vld [vmem:[#allocation7 + $0x1f8] sm:$0xff]
    %v1262 = vlaneseq
    %v1263 = vshrl.u32 %v1262, 7
    %v1264 = vsub.s32 0, %v1263
    %v1265 = vrot.slane %v106, %v1264
    %v1266 = vlaneseq
    %v1267 = vshrl.u32 %v1266, 7
    %v1268 = vsub.s32 1, %v1267
    %v1269 = vrot.slane %v106, %v1268
    %v1270 = vlaneseq
    %v1271 = vshrl.u32 %v1270, 7
    %v1272 = vsub.s32 2, %v1271
    %v1273 = vrot.slane %v106, %v1272
    %v1274 = vlaneseq
    %v1275 = vshrl.u32 %v1274, 7
    %v1276 = vsub.s32 3, %v1275
    %v1277 = vrot.slane %v106, %v1276
    %v1346 = vunpack.c.l.b16 %v1197
    %v1347 = vunpack.c.h.b16 %v1197
    %v1348 = vunpack.c.l.b16 %v1198
    %v1349 = vunpack.c.h.b16 %v1198
    %v1350 = vunpack.c.l.b16 %v1199
    %v1351 = vunpack.c.h.b16 %v1199
    %v1352 = vunpack.c.l.b16 %v1200
    %v1353 = vunpack.c.h.b16 %v1200
    %v1354 = vunpack.c.l.b16 %v1201
    %v1355 = vunpack.c.h.b16 %v1201
    %v1356 = vunpack.c.l.b16 %v1202
    %v1357 = vunpack.c.h.b16 %v1202
    %v1358 = vunpack.c.l.b16 %v1203
    %v1359 = vunpack.c.h.b16 %v1203
    %v1360 = vunpack.c.l.b16 %v1204
    %v1361 = vunpack.c.h.b16 %v1204
    %v1362 = vunpack.c.l.b16 %v1205
    %v1363 = vunpack.c.h.b16 %v1205
    %v1364 = vunpack.c.l.b16 %v1206
    %v1365 = vunpack.c.h.b16 %v1206
    %v1366 = vunpack.c.l.b16 %v1207
    %v1367 = vunpack.c.h.b16 %v1207
    %v1368 = vunpack.c.l.b16 %v1208
    %v1369 = vunpack.c.h.b16 %v1208
    %v1370 = vunpack.c.l.b16 %v1209
    %v1371 = vunpack.c.h.b16 %v1209
    %v1372 = vunpack.c.l.b16 %v1210
    %v1373 = vunpack.c.h.b16 %v1210
    %v1374 = vunpack.c.l.b16 %v1211
    %v1375 = vunpack.c.h.b16 %v1211
    %v1376 = vunpack.c.l.b16 %v1212
    %v1377 = vunpack.c.h.b16 %v1212
    %v1378 = vunpack.c.l.b16 %v1213
    %v1379 = vunpack.c.h.b16 %v1213
    %v1380 = vunpack.c.l.b16 %v1214
    %v1381 = vunpack.c.h.b16 %v1214
    %v1382 = vunpack.c.l.b16 %v1215
    %v1383 = vunpack.c.h.b16 %v1215
    %v1384 = vunpack.c.l.b16 %v1216
    %v1385 = vunpack.c.h.b16 %v1216
    %v1386 = vunpack.c.l.b16 %v1217
    %v1387 = vunpack.c.h.b16 %v1217
    %v1388 = vunpack.c.l.b16 %v1218
    %v1389 = vunpack.c.h.b16 %v1218
    %v1390 = vunpack.c.l.b16 %v1219
    %v1391 = vunpack.c.h.b16 %v1219
    %v1392 = vunpack.c.l.b16 %v1220
    %v1393 = vunpack.c.h.b16 %v1220
    %v1394 = vunpack.c.l.b16 %v1221
    %v1395 = vunpack.c.h.b16 %v1221
    %v1396 = vunpack.c.l.b16 %v1222
    %v1397 = vunpack.c.h.b16 %v1222
    %v1398 = vunpack.c.l.b16 %v1223
    %v1399 = vunpack.c.h.b16 %v1223
    %v1400 = vunpack.c.l.b16 %v1224
    %v1401 = vunpack.c.h.b16 %v1224
    %v1402 = vunpack.c.l.b16 %v1225
    %v1403 = vunpack.c.h.b16 %v1225
    %v1404 = vunpack.c.l.b16 %v1226
    %v1405 = vunpack.c.h.b16 %v1226
    %v1406 = vunpack.c.l.b16 %v1227
    %v1407 = vunpack.c.h.b16 %v1227
    %v1408 = vunpack.c.l.b16 %v1228
    %v1409 = vunpack.c.h.b16 %v1228
    %v1410 = vunpack.c.l.b16 %v1229
    %v1411 = vunpack.c.h.b16 %v1229
    %v1412 = vunpack.c.l.b16 %v1230
    %v1413 = vunpack.c.h.b16 %v1230
    %v1414 = vunpack.c.l.b16 %v1231
    %v1415 = vunpack.c.h.b16 %v1231
    %v1416 = vunpack.c.l.b16 %v1232
    %v1417 = vunpack.c.h.b16 %v1232
    %v1418 = vunpack.c.l.b16 %v1233
    %v1419 = vunpack.c.h.b16 %v1233
    %v1420 = vunpack.c.l.b16 %v1234
    %v1421 = vunpack.c.h.b16 %v1234
    %v1422 = vunpack.c.l.b16 %v1235
    %v1423 = vunpack.c.h.b16 %v1235
    %v1424 = vunpack.c.l.b16 %v1236
    %v1425 = vunpack.c.h.b16 %v1236
    %v1426 = vunpack.c.l.b16 %v1237
    %v1427 = vunpack.c.h.b16 %v1237
    %v1428 = vunpack.c.l.b16 %v1238
    %v1429 = vunpack.c.h.b16 %v1238
    %v1430 = vunpack.c.l.b16 %v1239
    %v1431 = vunpack.c.h.b16 %v1239
    %v1432 = vunpack.c.l.b16 %v1240
    %v1433 = vunpack.c.h.b16 %v1240
    %v1434 = vunpack.c.l.b16 %v1241
    %v1435 = vunpack.c.h.b16 %v1241
    %v1436 = vunpack.c.l.b16 %v1242
    %v1437 = vunpack.c.h.b16 %v1242
    %v1438 = vunpack.c.l.b16 %v1243
    %v1439 = vunpack.c.h.b16 %v1243
    %v1440 = vunpack.c.l.b16 %v1244
    %v1441 = vunpack.c.h.b16 %v1244
    %v1442 = vunpack.c.l.b16 %v1245
    %v1443 = vunpack.c.h.b16 %v1245
    %v1444 = vunpack.c.l.b16 %v1246
    %v1445 = vunpack.c.h.b16 %v1246
    %v1446 = vunpack.c.l.b16 %v1247
    %v1447 = vunpack.c.h.b16 %v1247
    %v1448 = vunpack.c.l.b16 %v1248
    %v1449 = vunpack.c.h.b16 %v1248
    %v1450 = vunpack.c.l.b16 %v1249
    %v1451 = vunpack.c.h.b16 %v1249
    %v1452 = vunpack.c.l.b16 %v1250
    %v1453 = vunpack.c.h.b16 %v1250
    %v1454 = vunpack.c.l.b16 %v1251
    %v1455 = vunpack.c.h.b16 %v1251
    %v1456 = vunpack.c.l.b16 %v1252
    %v1457 = vunpack.c.h.b16 %v1252
    %v1458 = vunpack.c.l.b16 %v1253
    %v1459 = vunpack.c.h.b16 %v1253
    %v1460 = vunpack.c.l.b16 %v1254
    %v1461 = vunpack.c.h.b16 %v1254
    %v1462 = vunpack.c.l.b16 %v1255
    %v1463 = vunpack.c.h.b16 %v1255
    %v1464 = vunpack.c.l.b16 %v1256
    %v1465 = vunpack.c.h.b16 %v1256
    %v1466 = vunpack.c.l.b16 %v1257
    %v1467 = vunpack.c.h.b16 %v1257
    %v1468 = vunpack.c.l.b16 %v1258
    %v1469 = vunpack.c.h.b16 %v1258
    %v1470 = vunpack.c.l.b16 %v1259
    %v1471 = vunpack.c.h.b16 %v1259
    %v1472 = vunpack.c.l.b16 %v1260
    %v1473 = vunpack.c.h.b16 %v1260
    %v1474 = vpack.c.b16 %v1350, %v1346
    %v1475 = vpack.c.b16 %v1351, %v1347
    %v1476 = vpack.c.b16 %v1352, %v1348
    %v1477 = vpack.c.b16 %v1353, %v1349
    %v1478 = vpack.c.b16 %v1358, %v1354
    %v1479 = vpack.c.b16 %v1359, %v1355
    %v1480 = vpack.c.b16 %v1360, %v1356
    %v1481 = vpack.c.b16 %v1361, %v1357
    %v1482 = vpack.c.b16 %v1366, %v1362
    %v1483 = vpack.c.b16 %v1367, %v1363
    %v1484 = vpack.c.b16 %v1368, %v1364
    %v1485 = vpack.c.b16 %v1369, %v1365
    %v1486 = vpack.c.b16 %v1374, %v1370
    %v1487 = vpack.c.b16 %v1375, %v1371
    %v1488 = vpack.c.b16 %v1376, %v1372
    %v1489 = vpack.c.b16 %v1377, %v1373
    %v1490 = vpack.c.b16 %v1382, %v1378
    %v1491 = vpack.c.b16 %v1383, %v1379
    %v1492 = vpack.c.b16 %v1384, %v1380
    %v1493 = vpack.c.b16 %v1385, %v1381
    %v1494 = vpack.c.b16 %v1390, %v1386
    %v1495 = vpack.c.b16 %v1391, %v1387
    %v1496 = vpack.c.b16 %v1392, %v1388
    %v1497 = vpack.c.b16 %v1393, %v1389
    %v1498 = vpack.c.b16 %v1398, %v1394
    %v1499 = vpack.c.b16 %v1399, %v1395
    %v1500 = vpack.c.b16 %v1400, %v1396
    %v1501 = vpack.c.b16 %v1401, %v1397
    %v1502 = vpack.c.b16 %v1406, %v1402
    %v1503 = vpack.c.b16 %v1407, %v1403
    %v1504 = vpack.c.b16 %v1408, %v1404
    %v1505 = vpack.c.b16 %v1409, %v1405
    %v1506 = vpack.c.b16 %v1414, %v1410
    %v1507 = vpack.c.b16 %v1415, %v1411
    %v1508 = vpack.c.b16 %v1416, %v1412
    %v1509 = vpack.c.b16 %v1417, %v1413
    %v1510 = vpack.c.b16 %v1422, %v1418
    %v1511 = vpack.c.b16 %v1423, %v1419
    %v1512 = vpack.c.b16 %v1424, %v1420
    %v1513 = vpack.c.b16 %v1425, %v1421
    %v1514 = vpack.c.b16 %v1430, %v1426
    %v1515 = vpack.c.b16 %v1431, %v1427
    %v1516 = vpack.c.b16 %v1432, %v1428
    %v1517 = vpack.c.b16 %v1433, %v1429
    %v1518 = vpack.c.b16 %v1438, %v1434
    %v1519 = vpack.c.b16 %v1439, %v1435
    %v1520 = vpack.c.b16 %v1440, %v1436
    %v1521 = vpack.c.b16 %v1441, %v1437
    %v1522 = vpack.c.b16 %v1446, %v1442
    %v1523 = vpack.c.b16 %v1447, %v1443
    %v1524 = vpack.c.b16 %v1448, %v1444
    %v1525 = vpack.c.b16 %v1449, %v1445
    %v1526 = vpack.c.b16 %v1454, %v1450
    %v1527 = vpack.c.b16 %v1455, %v1451
    %v1528 = vpack.c.b16 %v1456, %v1452
    %v1529 = vpack.c.b16 %v1457, %v1453
    %v1530 = vpack.c.b16 %v1462, %v1458
    %v1531 = vpack.c.b16 %v1463, %v1459
    %v1532 = vpack.c.b16 %v1464, %v1460
    %v1533 = vpack.c.b16 %v1465, %v1461
    %v1534 = vpack.c.b16 %v1470, %v1466
    %v1535 = vpack.c.b16 %v1471, %v1467
    %v1536 = vpack.c.b16 %v1472, %v1468
    %v1537 = vpack.c.b16 %v1473, %v1469
    %1602 = vmatprep.subr.bf16.mxu0 %v1475
    %1603 = vmatpush1.bf16.msra.mxu0 %v1474
    %1604 = vmatprep.subr.bf16.mxu0 %v1479
    %1605 = vmatpush1.bf16.msra.mxu0 %v1478
    %1606 = vmatprep.subr.bf16.mxu0 %v1483
    %1607 = vmatpush1.bf16.msra.mxu0 %v1482
    %1608 = vmatprep.subr.bf16.mxu0 %v1487
    %1609 = vmatpush1.bf16.msra.mxu0 %v1486
    %1610 = vmatprep.subr.bf16.mxu0 %v1491
    %1611 = vmatpush1.bf16.msra.mxu0 %v1490
    %1612 = vmatprep.subr.bf16.mxu0 %v1495
    %1613 = vmatpush1.bf16.msra.mxu0 %v1494
    %1614 = vmatprep.subr.bf16.mxu0 %v1499
    %1615 = vmatpush1.bf16.msra.mxu0 %v1498
    %1616 = vmatprep.subr.bf16.mxu0 %v1503
    %1617 = vmatpush1.bf16.msra.mxu0 %v1502
    %1618 = vmatprep.subr.bf16.mxu0 %v1507
    %1619 = vmatpush1.bf16.msra.mxu0 %v1506
    %1620 = vmatprep.subr.bf16.mxu0 %v1511
    %1621 = vmatpush1.bf16.msra.mxu0 %v1510
    %1622 = vmatprep.subr.bf16.mxu0 %v1515
    %1623 = vmatpush1.bf16.msra.mxu0 %v1514
    %1624 = vmatprep.subr.bf16.mxu0 %v1519
    %1625 = vmatpush1.bf16.msra.mxu0 %v1518
    %1626 = vmatprep.subr.bf16.mxu0 %v1523
    %1627 = vmatpush1.bf16.msra.mxu0 %v1522
    %1628 = vmatprep.subr.bf16.mxu0 %v1527
    %1629 = vmatpush1.bf16.msra.mxu0 %v1526
    %1630 = vmatprep.subr.bf16.mxu0 %v1531
    %1631 = vmatpush1.bf16.msra.mxu0 %v1530
    %1632 = vmatprep.subr.bf16.mxu0 %v1535
    %1633 = vmatpush1.bf16.msra.mxu0 %v1534
    %1634 = vmatprep.mubr.bf16.mxu0 %v1166
    %1635 = vmatmul.mubr.bf16.gmra.mrb[0].mxu0 %v1165
    %v1636 = vpop.f32.mrb[0].mxu0
    %v1637 = vadd.f32 %v1265, %v1636
    %v1638 = vpop.f32.mrb[0].mxu0
    %v1639 = vadd.f32 %v1269, %v1638
    %v1640 = vpop.f32.mrb[0].mxu0
    %v1641 = vadd.f32 %v1265, %v1640
    %v1642 = vpop.f32.mrb[0].mxu0
    %v1643 = vadd.f32 %v1269, %v1642
    %1644 = vmatprep.mubr.bf16.mxu0 %v1168
    %1645 = vmatmul.mubr.bf16.gmra.mrb[0].mxu0 %v1167
    %v1646 = vpop.f32.mrb[0].mxu0
    %v1647 = vadd.f32 %v1265, %v1646
    %v1648 = vpop.f32.mrb[0].mxu0
    %v1649 = vadd.f32 %v1269, %v1648
    %v1650 = vpop.f32.mrb[0].mxu0
    %v1651 = vadd.f32 %v1265, %v1650
    %v1652 = vpop.f32.mrb[0].mxu0
    %v1653 = vadd.f32 %v1269, %v1652
    %1654 = vmatprep.mubr.bf16.mxu0 %v1170
    %1655 = vmatmul.mubr.bf16.gmra.mrb[0].mxu0 %v1169
    %v1656 = vpop.f32.mrb[0].mxu0
    %v1657 = vadd.f32 %v1265, %v1656
    %v1658 = vpop.f32.mrb[0].mxu0
    %v1659 = vadd.f32 %v1269, %v1658
    %v1660 = vpop.f32.mrb[0].mxu0
    %v1661 = vadd.f32 %v1265, %v1660
    %v1662 = vpop.f32.mrb[0].mxu0
    %v1663 = vadd.f32 %v1269, %v1662
    %1664 = vmatprep.mubr.bf16.mxu0 %v1172
    %1665 = vmatmul.mubr.bf16.gmra.mrb[0].mxu0 %v1171
    %v1666 = vpop.f32.mrb[0].mxu0
    %v1667 = vadd.f32 %v1265, %v1666
    %v1668 = vpop.f32.mrb[0].mxu0
    %v1669 = vadd.f32 %v1269, %v1668
    %v1670 = vpop.f32.mrb[0].mxu0
    %v1671 = vadd.f32 %v1265, %v1670
    %v1672 = vpop.f32.mrb[0].mxu0
    %v1673 = vadd.f32 %v1269, %v1672
    %1674 = vmatprep.mubr.bf16.mxu0 %v1174
    %1675 = vmatmul.mubr.bf16.gmra.mrb[0].mxu0 %v1173
    %v1676 = vpop.f32.mrb[0].mxu0
    %v1677 = vadd.f32 %v1265, %v1676
    %v1678 = vpop.f32.mrb[0].mxu0
    %v1679 = vadd.f32 %v1269, %v1678
    %v1680 = vpop.f32.mrb[0].mxu0
    %v1681 = vadd.f32 %v1265, %v1680
    %v1682 = vpop.f32.mrb[0].mxu0
    %v1683 = vadd.f32 %v1269, %v1682
    %1684 = vmatprep.mubr.bf16.mxu0 %v1176
    %1685 = vmatmul.mubr.bf16.gmra.mrb[0].mxu0 %v1175
    %v1686 = vpop.f32.mrb[0].mxu0
    %v1687 = vadd.f32 %v1265, %v1686
    %v1688 = vpop.f32.mrb[0].mxu0
    %v1689 = vadd.f32 %v1269, %v1688
    %v1690 = vpop.f32.mrb[0].mxu0
    %v1691 = vadd.f32 %v1265, %v1690
    %v1692 = vpop.f32.mrb[0].mxu0
    %v1693 = vadd.f32 %v1269, %v1692
    %1694 = vmatprep.mubr.bf16.mxu0 %v1178
    %1695 = vmatmul.mubr.bf16.gmra.mrb[0].mxu0 %v1177
    %v1696 = vpop.f32.mrb[0].mxu0
    %v1697 = vadd.f32 %v1265, %v1696
    %v1698 = vpop.f32.mrb[0].mxu0
    %v1699 = vadd.f32 %v1269, %v1698
    %v1700 = vpop.f32.mrb[0].mxu0
    %v1701 = vadd.f32 %v1265, %v1700
    %v1702 = vpop.f32.mrb[0].mxu0
    %v1703 = vadd.f32 %v1269, %v1702
    %1704 = vmatprep.mubr.bf16.mxu0 %v1180
    %1705 = vmatmul.mubr.bf16.gmra.mrb[0].mxu0 %v1179
    %v1706 = vpop.f32.mrb[0].mxu0
    %v1707 = vadd.f32 %v1265, %v1706
    %v1708 = vpop.f32.mrb[0].mxu0
    %v1709 = vadd.f32 %v1269, %v1708
    %v1710 = vpop.f32.mrb[0].mxu0
    %v1711 = vadd.f32 %v1265, %v1710
    %v1712 = vpop.f32.mrb[0].mxu0
    %v1713 = vadd.f32 %v1269, %v1712
    %1714 = vmatprep.mubr.bf16.mxu0 %v1182
    %1715 = vmatmul.mubr.bf16.gmra.mrb[0].mxu0 %v1181
    %v1716 = vpop.f32.mrb[0].mxu0
    %v1717 = vadd.f32 %v1265, %v1716
    %v1718 = vpop.f32.mrb[0].mxu0
    %v1719 = vadd.f32 %v1269, %v1718
    %v1720 = vpop.f32.mrb[0].mxu0
    %v1721 = vadd.f32 %v1265, %v1720
    %v1722 = vpop.f32.mrb[0].mxu0
    %v1723 = vadd.f32 %v1269, %v1722
    %1724 = vmatprep.mubr.bf16.mxu0 %v1184
    %1725 = vmatmul.mubr.bf16.gmra.mrb[0].mxu0 %v1183
    %v1726 = vpop.f32.mrb[0].mxu0
    %v1727 = vadd.f32 %v1265, %v1726
    %v1728 = vpop.f32.mrb[0].mxu0
    %v1729 = vadd.f32 %v1269, %v1728
    %v1730 = vpop.f32.mrb[0].mxu0
    %v1731 = vadd.f32 %v1265, %v1730
    %v1732 = vpop.f32.mrb[0].mxu0
    %v1733 = vadd.f32 %v1269, %v1732
    %1734 = vmatprep.mubr.bf16.mxu0 %v1186
    %1735 = vmatmul.mubr.bf16.gmra.mrb[0].mxu0 %v1185
    %v1736 = vpop.f32.mrb[0].mxu0
    %v1737 = vadd.f32 %v1265, %v1736
    %v1738 = vpop.f32.mrb[0].mxu0
    %v1739 = vadd.f32 %v1269, %v1738
    %v1740 = vpop.f32.mrb[0].mxu0
    %v1741 = vadd.f32 %v1265, %v1740
    %v1742 = vpop.f32.mrb[0].mxu0
    %v1743 = vadd.f32 %v1269, %v1742
    %1744 = vmatprep.mubr.bf16.mxu0 %v1188
    %1745 = vmatmul.mubr.bf16.gmra.mrb[0].mxu0 %v1187
    %v1746 = vpop.f32.mrb[0].mxu0
    %v1747 = vadd.f32 %v1265, %v1746
    %v1748 = vpop.f32.mrb[0].mxu0
    %v1749 = vadd.f32 %v1269, %v1748
    %v1750 = vpop.f32.mrb[0].mxu0
    %v1751 = vadd.f32 %v1265, %v1750
    %v1752 = vpop.f32.mrb[0].mxu0
    %v1753 = vadd.f32 %v1269, %v1752
    %1754 = vmatprep.mubr.bf16.mxu0 %v1190
    %1755 = vmatmul.mubr.bf16.gmra.mrb[0].mxu0 %v1189
    %v1756 = vpop.f32.mrb[0].mxu0
    %v1757 = vadd.f32 %v1265, %v1756
    %v1758 = vpop.f32.mrb[0].mxu0
    %v1759 = vadd.f32 %v1269, %v1758
    %v1760 = vpop.f32.mrb[0].mxu0
    %v1761 = vadd.f32 %v1265, %v1760
    %v1762 = vpop.f32.mrb[0].mxu0
    %v1763 = vadd.f32 %v1269, %v1762
    %1764 = vmatprep.mubr.bf16.mxu0 %v1192
    %1765 = vmatmul.mubr.bf16.gmra.mrb[0].mxu0 %v1191
    %v1766 = vpop.f32.mrb[0].mxu0
    %v1767 = vadd.f32 %v1265, %v1766
    %v1768 = vpop.f32.mrb[0].mxu0
    %v1769 = vadd.f32 %v1269, %v1768
    %v1770 = vpop.f32.mrb[0].mxu0
    %v1771 = vadd.f32 %v1265, %v1770
    %v1772 = vpop.f32.mrb[0].mxu0
    %v1773 = vadd.f32 %v1269, %v1772
    %1774 = vmatprep.mubr.bf16.mxu0 %v1194
    %1775 = vmatmul.mubr.bf16.gmra.mrb[0].mxu0 %v1193
    %v1776 = vpop.f32.mrb[0].mxu0
    %v1777 = vadd.f32 %v1265, %v1776
    %v1778 = vpop.f32.mrb[0].mxu0
    %v1779 = vadd.f32 %v1269, %v1778
    %v1780 = vpop.f32.mrb[0].mxu0
    %v1781 = vadd.f32 %v1265, %v1780
    %v1782 = vpop.f32.mrb[0].mxu0
    %v1783 = vadd.f32 %v1269, %v1782
    %1784 = vmatprep.mubr.bf16.mxu0 %v1196
    %1785 = vmatmul.mubr.bf16.gmra.mrb[0].mxu0 %v1195
    %v1786 = vpop.f32.mrb[0].mxu0
    %v1787 = vadd.f32 %v1265, %v1786
    %v1788 = vpop.f32.mrb[0].mxu0
    %v1789 = vadd.f32 %v1269, %v1788
    %v1790 = vpop.f32.mrb[0].mxu0
    %v1791 = vadd.f32 %v1265, %v1790
    %v1792 = vpop.f32.mrb[0].mxu0
    %v1793 = vadd.f32 %v1269, %v1792
    %1794 = vdwg.mxu0
    %1795 = vmatprep.subr.bf16.mxu0 %v1477
    %1796 = vmatpush1.bf16.msra.mxu0 %v1476
    %1797 = vmatprep.subr.bf16.mxu0 %v1481
    %1798 = vmatpush1.bf16.msra.mxu0 %v1480
    %1799 = vmatprep.subr.bf16.mxu0 %v1485
    %1800 = vmatpush1.bf16.msra.mxu0 %v1484
    %1801 = vmatprep.subr.bf16.mxu0 %v1489
    %1802 = vmatpush1.bf16.msra.mxu0 %v1488
    %1803 = vmatprep.subr.bf16.mxu0 %v1493
    %1804 = vmatpush1.bf16.msra.mxu0 %v1492
    %1805 = vmatprep.subr.bf16.mxu0 %v1497
    %1806 = vmatpush1.bf16.msra.mxu0 %v1496
    %1807 = vmatprep.subr.bf16.mxu0 %v1501
    %1808 = vmatpush1.bf16.msra.mxu0 %v1500
    %1809 = vmatprep.subr.bf16.mxu0 %v1505
    %1810 = vmatpush1.bf16.msra.mxu0 %v1504
    %1811 = vmatprep.subr.bf16.mxu0 %v1509
    %1812 = vmatpush1.bf16.msra.mxu0 %v1508
    %1813 = vmatprep.subr.bf16.mxu0 %v1513
    %1814 = vmatpush1.bf16.msra.mxu0 %v1512
    %1815 = vmatprep.subr.bf16.mxu0 %v1517
    %1816 = vmatpush1.bf16.msra.mxu0 %v1516
    %1817 = vmatprep.subr.bf16.mxu0 %v1521
    %1818 = vmatpush1.bf16.msra.mxu0 %v1520
    %1819 = vmatprep.subr.bf16.mxu0 %v1525
    %1820 = vmatpush1.bf16.msra.mxu0 %v1524
    %1821 = vmatprep.subr.bf16.mxu0 %v1529
    %1822 = vmatpush1.bf16.msra.mxu0 %v1528
    %1823 = vmatprep.subr.bf16.mxu0 %v1533
    %1824 = vmatpush1.bf16.msra.mxu0 %v1532
    %1825 = vmatprep.subr.bf16.mxu0 %v1537
    %1826 = vmatpush1.bf16.msra.mxu0 %v1536
    %1827 = vmatprep.mubr.bf16.mxu0 %v1166
    %1828 = vmatmul.mubr.bf16.gmra.mrb[0].mxu0 %v1165
    %v1829 = vpop.f32.mrb[0].mxu0
    %v1830 = vadd.f32 %v1273, %v1829
    %v1831 = vpop.f32.mrb[0].mxu0
    %v1832 = vadd.f32 %v1277, %v1831
    %v1833 = vpop.f32.mrb[0].mxu0
    %v1834 = vadd.f32 %v1273, %v1833
    %v1835 = vpop.f32.mrb[0].mxu0
    %v1836 = vadd.f32 %v1277, %v1835
    %1837 = vmatprep.mubr.bf16.mxu0 %v1168
    %1838 = vmatmul.mubr.bf16.gmra.mrb[0].mxu0 %v1167
    %v1839 = vpop.f32.mrb[0].mxu0
    %v1840 = vadd.f32 %v1273, %v1839
    %v1841 = vpop.f32.mrb[0].mxu0
    %v1842 = vadd.f32 %v1277, %v1841
    %v1843 = vpop.f32.mrb[0].mxu0
    %v1844 = vadd.f32 %v1273, %v1843
    %v1845 = vpop.f32.mrb[0].mxu0
    %v1846 = vadd.f32 %v1277, %v1845
    %1847 = vmatprep.mubr.bf16.mxu0 %v1170
    %1848 = vmatmul.mubr.bf16.gmra.mrb[0].mxu0 %v1169
    %v1849 = vpop.f32.mrb[0].mxu0
    %v1850 = vadd.f32 %v1273, %v1849
    %v1851 = vpop.f32.mrb[0].mxu0
    %v1852 = vadd.f32 %v1277, %v1851
    %v1853 = vpop.f32.mrb[0].mxu0
    %v1854 = vadd.f32 %v1273, %v1853
    %v1855 = vpop.f32.mrb[0].mxu0
    %v1856 = vadd.f32 %v1277, %v1855
    %1857 = vmatprep.mubr.bf16.mxu0 %v1172
    %1858 = vmatmul.mubr.bf16.gmra.mrb[0].mxu0 %v1171
    %v1859 = vpop.f32.mrb[0].mxu0
    %v1860 = vadd.f32 %v1273, %v1859
    %v1861 = vpop.f32.mrb[0].mxu0
    %v1862 = vadd.f32 %v1277, %v1861
    %v1863 = vpop.f32.mrb[0].mxu0
    %v1864 = vadd.f32 %v1273, %v1863
    %v1865 = vpop.f32.mrb[0].mxu0
    %v1866 = vadd.f32 %v1277, %v1865
    %1867 = vmatprep.mubr.bf16.mxu0 %v1174
    %1868 = vmatmul.mubr.bf16.gmra.mrb[0].mxu0 %v1173
    %v1869 = vpop.f32.mrb[0].mxu0
    %v1870 = vadd.f32 %v1273, %v1869
    %v1871 = vpop.f32.mrb[0].mxu0
    %v1872 = vadd.f32 %v1277, %v1871
    %v1873 = vpop.f32.mrb[0].mxu0
    %v1874 = vadd.f32 %v1273, %v1873
    %v1875 = vpop.f32.mrb[0].mxu0
    %v1876 = vadd.f32 %v1277, %v1875
    %1877 = vmatprep.mubr.bf16.mxu0 %v1176
    %1878 = vmatmul.mubr.bf16.gmra.mrb[0].mxu0 %v1175
    %v1879 = vpop.f32.mrb[0].mxu0
    %v1880 = vadd.f32 %v1273, %v1879
    %v1881 = vpop.f32.mrb[0].mxu0
    %v1882 = vadd.f32 %v1277, %v1881
    %v1883 = vpop.f32.mrb[0].mxu0
    %v1884 = vadd.f32 %v1273, %v1883
    %v1885 = vpop.f32.mrb[0].mxu0
    %v1886 = vadd.f32 %v1277, %v1885
    %1887 = vmatprep.mubr.bf16.mxu0 %v1178
    %1888 = vmatmul.mubr.bf16.gmra.mrb[0].mxu0 %v1177
    %v1889 = vpop.f32.mrb[0].mxu0
    %v1890 = vadd.f32 %v1273, %v1889
    %v1891 = vpop.f32.mrb[0].mxu0
    %v1892 = vadd.f32 %v1277, %v1891
    %v1893 = vpop.f32.mrb[0].mxu0
    %v1894 = vadd.f32 %v1273, %v1893
    %v1895 = vpop.f32.mrb[0].mxu0
    %v1896 = vadd.f32 %v1277, %v1895
    %1897 = vmatprep.mubr.bf16.mxu0 %v1180
    %1898 = vmatmul.mubr.bf16.gmra.mrb[0].mxu0 %v1179
    %v1899 = vpop.f32.mrb[0].mxu0
    %v1900 = vadd.f32 %v1273, %v1899
    %v1901 = vpop.f32.mrb[0].mxu0
    %v1902 = vadd.f32 %v1277, %v1901
    %v1903 = vpop.f32.mrb[0].mxu0
    %v1904 = vadd.f32 %v1273, %v1903
    %v1905 = vpop.f32.mrb[0].mxu0
    %v1906 = vadd.f32 %v1277, %v1905
    %1907 = vmatprep.mubr.bf16.mxu0 %v1182
    %1908 = vmatmul.mubr.bf16.gmra.mrb[0].mxu0 %v1181
    %v1909 = vpop.f32.mrb[0].mxu0
    %v1910 = vadd.f32 %v1273, %v1909
    %v1911 = vpop.f32.mrb[0].mxu0
    %v1912 = vadd.f32 %v1277, %v1911
    %v1913 = vpop.f32.mrb[0].mxu0
    %v1914 = vadd.f32 %v1273, %v1913
    %v1915 = vpop.f32.mrb[0].mxu0
    %v1916 = vadd.f32 %v1277, %v1915
    %1917 = vmatprep.mubr.bf16.mxu0 %v1184
    %1918 = vmatmul.mubr.bf16.gmra.mrb[0].mxu0 %v1183
    %v1919 = vpop.f32.mrb[0].mxu0
    %v1920 = vadd.f32 %v1273, %v1919
    %v1921 = vpop.f32.mrb[0].mxu0
    %v1922 = vadd.f32 %v1277, %v1921
    %v1923 = vpop.f32.mrb[0].mxu0
    %v1924 = vadd.f32 %v1273, %v1923
    %v1925 = vpop.f32.mrb[0].mxu0
    %v1926 = vadd.f32 %v1277, %v1925
    %1927 = vmatprep.mubr.bf16.mxu0 %v1186
    %1928 = vmatmul.mubr.bf16.gmra.mrb[0].mxu0 %v1185
    %v1929 = vpop.f32.mrb[0].mxu0
    %v1930 = vadd.f32 %v1273, %v1929
    %v1931 = vpop.f32.mrb[0].mxu0
    %v1932 = vadd.f32 %v1277, %v1931
    %v1933 = vpop.f32.mrb[0].mxu0
    %v1934 = vadd.f32 %v1273, %v1933
    %v1935 = vpop.f32.mrb[0].mxu0
    %v1936 = vadd.f32 %v1277, %v1935
    %1937 = vmatprep.mubr.bf16.mxu0 %v1188
    %1938 = vmatmul.mubr.bf16.gmra.mrb[0].mxu0 %v1187
    %v1939 = vpop.f32.mrb[0].mxu0
    %v1940 = vadd.f32 %v1273, %v1939
    %v1941 = vpop.f32.mrb[0].mxu0
    %v1942 = vadd.f32 %v1277, %v1941
    %v1943 = vpop.f32.mrb[0].mxu0
    %v1944 = vadd.f32 %v1273, %v1943
    %v1945 = vpop.f32.mrb[0].mxu0
    %v1946 = vadd.f32 %v1277, %v1945
    %1947 = vmatprep.mubr.bf16.mxu0 %v1190
    %1948 = vmatmul.mubr.bf16.gmra.mrb[0].mxu0 %v1189
    %v1949 = vpop.f32.mrb[0].mxu0
    %v1950 = vadd.f32 %v1273, %v1949
    %v1951 = vpop.f32.mrb[0].mxu0
    %v1952 = vadd.f32 %v1277, %v1951
    %v1953 = vpop.f32.mrb[0].mxu0
    %v1954 = vadd.f32 %v1273, %v1953
    %v1955 = vpop.f32.mrb[0].mxu0
    %v1956 = vadd.f32 %v1277, %v1955
    %1957 = vmatprep.mubr.bf16.mxu0 %v1192
    %1958 = vmatmul.mubr.bf16.gmra.mrb[0].mxu0 %v1191
    %v1959 = vpop.f32.mrb[0].mxu0
    %v1960 = vadd.f32 %v1273, %v1959
    %v1961 = vpop.f32.mrb[0].mxu0
    %v1962 = vadd.f32 %v1277, %v1961
    %v1963 = vpop.f32.mrb[0].mxu0
    %v1964 = vadd.f32 %v1273, %v1963
    %v1965 = vpop.f32.mrb[0].mxu0
    %v1966 = vadd.f32 %v1277, %v1965
    %1967 = vmatprep.mubr.bf16.mxu0 %v1194
    %1968 = vmatmul.mubr.bf16.gmra.mrb[0].mxu0 %v1193
    %v1969 = vpop.f32.mrb[0].mxu0
    %v1970 = vadd.f32 %v1273, %v1969
    %v1971 = vpop.f32.mrb[0].mxu0
    %v1972 = vadd.f32 %v1277, %v1971
    %v1973 = vpop.f32.mrb[0].mxu0
    %v1974 = vadd.f32 %v1273, %v1973
    %v1975 = vpop.f32.mrb[0].mxu0
    %v1976 = vadd.f32 %v1277, %v1975
    %1977 = vmatprep.mubr.bf16.mxu0 %v1196
    %1978 = vmatmul.mubr.bf16.gmra.mrb[0].mxu0 %v1195
    %v1979 = vpop.f32.mrb[0].mxu0
    %v1980 = vadd.f32 %v1273, %v1979
    %v1981 = vpop.f32.mrb[0].mxu0
    %v1982 = vadd.f32 %v1277, %v1981
    %v1983 = vpop.f32.mrb[0].mxu0
    %v1984 = vadd.f32 %v1273, %v1983
    %v1985 = vpop.f32.mrb[0].mxu0
    %v1986 = vadd.f32 %v1277, %v1985
    %1987 = vdwg.mxu0
    %v1988 = vmax.f32 %v1637, 0.0
    %v1989 = vmax.f32 %v1639, 0.0
    %v1990 = vmax.f32 %v1830, 0.0
    %v1991 = vmax.f32 %v1832, 0.0
    %v1992 = vmax.f32 %v1641, 0.0
    %v1993 = vmax.f32 %v1643, 0.0
    %v1994 = vmax.f32 %v1834, 0.0
    %v1995 = vmax.f32 %v1836, 0.0
    %v1996 = vmax.f32 %v1647, 0.0
    %v1997 = vmax.f32 %v1649, 0.0
    %v1998 = vmax.f32 %v1840, 0.0
    %v1999 = vmax.f32 %v1842, 0.0
    %v2000 = vmax.f32 %v1651, 0.0
    %v2001 = vmax.f32 %v1653, 0.0
    %v2002 = vmax.f32 %v1844, 0.0
    %v2003 = vmax.f32 %v1846, 0.0
    %v2004 = vmax.f32 %v1657, 0.0
    %v2005 = vmax.f32 %v1659, 0.0
    %v2006 = vmax.f32 %v1850, 0.0
    %v2007 = vmax.f32 %v1852, 0.0
    %v2008 = vmax.f32 %v1661, 0.0
    %v2009 = vmax.f32 %v1663, 0.0
    %v2010 = vmax.f32 %v1854, 0.0
    %v2011 = vmax.f32 %v1856, 0.0
    %v2012 = vmax.f32 %v1667, 0.0
    %v2013 = vmax.f32 %v1669, 0.0
    %v2014 = vmax.f32 %v1860, 0.0
    %v2015 = vmax.f32 %v1862, 0.0
    %v2016 = vmax.f32 %v1671, 0.0
    %v2017 = vmax.f32 %v1673, 0.0
    %v2018 = vmax.f32 %v1864, 0.0
    %v2019 = vmax.f32 %v1866, 0.0
    %v2020 = vmax.f32 %v1677, 0.0
    %v2021 = vmax.f32 %v1679, 0.0
    %v2022 = vmax.f32 %v1870, 0.0
    %v2023 = vmax.f32 %v1872, 0.0
    %v2024 = vmax.f32 %v1681, 0.0
    %v2025 = vmax.f32 %v1683, 0.0
    %v2026 = vmax.f32 %v1874, 0.0
    %v2027 = vmax.f32 %v1876, 0.0
    %v2028 = vmax.f32 %v1687, 0.0
    %v2029 = vmax.f32 %v1689, 0.0
    %v2030 = vmax.f32 %v1880, 0.0
    %v2031 = vmax.f32 %v1882, 0.0
    %v2032 = vmax.f32 %v1691, 0.0
    %v2033 = vmax.f32 %v1693, 0.0
    %v2034 = vmax.f32 %v1884, 0.0
    %v2035 = vmax.f32 %v1886, 0.0
    %v2036 = vmax.f32 %v1697, 0.0
    %v2037 = vmax.f32 %v1699, 0.0
    %v2038 = vmax.f32 %v1890, 0.0
    %v2039 = vmax.f32 %v1892, 0.0
    %v2040 = vmax.f32 %v1701, 0.0
    %v2041 = vmax.f32 %v1703, 0.0
    %v2042 = vmax.f32 %v1894, 0.0
    %v2043 = vmax.f32 %v1896, 0.0
    %v2044 = vmax.f32 %v1707, 0.0
    %v2045 = vmax.f32 %v1709, 0.0
    %v2046 = vmax.f32 %v1900, 0.0
    %v2047 = vmax.f32 %v1902, 0.0
    %v2048 = vmax.f32 %v1711, 0.0
    %v2049 = vmax.f32 %v1713, 0.0
    %v2050 = vmax.f32 %v1904, 0.0
    %v2051 = vmax.f32 %v1906, 0.0
    %v2052 = vmax.f32 %v1717, 0.0
    %v2053 = vmax.f32 %v1719, 0.0
    %v2054 = vmax.f32 %v1910, 0.0
    %v2055 = vmax.f32 %v1912, 0.0
    %v2056 = vmax.f32 %v1721, 0.0
    %v2057 = vmax.f32 %v1723, 0.0
    %v2058 = vmax.f32 %v1914, 0.0
    %v2059 = vmax.f32 %v1916, 0.0
    %v2060 = vmax.f32 %v1727, 0.0
    %v2061 = vmax.f32 %v1729, 0.0
    %v2062 = vmax.f32 %v1920, 0.0
    %v2063 = vmax.f32 %v1922, 0.0
    %v2064 = vmax.f32 %v1731, 0.0
    %v2065 = vmax.f32 %v1733, 0.0
    %v2066 = vmax.f32 %v1924, 0.0
    %v2067 = vmax.f32 %v1926, 0.0
    %v2068 = vmax.f32 %v1737, 0.0
    %v2069 = vmax.f32 %v1739, 0.0
    %v2070 = vmax.f32 %v1930, 0.0
    %v2071 = vmax.f32 %v1932, 0.0
    %v2072 = vmax.f32 %v1741, 0.0
    %v2073 = vmax.f32 %v1743, 0.0
    %v2074 = vmax.f32 %v1934, 0.0
    %v2075 = vmax.f32 %v1936, 0.0
    %v2076 = vmax.f32 %v1747, 0.0
    %v2077 = vmax.f32 %v1749, 0.0
    %v2078 = vmax.f32 %v1940, 0.0
    %v2079 = vmax.f32 %v1942, 0.0
    %v2080 = vmax.f32 %v1751, 0.0
    %v2081 = vmax.f32 %v1753, 0.0
    %v2082 = vmax.f32 %v1944, 0.0
    %v2083 = vmax.f32 %v1946, 0.0
    %v2084 = vmax.f32 %v1757, 0.0
    %v2085 = vmax.f32 %v1759, 0.0
    %v2086 = vmax.f32 %v1950, 0.0
    %v2087 = vmax.f32 %v1952, 0.0
    %v2088 = vmax.f32 %v1761, 0.0
    %v2089 = vmax.f32 %v1763, 0.0
    %v2090 = vmax.f32 %v1954, 0.0
    %v2091 = vmax.f32 %v1956, 0.0
    %v2092 = vmax.f32 %v1767, 0.0
    %v2093 = vmax.f32 %v1769, 0.0
    %v2094 = vmax.f32 %v1960, 0.0
    %v2095 = vmax.f32 %v1962, 0.0
    %v2096 = vmax.f32 %v1771, 0.0
    %v2097 = vmax.f32 %v1773, 0.0
    %v2098 = vmax.f32 %v1964, 0.0
    %v2099 = vmax.f32 %v1966, 0.0
    %v2100 = vmax.f32 %v1777, 0.0
    %v2101 = vmax.f32 %v1779, 0.0
    %v2102 = vmax.f32 %v1970, 0.0
    %v2103 = vmax.f32 %v1972, 0.0
    %v2104 = vmax.f32 %v1781, 0.0
    %v2105 = vmax.f32 %v1783, 0.0
    %v2106 = vmax.f32 %v1974, 0.0
    %v2107 = vmax.f32 %v1976, 0.0
    %v2108 = vmax.f32 %v1787, 0.0
    %v2109 = vmax.f32 %v1789, 0.0
    %v2110 = vmax.f32 %v1980, 0.0
    %v2111 = vmax.f32 %v1982, 0.0
    %v2112 = vmax.f32 %v1791, 0.0
    %v2113 = vmax.f32 %v1793, 0.0
    %v2114 = vmax.f32 %v1984, 0.0
    %v2115 = vmax.f32 %v1986, 0.0
    %v2116 = vpack.c.bf16 %v1992, %v1988
    %v2117 = vpack.c.bf16 %v1993, %v1989
    %v2118 = vpack.c.bf16 %v1994, %v1990
    %v2119 = vpack.c.bf16 %v1995, %v1991
    %v2120 = vpack.c.bf16 %v2000, %v1996
    %v2121 = vpack.c.bf16 %v2001, %v1997
    %v2122 = vpack.c.bf16 %v2002, %v1998
    %v2123 = vpack.c.bf16 %v2003, %v1999
    %v2124 = vpack.c.bf16 %v2008, %v2004
    %v2125 = vpack.c.bf16 %v2009, %v2005
    %v2126 = vpack.c.bf16 %v2010, %v2006
    %v2127 = vpack.c.bf16 %v2011, %v2007
    %v2128 = vpack.c.bf16 %v2016, %v2012
    %v2129 = vpack.c.bf16 %v2017, %v2013
    %v2130 = vpack.c.bf16 %v2018, %v2014
    %v2131 = vpack.c.bf16 %v2019, %v2015
    %v2132 = vpack.c.bf16 %v2024, %v2020
    %v2133 = vpack.c.bf16 %v2025, %v2021
    %v2134 = vpack.c.bf16 %v2026, %v2022
    %v2135 = vpack.c.bf16 %v2027, %v2023
    %v2136 = vpack.c.bf16 %v2032, %v2028
    %v2137 = vpack.c.bf16 %v2033, %v2029
    %v2138 = vpack.c.bf16 %v2034, %v2030
    %v2139 = vpack.c.bf16 %v2035, %v2031
    %v2140 = vpack.c.bf16 %v2040, %v2036
    %v2141 = vpack.c.bf16 %v2041, %v2037
    %v2142 = vpack.c.bf16 %v2042, %v2038
    %v2143 = vpack.c.bf16 %v2043, %v2039
    %v2144 = vpack.c.bf16 %v2048, %v2044
    %v2145 = vpack.c.bf16 %v2049, %v2045
    %v2146 = vpack.c.bf16 %v2050, %v2046
    %v2147 = vpack.c.bf16 %v2051, %v2047
    %v2148 = vpack.c.bf16 %v2056, %v2052
    %v2149 = vpack.c.bf16 %v2057, %v2053
    %v2150 = vpack.c.bf16 %v2058, %v2054
    %v2151 = vpack.c.bf16 %v2059, %v2055
    %v2152 = vpack.c.bf16 %v2064, %v2060
    %v2153 = vpack.c.bf16 %v2065, %v2061
    %v2154 = vpack.c.bf16 %v2066, %v2062
    %v2155 = vpack.c.bf16 %v2067, %v2063
    %v2156 = vpack.c.bf16 %v2072, %v2068
    %v2157 = vpack.c.bf16 %v2073, %v2069
    %v2158 = vpack.c.bf16 %v2074, %v2070
    %v2159 = vpack.c.bf16 %v2075, %v2071
    %v2160 = vpack.c.bf16 %v2080, %v2076
    %v2161 = vpack.c.bf16 %v2081, %v2077
    %v2162 = vpack.c.bf16 %v2082, %v2078
    %v2163 = vpack.c.bf16 %v2083, %v2079
    %v2164 = vpack.c.bf16 %v2088, %v2084
    %v2165 = vpack.c.bf16 %v2089, %v2085
    %v2166 = vpack.c.bf16 %v2090, %v2086
    %v2167 = vpack.c.bf16 %v2091, %v2087
    %v2168 = vpack.c.bf16 %v2096, %v2092
    %v2169 = vpack.c.bf16 %v2097, %v2093
    %v2170 = vpack.c.bf16 %v2098, %v2094
    %v2171 = vpack.c.bf16 %v2099, %v2095
    %v2172 = vpack.c.bf16 %v2104, %v2100
    %v2173 = vpack.c.bf16 %v2105, %v2101
    %v2174 = vpack.c.bf16 %v2106, %v2102
    %v2175 = vpack.c.bf16 %v2107, %v2103
    %v2176 = vpack.c.bf16 %v2112, %v2108
    %v2177 = vpack.c.bf16 %v2113, %v2109
    %v2178 = vpack.c.bf16 %v2114, %v2110
    %v2179 = vpack.c.bf16 %v2115, %v2111
    %v2180 = vmax.bf16 %v2116, %v2120
    %v2181 = vmax.bf16 %v2180, %v2124
    %v2182 = vmax.bf16 %v2181, %v2128
    %v2183 = vmax.bf16 %v2182, %v2132
    %v2184 = vmax.bf16 %v2183, %v2136
    %v2185 = vmax.bf16 %v2184, %v2140
    %v2186 = vmax.bf16 %v2185, %v2144
    %v2187 = vunpack.i.l.bf16 %v2186
    %v2188 = vunpack.i.h.bf16 %v2186
    %v2189 = vmax.f32 %v2187, %v2188
    %v2190 = vrot.slane %v2189, 4
    %v2191 = vmax.f32 %v2189, %v2190
    %v2192 = vrot.slane %v2191, 2
    %v2193 = vmax.f32 %v2191, %v2192
    %v2194 = vrot.slane %v2193, 1
    %v2195 = vmax.f32 %v2193, %v2194
    %v2196 = vpack.i.bf16 %v2195, %v2195
    %v2197 = vmax.bf16 %v2117, %v2121
    %v2198 = vmax.bf16 %v2197, %v2125
    %v2199 = vmax.bf16 %v2198, %v2129
    %v2200 = vmax.bf16 %v2199, %v2133
    %v2201 = vmax.bf16 %v2200, %v2137
    %v2202 = vmax.bf16 %v2201, %v2141
    %v2203 = vmax.bf16 %v2202, %v2145
    %v2204 = vunpack.i.l.bf16 %v2203
    %v2205 = vunpack.i.h.bf16 %v2203
    %v2206 = vmax.f32 %v2204, %v2205
    %v2207 = vrot.slane %v2206, 4
    %v2208 = vmax.f32 %v2206, %v2207
    %v2209 = vrot.slane %v2208, 2
    %v2210 = vmax.f32 %v2208, %v2209
    %v2211 = vrot.slane %v2210, 1
    %v2212 = vmax.f32 %v2210, %v2211
    %v2213 = vpack.i.bf16 %v2212, %v2212
    %v2214 = vmax.bf16 %v2118, %v2122
    %v2215 = vmax.bf16 %v2214, %v2126
    %v2216 = vmax.bf16 %v2215, %v2130
    %v2217 = vmax.bf16 %v2216, %v2134
    %v2218 = vmax.bf16 %v2217, %v2138
    %v2219 = vmax.bf16 %v2218, %v2142
    %v2220 = vmax.bf16 %v2219, %v2146
    %v2221 = vunpack.i.l.bf16 %v2220
    %v2222 = vunpack.i.h.bf16 %v2220
    %v2223 = vmax.f32 %v2221, %v2222
    %v2224 = vrot.slane %v2223, 4
    %v2225 = vmax.f32 %v2223, %v2224
    %v2226 = vrot.slane %v2225, 2
    %v2227 = vmax.f32 %v2225, %v2226
    %v2228 = vrot.slane %v2227, 1
    %v2229 = vmax.f32 %v2227, %v2228
    %v2230 = vpack.i.bf16 %v2229, %v2229
    %v2231 = vmax.bf16 %v2119, %v2123
    %v2232 = vmax.bf16 %v2231, %v2127
    %v2233 = vmax.bf16 %v2232, %v2131
    %v2234 = vmax.bf16 %v2233, %v2135
    %v2235 = vmax.bf16 %v2234, %v2139
    %v2236 = vmax.bf16 %v2235, %v2143
    %v2237 = vmax.bf16 %v2236, %v2147
    %v2238 = vunpack.i.l.bf16 %v2237
    %v2239 = vunpack.i.h.bf16 %v2237
    %v2240 = vmax.f32 %v2238, %v2239
    %v2241 = vrot.slane %v2240, 4
    %v2242 = vmax.f32 %v2240, %v2241
    %v2243 = vrot.slane %v2242, 2
    %v2244 = vmax.f32 %v2242, %v2243
    %v2245 = vrot.slane %v2244, 1
    %v2246 = vmax.f32 %v2244, %v2245
    %v2247 = vpack.i.bf16 %v2246, %v2246
    %v2248 = vmax.bf16 %v2148, %v2152
    %v2249 = vmax.bf16 %v2248, %v2156
    %v2250 = vmax.bf16 %v2249, %v2160
    %v2251 = vmax.bf16 %v2250, %v2164
    %v2252 = vmax.bf16 %v2251, %v2168
    %v2253 = vmax.bf16 %v2252, %v2172
    %v2254 = vmax.bf16 %v2253, %v2176
    %v2255 = vunpack.i.l.bf16 %v2254
    %v2256 = vunpack.i.h.bf16 %v2254
    %v2257 = vmax.f32 %v2255, %v2256
    %v2258 = vrot.slane %v2257, 4
    %v2259 = vmax.f32 %v2257, %v2258
    %v2260 = vrot.slane %v2259, 2
    %v2261 = vmax.f32 %v2259, %v2260
    %v2262 = vrot.slane %v2261, 1
    %v2263 = vmax.f32 %v2261, %v2262
    %v2264 = vpack.i.bf16 %v2263, %v2263
    %v2265 = vmax.bf16 %v2149, %v2153
    %v2266 = vmax.bf16 %v2265, %v2157
    %v2267 = vmax.bf16 %v2266, %v2161
    %v2268 = vmax.bf16 %v2267, %v2165
    %v2269 = vmax.bf16 %v2268, %v2169
    %v2270 = vmax.bf16 %v2269, %v2173
    %v2271 = vmax.bf16 %v2270, %v2177
    %v2272 = vunpack.i.l.bf16 %v2271
    %v2273 = vunpack.i.h.bf16 %v2271
    %v2274 = vmax.f32 %v2272, %v2273
    %v2275 = vrot.slane %v2274, 4
    %v2276 = vmax.f32 %v2274, %v2275
    %v2277 = vrot.slane %v2276, 2
    %v2278 = vmax.f32 %v2276, %v2277
    %v2279 = vrot.slane %v2278, 1
    %v2280 = vmax.f32 %v2278, %v2279
    %v2281 = vpack.i.bf16 %v2280, %v2280
    %v2282 = vmax.bf16 %v2150, %v2154
    %v2283 = vmax.bf16 %v2282, %v2158
    %v2284 = vmax.bf16 %v2283, %v2162
    %v2285 = vmax.bf16 %v2284, %v2166
    %v2286 = vmax.bf16 %v2285, %v2170
    %v2287 = vmax.bf16 %v2286, %v2174
    %v2288 = vmax.bf16 %v2287, %v2178
    %v2289 = vunpack.i.l.bf16 %v2288
    %v2290 = vunpack.i.h.bf16 %v2288
    %v2291 = vmax.f32 %v2289, %v2290
    %v2292 = vrot.slane %v2291, 4
    %v2293 = vmax.f32 %v2291, %v2292
    %v2294 = vrot.slane %v2293, 2
    %v2295 = vmax.f32 %v2293, %v2294
    %v2296 = vrot.slane %v2295, 1
    %v2297 = vmax.f32 %v2295, %v2296
    %v2298 = vpack.i.bf16 %v2297, %v2297
    %v2299 = vmax.bf16 %v2151, %v2155
    %v2300 = vmax.bf16 %v2299, %v2159
    %v2301 = vmax.bf16 %v2300, %v2163
    %v2302 = vmax.bf16 %v2301, %v2167
    %v2303 = vmax.bf16 %v2302, %v2171
    %v2304 = vmax.bf16 %v2303, %v2175
    %v2305 = vmax.bf16 %v2304, %v2179
    %v2306 = vunpack.i.l.bf16 %v2305
    %v2307 = vunpack.i.h.bf16 %v2305
    %v2308 = vmax.f32 %v2306, %v2307
    %v2309 = vrot.slane %v2308, 4
    %v2310 = vmax.f32 %v2308, %v2309
    %v2311 = vrot.slane %v2310, 2
    %v2312 = vmax.f32 %v2310, %v2311
    %v2313 = vrot.slane %v2312, 1
    %v2314 = vmax.f32 %v2312, %v2313
    %v2315 = vpack.i.bf16 %v2314, %v2314
    %v2316 = vld [vmem:[#allocation8] sm:$0xff]
    %v2317 = vld [vmem:[#allocation8 + $0x8] sm:$0xff]
    %v2318 = vld [vmem:[#allocation8 + $0x10] sm:$0xff]
    %v2319 = vld [vmem:[#allocation8 + $0x18] sm:$0xff]
    %v2320 = vld [vmem:[#allocation8 + $0x20] sm:$0xff]
    %v2321 = vld [vmem:[#allocation8 + $0x28] sm:$0xff]
    %v2322 = vld [vmem:[#allocation8 + $0x30] sm:$0xff]
    %v2323 = vld [vmem:[#allocation8 + $0x38] sm:$0xff]
    %v2324 = vld [vmem:[#allocation8 + $0x40] sm:$0xff]
    %v2325 = vld [vmem:[#allocation8 + $0x48] sm:$0xff]
    %v2326 = vld [vmem:[#allocation8 + $0x50] sm:$0xff]
    %v2327 = vld [vmem:[#allocation8 + $0x58] sm:$0xff]
    %v2328 = vld [vmem:[#allocation8 + $0x60] sm:$0xff]
    %v2329 = vld [vmem:[#allocation8 + $0x68] sm:$0xff]
    %v2330 = vld [vmem:[#allocation8 + $0x70] sm:$0xff]
    %v2331 = vld [vmem:[#allocation8 + $0x78] sm:$0xff]
    %v2332 = vld [vmem:[#allocation8 + $0x80] sm:$0xff]
    %v2333 = vld [vmem:[#allocation8 + $0x88] sm:$0xff]
    %v2334 = vld [vmem:[#allocation8 + $0x90] sm:$0xff]
    %v2335 = vld [vmem:[#allocation8 + $0x98] sm:$0xff]
    %v2336 = vld [vmem:[#allocation8 + $0xa0] sm:$0xff]
    %v2337 = vld [vmem:[#allocation8 + $0xa8] sm:$0xff]
    %v2338 = vld [vmem:[#allocation8 + $0xb0] sm:$0xff]
    %v2339 = vld [vmem:[#allocation8 + $0xb8] sm:$0xff]
    %v2340 = vld [vmem:[#allocation8 + $0xc0] sm:$0xff]
    %v2341 = vld [vmem:[#allocation8 + $0xc8] sm:$0xff]
    %v2342 = vld [vmem:[#allocation8 + $0xd0] sm:$0xff]
    %v2343 = vld [vmem:[#allocation8 + $0xd8] sm:$0xff]
    %v2344 = vld [vmem:[#allocation8 + $0xe0] sm:$0xff]
    %v2345 = vld [vmem:[#allocation8 + $0xe8] sm:$0xff]
    %v2346 = vld [vmem:[#allocation8 + $0xf0] sm:$0xff]
    %v2347 = vld [vmem:[#allocation8 + $0xf8] sm:$0xff]
    %v2348 = vld [vmem:[#allocation8 + $0x100] sm:$0xff]
    %v2349 = vld [vmem:[#allocation8 + $0x108] sm:$0xff]
    %v2350 = vld [vmem:[#allocation8 + $0x110] sm:$0xff]
    %v2351 = vld [vmem:[#allocation8 + $0x118] sm:$0xff]
    %v2352 = vld [vmem:[#allocation8 + $0x120] sm:$0xff]
    %v2353 = vld [vmem:[#allocation8 + $0x128] sm:$0xff]
    %v2354 = vld [vmem:[#allocation8 + $0x130] sm:$0xff]
    %v2355 = vld [vmem:[#allocation8 + $0x138] sm:$0xff]
    %v2356 = vld [vmem:[#allocation8 + $0x140] sm:$0xff]
    %v2357 = vld [vmem:[#allocation8 + $0x148] sm:$0xff]
    %v2358 = vld [vmem:[#allocation8 + $0x150] sm:$0xff]
    %v2359 = vld [vmem:[#allocation8 + $0x158] sm:$0xff]
    %v2360 = vld [vmem:[#allocation8 + $0x160] sm:$0xff]
    %v2361 = vld [vmem:[#allocation8 + $0x168] sm:$0xff]
    %v2362 = vld [vmem:[#allocation8 + $0x170] sm:$0xff]
    %v2363 = vld [vmem:[#allocation8 + $0x178] sm:$0xff]
    %v2364 = vld [vmem:[#allocation8 + $0x180] sm:$0xff]
    %v2365 = vld [vmem:[#allocation8 + $0x188] sm:$0xff]
    %v2366 = vld [vmem:[#allocation8 + $0x190] sm:$0xff]
    %v2367 = vld [vmem:[#allocation8 + $0x198] sm:$0xff]
    %v2368 = vld [vmem:[#allocation8 + $0x1a0] sm:$0xff]
    %v2369 = vld [vmem:[#allocation8 + $0x1a8] sm:$0xff]
    %v2370 = vld [vmem:[#allocation8 + $0x1b0] sm:$0xff]
    %v2371 = vld [vmem:[#allocation8 + $0x1b8] sm:$0xff]
    %v2372 = vld [vmem:[#allocation8 + $0x1c0] sm:$0xff]
    %v2373 = vld [vmem:[#allocation8 + $0x1c8] sm:$0xff]
    %v2374 = vld [vmem:[#allocation8 + $0x1d0] sm:$0xff]
    %v2375 = vld [vmem:[#allocation8 + $0x1d8] sm:$0xff]
    %v2376 = vld [vmem:[#allocation8 + $0x1e0] sm:$0xff]
    %v2377 = vld [vmem:[#allocation8 + $0x1e8] sm:$0xff]
    %v2378 = vld [vmem:[#allocation8 + $0x1f0] sm:$0xff]
    %v2379 = vld [vmem:[#allocation8 + $0x1f8] sm:$0xff]
    %v2380 = vld [vmem:[#allocation8 + $0x200] sm:$0xff]
    %v2381 = vld [vmem:[#allocation8 + $0x208] sm:$0xff]
    %v2382 = vld [vmem:[#allocation8 + $0x210] sm:$0xff]
    %v2383 = vld [vmem:[#allocation8 + $0x218] sm:$0xff]
    %v2384 = vld [vmem:[#allocation8 + $0x220] sm:$0xff]
    %v2385 = vld [vmem:[#allocation8 + $0x228] sm:$0xff]
    %v2386 = vld [vmem:[#allocation8 + $0x230] sm:$0xff]
    %v2387 = vld [vmem:[#allocation8 + $0x238] sm:$0xff]
    %v2388 = vld [vmem:[#allocation8 + $0x240] sm:$0xff]
    %v2389 = vld [vmem:[#allocation8 + $0x248] sm:$0xff]
    %v2390 = vld [vmem:[#allocation8 + $0x250] sm:$0xff]
    %v2391 = vld [vmem:[#allocation8 + $0x258] sm:$0xff]
    %v2392 = vld [vmem:[#allocation8 + $0x260] sm:$0xff]
    %v2393 = vld [vmem:[#allocation8 + $0x268] sm:$0xff]
    %v2394 = vld [vmem:[#allocation8 + $0x270] sm:$0xff]
    %v2395 = vld [vmem:[#allocation8 + $0x278] sm:$0xff]
    %v2396 = vld [vmem:[#allocation8 + $0x280] sm:$0xff]
    %v2397 = vld [vmem:[#allocation8 + $0x288] sm:$0xff]
    %v2398 = vld [vmem:[#allocation8 + $0x290] sm:$0xff]
    %v2399 = vld [vmem:[#allocation8 + $0x298] sm:$0xff]
    %v2400 = vld [vmem:[#allocation8 + $0x2a0] sm:$0xff]
    %v2401 = vld [vmem:[#allocation8 + $0x2a8] sm:$0xff]
    %v2402 = vld [vmem:[#allocation8 + $0x2b0] sm:$0xff]
    %v2403 = vld [vmem:[#allocation8 + $0x2b8] sm:$0xff]
    %v2404 = vld [vmem:[#allocation8 + $0x2c0] sm:$0xff]
    %v2405 = vld [vmem:[#allocation8 + $0x2c8] sm:$0xff]
    %v2406 = vld [vmem:[#allocation8 + $0x2d0] sm:$0xff]
    %v2407 = vld [vmem:[#allocation8 + $0x2d8] sm:$0xff]
    %v2408 = vld [vmem:[#allocation8 + $0x2e0] sm:$0xff]
    %v2409 = vld [vmem:[#allocation8 + $0x2e8] sm:$0xff]
    %v2410 = vld [vmem:[#allocation8 + $0x2f0] sm:$0xff]
    %v2411 = vld [vmem:[#allocation8 + $0x2f8] sm:$0xff]
    %v2412 = vld [vmem:[#allocation8 + $0x300] sm:$0xff]
    %v2413 = vld [vmem:[#allocation8 + $0x308] sm:$0xff]
    %v2414 = vld [vmem:[#allocation8 + $0x310] sm:$0xff]
    %v2415 = vld [vmem:[#allocation8 + $0x318] sm:$0xff]
    %v2416 = vld [vmem:[#allocation8 + $0x320] sm:$0xff]
    %v2417 = vld [vmem:[#allocation8 + $0x328] sm:$0xff]
    %v2418 = vld [vmem:[#allocation8 + $0x330] sm:$0xff]
    %v2419 = vld [vmem:[#allocation8 + $0x338] sm:$0xff]
    %v2420 = vld [vmem:[#allocation8 + $0x340] sm:$0xff]
    %v2421 = vld [vmem:[#allocation8 + $0x348] sm:$0xff]
    %v2422 = vld [vmem:[#allocation8 + $0x350] sm:$0xff]
    %v2423 = vld [vmem:[#allocation8 + $0x358] sm:$0xff]
    %v2424 = vld [vmem:[#allocation8 + $0x360] sm:$0xff]
    %v2425 = vld [vmem:[#allocation8 + $0x368] sm:$0xff]
    %v2426 = vld [vmem:[#allocation8 + $0x370] sm:$0xff]
    %v2427 = vld [vmem:[#allocation8 + $0x378] sm:$0xff]
    %v2428 = vld [vmem:[#allocation8 + $0x380] sm:$0xff]
    %v2429 = vld [vmem:[#allocation8 + $0x388] sm:$0xff]
    %v2430 = vld [vmem:[#allocation8 + $0x390] sm:$0xff]
    %v2431 = vld [vmem:[#allocation8 + $0x398] sm:$0xff]
    %v2432 = vld [vmem:[#allocation8 + $0x3a0] sm:$0xff]
    %v2433 = vld [vmem:[#allocation8 + $0x3a8] sm:$0xff]
    %v2434 = vld [vmem:[#allocation8 + $0x3b0] sm:$0xff]
    %v2435 = vld [vmem:[#allocation8 + $0x3b8] sm:$0xff]
    %v2436 = vld [vmem:[#allocation8 + $0x3c0] sm:$0xff]
    %v2437 = vld [vmem:[#allocation8 + $0x3c8] sm:$0xff]
    %v2438 = vld [vmem:[#allocation8 + $0x3d0] sm:$0xff]
    %v2439 = vld [vmem:[#allocation8 + $0x3d8] sm:$0xff]
    %v2440 = vld [vmem:[#allocation8 + $0x3e0] sm:$0xff]
    %v2441 = vld [vmem:[#allocation8 + $0x3e8] sm:$0xff]
    %v2442 = vld [vmem:[#allocation8 + $0x3f0] sm:$0xff]
    %v2443 = vld [vmem:[#allocation8 + $0x3f8] sm:$0xff]
    %v2444 = vld [vmem:[%s9] sm:$0xff]
    %v2453 = vunpack.c.l.b16 %v2196
    %v2454 = vunpack.c.l.b16 %v2213
    %v2455 = vunpack.c.l.b16 %v2230
    %v2456 = vunpack.c.l.b16 %v2247
    %v2457 = vunpack.c.l.b16 %v2264
    %v2458 = vunpack.c.l.b16 %v2281
    %v2459 = vunpack.c.l.b16 %v2298
    %v2460 = vunpack.c.l.b16 %v2315
    %vm2461 = vcmask 1041409
    %v2462 = vsel %vm2461, %v2457, %v2453
    %v2463 = vsel %vm2461, %v2458, %v2454
    %v2464 = vsel %vm2461, %v2459, %v2455
    %v2465 = vsel %vm2461, %v2460, %v2456
    %v2466 = vpack.c.b16 %v2462, %v2462
    %v2467 = vpack.c.b16 %v2463, %v2463
    %v2468 = vpack.c.b16 %v2464, %v2464
    %v2469 = vpack.c.b16 %v2465, %v2465
    %v2602 = vunpack.c.l.b16 %v2316
    %v2603 = vunpack.c.h.b16 %v2316
    %v2604 = vunpack.c.l.b16 %v2317
    %v2605 = vunpack.c.h.b16 %v2317
    %v2606 = vunpack.c.l.b16 %v2318
    %v2607 = vunpack.c.h.b16 %v2318
    %v2608 = vunpack.c.l.b16 %v2319
    %v2609 = vunpack.c.h.b16 %v2319
    %v2610 = vunpack.c.l.b16 %v2320
    %v2611 = vunpack.c.h.b16 %v2320
    %v2612 = vunpack.c.l.b16 %v2321
    %v2613 = vunpack.c.h.b16 %v2321
    %v2614 = vunpack.c.l.b16 %v2322
    %v2615 = vunpack.c.h.b16 %v2322
    %v2616 = vunpack.c.l.b16 %v2323
    %v2617 = vunpack.c.h.b16 %v2323
    %v2618 = vunpack.c.l.b16 %v2324
    %v2619 = vunpack.c.h.b16 %v2324
    %v2620 = vunpack.c.l.b16 %v2325
    %v2621 = vunpack.c.h.b16 %v2325
    %v2622 = vunpack.c.l.b16 %v2326
    %v2623 = vunpack.c.h.b16 %v2326
    %v2624 = vunpack.c.l.b16 %v2327
    %v2625 = vunpack.c.h.b16 %v2327
    %v2626 = vunpack.c.l.b16 %v2328
    %v2627 = vunpack.c.h.b16 %v2328
    %v2628 = vunpack.c.l.b16 %v2329
    %v2629 = vunpack.c.h.b16 %v2329
    %v2630 = vunpack.c.l.b16 %v2330
    %v2631 = vunpack.c.h.b16 %v2330
    %v2632 = vunpack.c.l.b16 %v2331
    %v2633 = vunpack.c.h.b16 %v2331
    %v2634 = vunpack.c.l.b16 %v2332
    %v2635 = vunpack.c.h.b16 %v2332
    %v2636 = vunpack.c.l.b16 %v2333
    %v2637 = vunpack.c.h.b16 %v2333
    %v2638 = vunpack.c.l.b16 %v2334
    %v2639 = vunpack.c.h.b16 %v2334
    %v2640 = vunpack.c.l.b16 %v2335
    %v2641 = vunpack.c.h.b16 %v2335
    %v2642 = vunpack.c.l.b16 %v2336
    %v2643 = vunpack.c.h.b16 %v2336
    %v2644 = vunpack.c.l.b16 %v2337
    %v2645 = vunpack.c.h.b16 %v2337
    %v2646 = vunpack.c.l.b16 %v2338
    %v2647 = vunpack.c.h.b16 %v2338
    %v2648 = vunpack.c.l.b16 %v2339
    %v2649 = vunpack.c.h.b16 %v2339
    %v2650 = vunpack.c.l.b16 %v2340
    %v2651 = vunpack.c.h.b16 %v2340
    %v2652 = vunpack.c.l.b16 %v2341
    %v2653 = vunpack.c.h.b16 %v2341
    %v2654 = vunpack.c.l.b16 %v2342
    %v2655 = vunpack.c.h.b16 %v2342
    %v2656 = vunpack.c.l.b16 %v2343
    %v2657 = vunpack.c.h.b16 %v2343
    %v2658 = vunpack.c.l.b16 %v2344
    %v2659 = vunpack.c.h.b16 %v2344
    %v2660 = vunpack.c.l.b16 %v2345
    %v2661 = vunpack.c.h.b16 %v2345
    %v2662 = vunpack.c.l.b16 %v2346
    %v2663 = vunpack.c.h.b16 %v2346
    %v2664 = vunpack.c.l.b16 %v2347
    %v2665 = vunpack.c.h.b16 %v2347
    %v2666 = vunpack.c.l.b16 %v2348
    %v2667 = vunpack.c.h.b16 %v2348
    %v2668 = vunpack.c.l.b16 %v2349
    %v2669 = vunpack.c.h.b16 %v2349
    %v2670 = vunpack.c.l.b16 %v2350
    %v2671 = vunpack.c.h.b16 %v2350
    %v2672 = vunpack.c.l.b16 %v2351
    %v2673 = vunpack.c.h.b16 %v2351
    %v2674 = vunpack.c.l.b16 %v2352
    %v2675 = vunpack.c.h.b16 %v2352
    %v2676 = vunpack.c.l.b16 %v2353
    %v2677 = vunpack.c.h.b16 %v2353
    %v2678 = vunpack.c.l.b16 %v2354
    %v2679 = vunpack.c.h.b16 %v2354
    %v2680 = vunpack.c.l.b16 %v2355
    %v2681 = vunpack.c.h.b16 %v2355
    %v2682 = vunpack.c.l.b16 %v2356
    %v2683 = vunpack.c.h.b16 %v2356
    %v2684 = vunpack.c.l.b16 %v2357
    %v2685 = vunpack.c.h.b16 %v2357
    %v2686 = vunpack.c.l.b16 %v2358
    %v2687 = vunpack.c.h.b16 %v2358
    %v2688 = vunpack.c.l.b16 %v2359
    %v2689 = vunpack.c.h.b16 %v2359
    %v2690 = vunpack.c.l.b16 %v2360
    %v2691 = vunpack.c.h.b16 %v2360
    %v2692 = vunpack.c.l.b16 %v2361
    %v2693 = vunpack.c.h.b16 %v2361
    %v2694 = vunpack.c.l.b16 %v2362
    %v2695 = vunpack.c.h.b16 %v2362
    %v2696 = vunpack.c.l.b16 %v2363
    %v2697 = vunpack.c.h.b16 %v2363
    %v2698 = vunpack.c.l.b16 %v2364
    %v2699 = vunpack.c.h.b16 %v2364
    %v2700 = vunpack.c.l.b16 %v2365
    %v2701 = vunpack.c.h.b16 %v2365
    %v2702 = vunpack.c.l.b16 %v2366
    %v2703 = vunpack.c.h.b16 %v2366
    %v2704 = vunpack.c.l.b16 %v2367
    %v2705 = vunpack.c.h.b16 %v2367
    %v2706 = vunpack.c.l.b16 %v2368
    %v2707 = vunpack.c.h.b16 %v2368
    %v2708 = vunpack.c.l.b16 %v2369
    %v2709 = vunpack.c.h.b16 %v2369
    %v2710 = vunpack.c.l.b16 %v2370
    %v2711 = vunpack.c.h.b16 %v2370
    %v2712 = vunpack.c.l.b16 %v2371
    %v2713 = vunpack.c.h.b16 %v2371
    %v2714 = vunpack.c.l.b16 %v2372
    %v2715 = vunpack.c.h.b16 %v2372
    %v2716 = vunpack.c.l.b16 %v2373
    %v2717 = vunpack.c.h.b16 %v2373
    %v2718 = vunpack.c.l.b16 %v2374
    %v2719 = vunpack.c.h.b16 %v2374
    %v2720 = vunpack.c.l.b16 %v2375
    %v2721 = vunpack.c.h.b16 %v2375
    %v2722 = vunpack.c.l.b16 %v2376
    %v2723 = vunpack.c.h.b16 %v2376
    %v2724 = vunpack.c.l.b16 %v2377
    %v2725 = vunpack.c.h.b16 %v2377
    %v2726 = vunpack.c.l.b16 %v2378
    %v2727 = vunpack.c.h.b16 %v2378
    %v2728 = vunpack.c.l.b16 %v2379
    %v2729 = vunpack.c.h.b16 %v2379
    %v2730 = vunpack.c.l.b16 %v2380
    %v2731 = vunpack.c.h.b16 %v2380
    %v2732 = vunpack.c.l.b16 %v2381
    %v2733 = vunpack.c.h.b16 %v2381
    %v2734 = vunpack.c.l.b16 %v2382
    %v2735 = vunpack.c.h.b16 %v2382
    %v2736 = vunpack.c.l.b16 %v2383
    %v2737 = vunpack.c.h.b16 %v2383
    %v2738 = vunpack.c.l.b16 %v2384
    %v2739 = vunpack.c.h.b16 %v2384
    %v2740 = vunpack.c.l.b16 %v2385
    %v2741 = vunpack.c.h.b16 %v2385
    %v2742 = vunpack.c.l.b16 %v2386
    %v2743 = vunpack.c.h.b16 %v2386
    %v2744 = vunpack.c.l.b16 %v2387
    %v2745 = vunpack.c.h.b16 %v2387
    %v2746 = vunpack.c.l.b16 %v2388
    %v2747 = vunpack.c.h.b16 %v2388
    %v2748 = vunpack.c.l.b16 %v2389
    %v2749 = vunpack.c.h.b16 %v2389
    %v2750 = vunpack.c.l.b16 %v2390
    %v2751 = vunpack.c.h.b16 %v2390
    %v2752 = vunpack.c.l.b16 %v2391
    %v2753 = vunpack.c.h.b16 %v2391
    %v2754 = vunpack.c.l.b16 %v2392
    %v2755 = vunpack.c.h.b16 %v2392
    %v2756 = vunpack.c.l.b16 %v2393
    %v2757 = vunpack.c.h.b16 %v2393
    %v2758 = vunpack.c.l.b16 %v2394
    %v2759 = vunpack.c.h.b16 %v2394
    %v2760 = vunpack.c.l.b16 %v2395
    %v2761 = vunpack.c.h.b16 %v2395
    %v2762 = vunpack.c.l.b16 %v2396
    %v2763 = vunpack.c.h.b16 %v2396
    %v2764 = vunpack.c.l.b16 %v2397
    %v2765 = vunpack.c.h.b16 %v2397
    %v2766 = vunpack.c.l.b16 %v2398
    %v2767 = vunpack.c.h.b16 %v2398
    %v2768 = vunpack.c.l.b16 %v2399
    %v2769 = vunpack.c.h.b16 %v2399
    %v2770 = vunpack.c.l.b16 %v2400
    %v2771 = vunpack.c.h.b16 %v2400
    %v2772 = vunpack.c.l.b16 %v2401
    %v2773 = vunpack.c.h.b16 %v2401
    %v2774 = vunpack.c.l.b16 %v2402
    %v2775 = vunpack.c.h.b16 %v2402
    %v2776 = vunpack.c.l.b16 %v2403
    %v2777 = vunpack.c.h.b16 %v2403
    %v2778 = vunpack.c.l.b16 %v2404
    %v2779 = vunpack.c.h.b16 %v2404
    %v2780 = vunpack.c.l.b16 %v2405
    %v2781 = vunpack.c.h.b16 %v2405
    %v2782 = vunpack.c.l.b16 %v2406
    %v2783 = vunpack.c.h.b16 %v2406
    %v2784 = vunpack.c.l.b16 %v2407
    %v2785 = vunpack.c.h.b16 %v2407
    %v2786 = vunpack.c.l.b16 %v2408
    %v2787 = vunpack.c.h.b16 %v2408
    %v2788 = vunpack.c.l.b16 %v2409
    %v2789 = vunpack.c.h.b16 %v2409
    %v2790 = vunpack.c.l.b16 %v2410
    %v2791 = vunpack.c.h.b16 %v2410
    %v2792 = vunpack.c.l.b16 %v2411
    %v2793 = vunpack.c.h.b16 %v2411
    %v2794 = vunpack.c.l.b16 %v2412
    %v2795 = vunpack.c.h.b16 %v2412
    %v2796 = vunpack.c.l.b16 %v2413
    %v2797 = vunpack.c.h.b16 %v2413
    %v2798 = vunpack.c.l.b16 %v2414
    %v2799 = vunpack.c.h.b16 %v2414
    %v2800 = vunpack.c.l.b16 %v2415
    %v2801 = vunpack.c.h.b16 %v2415
    %v2802 = vunpack.c.l.b16 %v2416
    %v2803 = vunpack.c.h.b16 %v2416
    %v2804 = vunpack.c.l.b16 %v2417
    %v2805 = vunpack.c.h.b16 %v2417
    %v2806 = vunpack.c.l.b16 %v2418
    %v2807 = vunpack.c.h.b16 %v2418
    %v2808 = vunpack.c.l.b16 %v2419
    %v2809 = vunpack.c.h.b16 %v2419
    %v2810 = vunpack.c.l.b16 %v2420
    %v2811 = vunpack.c.h.b16 %v2420
    %v2812 = vunpack.c.l.b16 %v2421
    %v2813 = vunpack.c.h.b16 %v2421
    %v2814 = vunpack.c.l.b16 %v2422
    %v2815 = vunpack.c.h.b16 %v2422
    %v2816 = vunpack.c.l.b16 %v2423
    %v2817 = vunpack.c.h.b16 %v2423
    %v2818 = vunpack.c.l.b16 %v2424
    %v2819 = vunpack.c.h.b16 %v2424
    %v2820 = vunpack.c.l.b16 %v2425
    %v2821 = vunpack.c.h.b16 %v2425
    %v2822 = vunpack.c.l.b16 %v2426
    %v2823 = vunpack.c.h.b16 %v2426
    %v2824 = vunpack.c.l.b16 %v2427
    %v2825 = vunpack.c.h.b16 %v2427
    %v2826 = vunpack.c.l.b16 %v2428
    %v2827 = vunpack.c.h.b16 %v2428
    %v2828 = vunpack.c.l.b16 %v2429
    %v2829 = vunpack.c.h.b16 %v2429
    %v2830 = vunpack.c.l.b16 %v2430
    %v2831 = vunpack.c.h.b16 %v2430
    %v2832 = vunpack.c.l.b16 %v2431
    %v2833 = vunpack.c.h.b16 %v2431
    %v2834 = vunpack.c.l.b16 %v2432
    %v2835 = vunpack.c.h.b16 %v2432
    %v2836 = vunpack.c.l.b16 %v2433
    %v2837 = vunpack.c.h.b16 %v2433
    %v2838 = vunpack.c.l.b16 %v2434
    %v2839 = vunpack.c.h.b16 %v2434
    %v2840 = vunpack.c.l.b16 %v2435
    %v2841 = vunpack.c.h.b16 %v2435
    %v2842 = vunpack.c.l.b16 %v2436
    %v2843 = vunpack.c.h.b16 %v2436
    %v2844 = vunpack.c.l.b16 %v2437
    %v2845 = vunpack.c.h.b16 %v2437
    %v2846 = vunpack.c.l.b16 %v2438
    %v2847 = vunpack.c.h.b16 %v2438
    %v2848 = vunpack.c.l.b16 %v2439
    %v2849 = vunpack.c.h.b16 %v2439
    %v2850 = vunpack.c.l.b16 %v2440
    %v2851 = vunpack.c.h.b16 %v2440
    %v2852 = vunpack.c.l.b16 %v2441
    %v2853 = vunpack.c.h.b16 %v2441
    %v2854 = vunpack.c.l.b16 %v2442
    %v2855 = vunpack.c.h.b16 %v2442
    %v2856 = vunpack.c.l.b16 %v2443
    %v2857 = vunpack.c.h.b16 %v2443
    %v2858 = vpack.c.b16 %v2606, %v2602
    %v2859 = vpack.c.b16 %v2607, %v2603
    %v2860 = vpack.c.b16 %v2608, %v2604
    %v2861 = vpack.c.b16 %v2609, %v2605
    %v2862 = vpack.c.b16 %v2614, %v2610
    %v2863 = vpack.c.b16 %v2615, %v2611
    %v2864 = vpack.c.b16 %v2616, %v2612
    %v2865 = vpack.c.b16 %v2617, %v2613
    %v2866 = vpack.c.b16 %v2622, %v2618
    %v2867 = vpack.c.b16 %v2623, %v2619
    %v2868 = vpack.c.b16 %v2624, %v2620
    %v2869 = vpack.c.b16 %v2625, %v2621
    %v2870 = vpack.c.b16 %v2630, %v2626
    %v2871 = vpack.c.b16 %v2631, %v2627
    %v2872 = vpack.c.b16 %v2632, %v2628
    %v2873 = vpack.c.b16 %v2633, %v2629
    %v2874 = vpack.c.b16 %v2638, %v2634
    %v2875 = vpack.c.b16 %v2639, %v2635
    %v2876 = vpack.c.b16 %v2640, %v2636
    %v2877 = vpack.c.b16 %v2641, %v2637
    %v2878 = vpack.c.b16 %v2646, %v2642
    %v2879 = vpack.c.b16 %v2647, %v2643
    %v2880 = vpack.c.b16 %v2648, %v2644
    %v2881 = vpack.c.b16 %v2649, %v2645
    %v2882 = vpack.c.b16 %v2654, %v2650
    %v2883 = vpack.c.b16 %v2655, %v2651
    %v2884 = vpack.c.b16 %v2656, %v2652
    %v2885 = vpack.c.b16 %v2657, %v2653
    %v2886 = vpack.c.b16 %v2662, %v2658
    %v2887 = vpack.c.b16 %v2663, %v2659
    %v2888 = vpack.c.b16 %v2664, %v2660
    %v2889 = vpack.c.b16 %v2665, %v2661
    %v2890 = vpack.c.b16 %v2670, %v2666
    %v2891 = vpack.c.b16 %v2671, %v2667
    %v2892 = vpack.c.b16 %v2672, %v2668
    %v2893 = vpack.c.b16 %v2673, %v2669
    %v2894 = vpack.c.b16 %v2678, %v2674
    %v2895 = vpack.c.b16 %v2679, %v2675
    %v2896 = vpack.c.b16 %v2680, %v2676
    %v2897 = vpack.c.b16 %v2681, %v2677
    %v2898 = vpack.c.b16 %v2686, %v2682
    %v2899 = vpack.c.b16 %v2687, %v2683
    %v2900 = vpack.c.b16 %v2688, %v2684
    %v2901 = vpack.c.b16 %v2689, %v2685
    %v2902 = vpack.c.b16 %v2694, %v2690
    %v2903 = vpack.c.b16 %v2695, %v2691
    %v2904 = vpack.c.b16 %v2696, %v2692
    %v2905 = vpack.c.b16 %v2697, %v2693
    %v2906 = vpack.c.b16 %v2702, %v2698
    %v2907 = vpack.c.b16 %v2703, %v2699
    %v2908 = vpack.c.b16 %v2704, %v2700
    %v2909 = vpack.c.b16 %v2705, %v2701
    %v2910 = vpack.c.b16 %v2710, %v2706
    %v2911 = vpack.c.b16 %v2711, %v2707
    %v2912 = vpack.c.b16 %v2712, %v2708
    %v2913 = vpack.c.b16 %v2713, %v2709
    %v2914 = vpack.c.b16 %v2718, %v2714
    %v2915 = vpack.c.b16 %v2719, %v2715
    %v2916 = vpack.c.b16 %v2720, %v2716
    %v2917 = vpack.c.b16 %v2721, %v2717
    %v2918 = vpack.c.b16 %v2726, %v2722
    %v2919 = vpack.c.b16 %v2727, %v2723
    %v2920 = vpack.c.b16 %v2728, %v2724
    %v2921 = vpack.c.b16 %v2729, %v2725
    %v2922 = vpack.c.b16 %v2734, %v2730
    %v2923 = vpack.c.b16 %v2735, %v2731
    %v2924 = vpack.c.b16 %v2736, %v2732
    %v2925 = vpack.c.b16 %v2737, %v2733
    %v2926 = vpack.c.b16 %v2742, %v2738
    %v2927 = vpack.c.b16 %v2743, %v2739
    %v2928 = vpack.c.b16 %v2744, %v2740
    %v2929 = vpack.c.b16 %v2745, %v2741
    %v2930 = vpack.c.b16 %v2750, %v2746
    %v2931 = vpack.c.b16 %v2751, %v2747
    %v2932 = vpack.c.b16 %v2752, %v2748
    %v2933 = vpack.c.b16 %v2753, %v2749
    %v2934 = vpack.c.b16 %v2758, %v2754
    %v2935 = vpack.c.b16 %v2759, %v2755
    %v2936 = vpack.c.b16 %v2760, %v2756
    %v2937 = vpack.c.b16 %v2761, %v2757
    %v2938 = vpack.c.b16 %v2766, %v2762
    %v2939 = vpack.c.b16 %v2767, %v2763
    %v2940 = vpack.c.b16 %v2768, %v2764
    %v2941 = vpack.c.b16 %v2769, %v2765
    %v2942 = vpack.c.b16 %v2774, %v2770
    %v2943 = vpack.c.b16 %v2775, %v2771
    %v2944 = vpack.c.b16 %v2776, %v2772
    %v2945 = vpack.c.b16 %v2777, %v2773
    %v2946 = vpack.c.b16 %v2782, %v2778
    %v2947 = vpack.c.b16 %v2783, %v2779
    %v2948 = vpack.c.b16 %v2784, %v2780
    %v2949 = vpack.c.b16 %v2785, %v2781
    %v2950 = vpack.c.b16 %v2790, %v2786
    %v2951 = vpack.c.b16 %v2791, %v2787
    %v2952 = vpack.c.b16 %v2792, %v2788
    %v2953 = vpack.c.b16 %v2793, %v2789
    %v2954 = vpack.c.b16 %v2798, %v2794
    %v2955 = vpack.c.b16 %v2799, %v2795
    %v2956 = vpack.c.b16 %v2800, %v2796
    %v2957 = vpack.c.b16 %v2801, %v2797
    %v2958 = vpack.c.b16 %v2806, %v2802
    %v2959 = vpack.c.b16 %v2807, %v2803
    %v2960 = vpack.c.b16 %v2808, %v2804
    %v2961 = vpack.c.b16 %v2809, %v2805
    %v2962 = vpack.c.b16 %v2814, %v2810
    %v2963 = vpack.c.b16 %v2815, %v2811
    %v2964 = vpack.c.b16 %v2816, %v2812
    %v2965 = vpack.c.b16 %v2817, %v2813
    %v2966 = vpack.c.b16 %v2822, %v2818
    %v2967 = vpack.c.b16 %v2823, %v2819
    %v2968 = vpack.c.b16 %v2824, %v2820
    %v2969 = vpack.c.b16 %v2825, %v2821
    %v2970 = vpack.c.b16 %v2830, %v2826
    %v2971 = vpack.c.b16 %v2831, %v2827
    %v2972 = vpack.c.b16 %v2832, %v2828
    %v2973 = vpack.c.b16 %v2833, %v2829
    %v2974 = vpack.c.b16 %v2838, %v2834
    %v2975 = vpack.c.b16 %v2839, %v2835
    %v2976 = vpack.c.b16 %v2840, %v2836
    %v2977 = vpack.c.b16 %v2841, %v2837
    %v2978 = vpack.c.b16 %v2846, %v2842
    %v2979 = vpack.c.b16 %v2847, %v2843
    %v2980 = vpack.c.b16 %v2848, %v2844
    %v2981 = vpack.c.b16 %v2849, %v2845
    %v2982 = vpack.c.b16 %v2854, %v2850
    %v2983 = vpack.c.b16 %v2855, %v2851
    %v2984 = vpack.c.b16 %v2856, %v2852
    %v2985 = vpack.c.b16 %v2857, %v2853
    %v3115 = vcombine.high %v2444, %v2444
    %v3117 = vunpack.c.l.s4 1983009808
    %v3118 = vunpack.c.0.s8 %v3117
    %v3119 = vlaneseq
    %v3120 = vshrl.u32 %v3119, 7
    %v3121 = vsub.s32 %v3118, %v3120
    %v3122 = vrot.slane %v2444, %v3121
    %v3124 = vunpack.c.l.s4 1983009808
    %v3125 = vunpack.c.0.s8 %v3124
    %v3126 = vlaneseq
    %v3127 = vshrl.u32 %v3126, 7
    %v3128 = vsub.s32 %v3125, %v3127
    %v3129 = vrot.slane %v3115, %v3128
    %v3130 = vcombine.high %v3122, %v3122
    %v3131 = vcombine.high %v3129, %v3129
    %3136 = vmatprep.subr.bf16.mxu0 %v2859
    %3137 = vmatpush1.bf16.msra.mxu0 %v2858
    %3138 = vmatprep.subr.bf16.mxu0 %v2863
    %3139 = vmatpush1.bf16.msra.mxu0 %v2862
    %3140 = vmatprep.subr.bf16.mxu0 %v2867
    %3141 = vmatpush1.bf16.msra.mxu0 %v2866
    %3142 = vmatprep.subr.bf16.mxu0 %v2871
    %3143 = vmatpush1.bf16.msra.mxu0 %v2870
    %3144 = vmatprep.subr.bf16.mxu0 %v2875
    %3145 = vmatpush1.bf16.msra.mxu0 %v2874
    %3146 = vmatprep.subr.bf16.mxu0 %v2879
    %3147 = vmatpush1.bf16.msra.mxu0 %v2878
    %3148 = vmatprep.subr.bf16.mxu0 %v2883
    %3149 = vmatpush1.bf16.msra.mxu0 %v2882
    %3150 = vmatprep.subr.bf16.mxu0 %v2887
    %3151 = vmatpush1.bf16.msra.mxu0 %v2886
    %3152 = vmatprep.subr.bf16.mxu0 %v2891
    %3153 = vmatpush1.bf16.msra.mxu0 %v2890
    %3154 = vmatprep.subr.bf16.mxu0 %v2895
    %3155 = vmatpush1.bf16.msra.mxu0 %v2894
    %3156 = vmatprep.subr.bf16.mxu0 %v2899
    %3157 = vmatpush1.bf16.msra.mxu0 %v2898
    %3158 = vmatprep.subr.bf16.mxu0 %v2903
    %3159 = vmatpush1.bf16.msra.mxu0 %v2902
    %3160 = vmatprep.subr.bf16.mxu0 %v2907
    %3161 = vmatpush1.bf16.msra.mxu0 %v2906
    %3162 = vmatprep.subr.bf16.mxu0 %v2911
    %3163 = vmatpush1.bf16.msra.mxu0 %v2910
    %3164 = vmatprep.subr.bf16.mxu0 %v2915
    %3165 = vmatpush1.bf16.msra.mxu0 %v2914
    %3166 = vmatprep.subr.bf16.mxu0 %v2919
    %3167 = vmatpush1.bf16.msra.mxu0 %v2918
    %3168 = vmatprep.mubr.bf16.mxu0 %v2467
    %3169 = vmatmul.mubr.bf16.gmra.mrb[0].mxu0 %v2466
    %v3170 = vpop.f32.mrb[0].mxu0
    %v3171 = vadd.f32 %v3122, %v3170
    %v3172 = vpop.f32.mrb[0].mxu0
    %v3173 = vadd.f32 %v3130, %v3172
    %v3174 = vpop.f32.mrb[0].mxu0
    %v3175 = vpop.f32.mrb[0].mxu0
    %3176 = vdwg.mxu0
    %3177 = vmatprep.subr.bf16.mxu0 %v2923
    %3178 = vmatpush1.bf16.msra.mxu0 %v2922
    %3179 = vmatprep.subr.bf16.mxu0 %v2927
    %3180 = vmatpush1.bf16.msra.mxu0 %v2926
    %3181 = vmatprep.subr.bf16.mxu0 %v2931
    %3182 = vmatpush1.bf16.msra.mxu0 %v2930
    %3183 = vmatprep.subr.bf16.mxu0 %v2935
    %3184 = vmatpush1.bf16.msra.mxu0 %v2934
    %3185 = vmatprep.subr.bf16.mxu0 %v2939
    %3186 = vmatpush1.bf16.msra.mxu0 %v2938
    %3187 = vmatprep.subr.bf16.mxu0 %v2943
    %3188 = vmatpush1.bf16.msra.mxu0 %v2942
    %3189 = vmatprep.subr.bf16.mxu0 %v2947
    %3190 = vmatpush1.bf16.msra.mxu0 %v2946
    %3191 = vmatprep.subr.bf16.mxu0 %v2951
    %3192 = vmatpush1.bf16.msra.mxu0 %v2950
    %3193 = vmatprep.subr.bf16.mxu0 %v2955
    %3194 = vmatpush1.bf16.msra.mxu0 %v2954
    %3195 = vmatprep.subr.bf16.mxu0 %v2959
    %3196 = vmatpush1.bf16.msra.mxu0 %v2958
    %3197 = vmatprep.subr.bf16.mxu0 %v2963
    %3198 = vmatpush1.bf16.msra.mxu0 %v2962
    %3199 = vmatprep.subr.bf16.mxu0 %v2967
    %3200 = vmatpush1.bf16.msra.mxu0 %v2966
    %3201 = vmatprep.subr.bf16.mxu0 %v2971
    %3202 = vmatpush1.bf16.msra.mxu0 %v2970
    %3203 = vmatprep.subr.bf16.mxu0 %v2975
    %3204 = vmatpush1.bf16.msra.mxu0 %v2974
    %3205 = vmatprep.subr.bf16.mxu0 %v2979
    %3206 = vmatpush1.bf16.msra.mxu0 %v2978
    %3207 = vmatprep.subr.bf16.mxu0 %v2983
    %3208 = vmatpush1.bf16.msra.mxu0 %v2982
    %3209 = vmatprep.mubr.bf16.mxu0 %v2469
    %3210 = vmatmul.mubr.bf16.gmra.mrb[0].mxu0 %v2468
    %v3211 = vpop.f32.mrb[0].mxu0
    %v3212 = vadd.f32 %v3171, %v3211
    %v3213 = vpop.f32.mrb[0].mxu0
    %v3214 = vadd.f32 %v3173, %v3213
    %v3215 = vpop.f32.mrb[0].mxu0
    %v3216 = vpop.f32.mrb[0].mxu0
    %3217 = vdwg.mxu0
    %3218 = vmatprep.subr.bf16.mxu0 %v2861
    %3219 = vmatpush1.bf16.msra.mxu0 %v2860
    %3220 = vmatprep.subr.bf16.mxu0 %v2865
    %3221 = vmatpush1.bf16.msra.mxu0 %v2864
    %3222 = vmatprep.subr.bf16.mxu0 %v2869
    %3223 = vmatpush1.bf16.msra.mxu0 %v2868
    %3224 = vmatprep.subr.bf16.mxu0 %v2873
    %3225 = vmatpush1.bf16.msra.mxu0 %v2872
    %3226 = vmatprep.subr.bf16.mxu0 %v2877
    %3227 = vmatpush1.bf16.msra.mxu0 %v2876
    %3228 = vmatprep.subr.bf16.mxu0 %v2881
    %3229 = vmatpush1.bf16.msra.mxu0 %v2880
    %3230 = vmatprep.subr.bf16.mxu0 %v2885
    %3231 = vmatpush1.bf16.msra.mxu0 %v2884
    %3232 = vmatprep.subr.bf16.mxu0 %v2889
    %3233 = vmatpush1.bf16.msra.mxu0 %v2888
    %3234 = vmatprep.subr.bf16.mxu0 %v2893
    %3235 = vmatpush1.bf16.msra.mxu0 %v2892
    %3236 = vmatprep.subr.bf16.mxu0 %v2897
    %3237 = vmatpush1.bf16.msra.mxu0 %v2896
    %3238 = vmatprep.subr.bf16.mxu0 %v2901
    %3239 = vmatpush1.bf16.msra.mxu0 %v2900
    %3240 = vmatprep.subr.bf16.mxu0 %v2905
    %3241 = vmatpush1.bf16.msra.mxu0 %v2904
    %3242 = vmatprep.subr.bf16.mxu0 %v2909
    %3243 = vmatpush1.bf16.msra.mxu0 %v2908
    %3244 = vmatprep.subr.bf16.mxu0 %v2913
    %3245 = vmatpush1.bf16.msra.mxu0 %v2912
    %3246 = vmatprep.subr.bf16.mxu0 %v2917
    %3247 = vmatpush1.bf16.msra.mxu0 %v2916
    %3248 = vmatprep.subr.bf16.mxu0 %v2921
    %3249 = vmatpush1.bf16.msra.mxu0 %v2920
    %3250 = vmatprep.mubr.bf16.mxu0 %v2467
    %3251 = vmatmul.mubr.bf16.gmra.mrb[0].mxu0 %v2466
    %v3252 = vpop.f32.mrb[0].mxu0
    %v3253 = vadd.f32 %v3129, %v3252
    %v3254 = vpop.f32.mrb[0].mxu0
    %v3255 = vadd.f32 %v3131, %v3254
    %v3256 = vpop.f32.mrb[0].mxu0
    %v3257 = vpop.f32.mrb[0].mxu0
    %3258 = vdwg.mxu0
    %3259 = vmatprep.subr.bf16.mxu0 %v2925
    %3260 = vmatpush1.bf16.msra.mxu0 %v2924
    %3261 = vmatprep.subr.bf16.mxu0 %v2929
    %3262 = vmatpush1.bf16.msra.mxu0 %v2928
    %3263 = vmatprep.subr.bf16.mxu0 %v2933
    %3264 = vmatpush1.bf16.msra.mxu0 %v2932
    %3265 = vmatprep.subr.bf16.mxu0 %v2937
    %3266 = vmatpush1.bf16.msra.mxu0 %v2936
    %3267 = vmatprep.subr.bf16.mxu0 %v2941
    %3268 = vmatpush1.bf16.msra.mxu0 %v2940
    %3269 = vmatprep.subr.bf16.mxu0 %v2945
    %3270 = vmatpush1.bf16.msra.mxu0 %v2944
    %3271 = vmatprep.subr.bf16.mxu0 %v2949
    %3272 = vmatpush1.bf16.msra.mxu0 %v2948
    %3273 = vmatprep.subr.bf16.mxu0 %v2953
    %3274 = vmatpush1.bf16.msra.mxu0 %v2952
    %3275 = vmatprep.subr.bf16.mxu0 %v2957
    %3276 = vmatpush1.bf16.msra.mxu0 %v2956
    %3277 = vmatprep.subr.bf16.mxu0 %v2961
    %3278 = vmatpush1.bf16.msra.mxu0 %v2960
    %3279 = vmatprep.subr.bf16.mxu0 %v2965
    %3280 = vmatpush1.bf16.msra.mxu0 %v2964
    %3281 = vmatprep.subr.bf16.mxu0 %v2969
    %3282 = vmatpush1.bf16.msra.mxu0 %v2968
    %3283 = vmatprep.subr.bf16.mxu0 %v2973
    %3284 = vmatpush1.bf16.msra.mxu0 %v2972
    %3285 = vmatprep.subr.bf16.mxu0 %v2977
    %3286 = vmatpush1.bf16.msra.mxu0 %v2976
    %3287 = vmatprep.subr.bf16.mxu0 %v2981
    %3288 = vmatpush1.bf16.msra.mxu0 %v2980
    %3289 = vmatprep.subr.bf16.mxu0 %v2985
    %3290 = vmatpush1.bf16.msra.mxu0 %v2984
    %3291 = vmatprep.mubr.bf16.mxu0 %v2469
    %3292 = vmatmul.mubr.bf16.gmra.mrb[0].mxu0 %v2468
    %v3293 = vpop.f32.mrb[0].mxu0
    %v3294 = vadd.f32 %v3253, %v3293
    %v3295 = vpop.f32.mrb[0].mxu0
    %v3296 = vadd.f32 %v3255, %v3295
    %v3297 = vpop.f32.mrb[0].mxu0
    %v3298 = vpop.f32.mrb[0].mxu0
    %3299 = vdwg.mxu0
    %v3300 = vmax.f32 %v3212, 0.0
    %v3301 = vmax.f32 %v3214, 0.0
    %v3302 = vmax.f32 %v3294, 0.0
    %v3303 = vmax.f32 %v3296, 0.0
    %v3304 = vpack.c.bf16 %v3300, %v3300
    %v3305 = vpack.c.bf16 %v3301, %v3301
    %v3306 = vpack.c.bf16 %v3302, %v3302
    %v3307 = vpack.c.bf16 %v3303, %v3303
    %v3308 = vld [vmem:[#allocation10] sm:$0xff]
    %v3309 = vld [vmem:[#allocation10 + $0x8] sm:$0xff]
    %v3310 = vld [vmem:[#allocation10 + $0x10] sm:$0xff]
    %v3311 = vld [vmem:[#allocation10 + $0x18] sm:$0xff]
    %v3312 = vld [vmem:[#allocation10 + $0x20] sm:$0xff]
    %v3313 = vld [vmem:[#allocation10 + $0x28] sm:$0xff]
    %v3314 = vld [vmem:[#allocation10 + $0x30] sm:$0xff]
    %v3315 = vld [vmem:[#allocation10 + $0x38] sm:$0xff]
    %v3316 = vld [vmem:[#allocation10 + $0x40] sm:$0xff]
    %v3317 = vld [vmem:[#allocation10 + $0x48] sm:$0xff]
    %v3318 = vld [vmem:[#allocation10 + $0x50] sm:$0xff]
    %v3319 = vld [vmem:[#allocation10 + $0x58] sm:$0xff]
    %v3320 = vld [vmem:[#allocation10 + $0x60] sm:$0xff]
    %v3321 = vld [vmem:[#allocation10 + $0x68] sm:$0xff]
    %v3322 = vld [vmem:[#allocation10 + $0x70] sm:$0xff]
    %v3323 = vld [vmem:[#allocation10 + $0x78] sm:$0xff]
    %v3324 = vld [vmem:[#allocation10 + $0x80] sm:$0xff]
    %v3325 = vld [vmem:[#allocation10 + $0x88] sm:$0xff]
    %v3326 = vld [vmem:[#allocation10 + $0x90] sm:$0xff]
    %v3327 = vld [vmem:[#allocation10 + $0x98] sm:$0xff]
    %v3328 = vld [vmem:[#allocation10 + $0xa0] sm:$0xff]
    %v3329 = vld [vmem:[#allocation10 + $0xa8] sm:$0xff]
    %v3330 = vld [vmem:[#allocation10 + $0xb0] sm:$0xff]
    %v3331 = vld [vmem:[#allocation10 + $0xb8] sm:$0xff]
    %v3332 = vld [vmem:[#allocation10 + $0xc0] sm:$0xff]
    %v3333 = vld [vmem:[#allocation10 + $0xc8] sm:$0xff]
    %v3334 = vld [vmem:[#allocation10 + $0xd0] sm:$0xff]
    %v3335 = vld [vmem:[#allocation10 + $0xd8] sm:$0xff]
    %v3336 = vld [vmem:[#allocation10 + $0xe0] sm:$0xff]
    %v3337 = vld [vmem:[#allocation10 + $0xe8] sm:$0xff]
    %v3338 = vld [vmem:[#allocation10 + $0xf0] sm:$0xff]
    %v3339 = vld [vmem:[#allocation10 + $0xf8] sm:$0xff]
    %v3340 = vld [vmem:[#allocation10 + $0x100] sm:$0xff]
    %v3341 = vld [vmem:[#allocation10 + $0x108] sm:$0xff]
    %v3342 = vld [vmem:[#allocation10 + $0x110] sm:$0xff]
    %v3343 = vld [vmem:[#allocation10 + $0x118] sm:$0xff]
    %v3344 = vld [vmem:[#allocation10 + $0x120] sm:$0xff]
    %v3345 = vld [vmem:[#allocation10 + $0x128] sm:$0xff]
    %v3346 = vld [vmem:[#allocation10 + $0x130] sm:$0xff]
    %v3347 = vld [vmem:[#allocation10 + $0x138] sm:$0xff]
    %v3348 = vld [vmem:[#allocation10 + $0x140] sm:$0xff]
    %v3349 = vld [vmem:[#allocation10 + $0x148] sm:$0xff]
    %v3350 = vld [vmem:[#allocation10 + $0x150] sm:$0xff]
    %v3351 = vld [vmem:[#allocation10 + $0x158] sm:$0xff]
    %v3352 = vld [vmem:[#allocation10 + $0x160] sm:$0xff]
    %v3353 = vld [vmem:[#allocation10 + $0x168] sm:$0xff]
    %v3354 = vld [vmem:[#allocation10 + $0x170] sm:$0xff]
    %v3355 = vld [vmem:[#allocation10 + $0x178] sm:$0xff]
    %v3356 = vld [vmem:[#allocation10 + $0x180] sm:$0xff]
    %v3357 = vld [vmem:[#allocation10 + $0x188] sm:$0xff]
    %v3358 = vld [vmem:[#allocation10 + $0x190] sm:$0xff]
    %v3359 = vld [vmem:[#allocation10 + $0x198] sm:$0xff]
    %v3360 = vld [vmem:[#allocation10 + $0x1a0] sm:$0xff]
    %v3361 = vld [vmem:[#allocation10 + $0x1a8] sm:$0xff]
    %v3362 = vld [vmem:[#allocation10 + $0x1b0] sm:$0xff]
    %v3363 = vld [vmem:[#allocation10 + $0x1b8] sm:$0xff]
    %v3364 = vld [vmem:[#allocation10 + $0x1c0] sm:$0xff]
    %v3365 = vld [vmem:[#allocation10 + $0x1c8] sm:$0xff]
    %v3366 = vld [vmem:[#allocation10 + $0x1d0] sm:$0xff]
    %v3367 = vld [vmem:[#allocation10 + $0x1d8] sm:$0xff]
    %v3368 = vld [vmem:[#allocation10 + $0x1e0] sm:$0xff]
    %v3369 = vld [vmem:[#allocation10 + $0x1e8] sm:$0xff]
    %v3370 = vld [vmem:[#allocation10 + $0x1f0] sm:$0xff]
    %v3371 = vld [vmem:[#allocation10 + $0x1f8] sm:$0xff]
    %v3373 = vlaneseq
    %v3374 = vshrl.u32 %v3373, 7
    %v3375 = vsub.s32 0, %v3374
    %v3376 = vrot.slane %v107, %v3375
    %v3377 = vlaneseq
    %v3378 = vshrl.u32 %v3377, 7
    %v3379 = vsub.s32 1, %v3378
    %v3380 = vrot.slane %v107, %v3379
    %v3447 = vunpack.c.l.b16 %v3308
    %v3448 = vunpack.c.h.b16 %v3308
    %v3449 = vunpack.c.l.b16 %v3309
    %v3450 = vunpack.c.h.b16 %v3309
    %v3451 = vunpack.c.l.b16 %v3310
    %v3452 = vunpack.c.h.b16 %v3310
    %v3453 = vunpack.c.l.b16 %v3311
    %v3454 = vunpack.c.h.b16 %v3311
    %v3455 = vunpack.c.l.b16 %v3312
    %v3456 = vunpack.c.h.b16 %v3312
    %v3457 = vunpack.c.l.b16 %v3313
    %v3458 = vunpack.c.h.b16 %v3313
    %v3459 = vunpack.c.l.b16 %v3314
    %v3460 = vunpack.c.h.b16 %v3314
    %v3461 = vunpack.c.l.b16 %v3315
    %v3462 = vunpack.c.h.b16 %v3315
    %v3463 = vunpack.c.l.b16 %v3316
    %v3464 = vunpack.c.h.b16 %v3316
    %v3465 = vunpack.c.l.b16 %v3317
    %v3466 = vunpack.c.h.b16 %v3317
    %v3467 = vunpack.c.l.b16 %v3318
    %v3468 = vunpack.c.h.b16 %v3318
    %v3469 = vunpack.c.l.b16 %v3319
    %v3470 = vunpack.c.h.b16 %v3319
    %v3471 = vunpack.c.l.b16 %v3320
    %v3472 = vunpack.c.h.b16 %v3320
    %v3473 = vunpack.c.l.b16 %v3321
    %v3474 = vunpack.c.h.b16 %v3321
    %v3475 = vunpack.c.l.b16 %v3322
    %v3476 = vunpack.c.h.b16 %v3322
    %v3477 = vunpack.c.l.b16 %v3323
    %v3478 = vunpack.c.h.b16 %v3323
    %v3479 = vunpack.c.l.b16 %v3324
    %v3480 = vunpack.c.h.b16 %v3324
    %v3481 = vunpack.c.l.b16 %v3325
    %v3482 = vunpack.c.h.b16 %v3325
    %v3483 = vunpack.c.l.b16 %v3326
    %v3484 = vunpack.c.h.b16 %v3326
    %v3485 = vunpack.c.l.b16 %v3327
    %v3486 = vunpack.c.h.b16 %v3327
    %v3487 = vunpack.c.l.b16 %v3328
    %v3488 = vunpack.c.h.b16 %v3328
    %v3489 = vunpack.c.l.b16 %v3329
    %v3490 = vunpack.c.h.b16 %v3329
    %v3491 = vunpack.c.l.b16 %v3330
    %v3492 = vunpack.c.h.b16 %v3330
    %v3493 = vunpack.c.l.b16 %v3331
    %v3494 = vunpack.c.h.b16 %v3331
    %v3495 = vunpack.c.l.b16 %v3332
    %v3496 = vunpack.c.h.b16 %v3332
    %v3497 = vunpack.c.l.b16 %v3333
    %v3498 = vunpack.c.h.b16 %v3333
    %v3499 = vunpack.c.l.b16 %v3334
    %v3500 = vunpack.c.h.b16 %v3334
    %v3501 = vunpack.c.l.b16 %v3335
    %v3502 = vunpack.c.h.b16 %v3335
    %v3503 = vunpack.c.l.b16 %v3336
    %v3504 = vunpack.c.h.b16 %v3336
    %v3505 = vunpack.c.l.b16 %v3337
    %v3506 = vunpack.c.h.b16 %v3337
    %v3507 = vunpack.c.l.b16 %v3338
    %v3508 = vunpack.c.h.b16 %v3338
    %v3509 = vunpack.c.l.b16 %v3339
    %v3510 = vunpack.c.h.b16 %v3339
    %v3511 = vunpack.c.l.b16 %v3340
    %v3512 = vunpack.c.h.b16 %v3340
    %v3513 = vunpack.c.l.b16 %v3341
    %v3514 = vunpack.c.h.b16 %v3341
    %v3515 = vunpack.c.l.b16 %v3342
    %v3516 = vunpack.c.h.b16 %v3342
    %v3517 = vunpack.c.l.b16 %v3343
    %v3518 = vunpack.c.h.b16 %v3343
    %v3519 = vunpack.c.l.b16 %v3344
    %v3520 = vunpack.c.h.b16 %v3344
    %v3521 = vunpack.c.l.b16 %v3345
    %v3522 = vunpack.c.h.b16 %v3345
    %v3523 = vunpack.c.l.b16 %v3346
    %v3524 = vunpack.c.h.b16 %v3346
    %v3525 = vunpack.c.l.b16 %v3347
    %v3526 = vunpack.c.h.b16 %v3347
    %v3527 = vunpack.c.l.b16 %v3348
    %v3528 = vunpack.c.h.b16 %v3348
    %v3529 = vunpack.c.l.b16 %v3349
    %v3530 = vunpack.c.h.b16 %v3349
    %v3531 = vunpack.c.l.b16 %v3350
    %v3532 = vunpack.c.h.b16 %v3350
    %v3533 = vunpack.c.l.b16 %v3351
    %v3534 = vunpack.c.h.b16 %v3351
    %v3535 = vunpack.c.l.b16 %v3352
    %v3536 = vunpack.c.h.b16 %v3352
    %v3537 = vunpack.c.l.b16 %v3353
    %v3538 = vunpack.c.h.b16 %v3353
    %v3539 = vunpack.c.l.b16 %v3354
    %v3540 = vunpack.c.h.b16 %v3354
    %v3541 = vunpack.c.l.b16 %v3355
    %v3542 = vunpack.c.h.b16 %v3355
    %v3543 = vunpack.c.l.b16 %v3356
    %v3544 = vunpack.c.h.b16 %v3356
    %v3545 = vunpack.c.l.b16 %v3357
    %v3546 = vunpack.c.h.b16 %v3357
    %v3547 = vunpack.c.l.b16 %v3358
    %v3548 = vunpack.c.h.b16 %v3358
    %v3549 = vunpack.c.l.b16 %v3359
    %v3550 = vunpack.c.h.b16 %v3359
    %v3551 = vunpack.c.l.b16 %v3360
    %v3552 = vunpack.c.h.b16 %v3360
    %v3553 = vunpack.c.l.b16 %v3361
    %v3554 = vunpack.c.h.b16 %v3361
    %v3555 = vunpack.c.l.b16 %v3362
    %v3556 = vunpack.c.h.b16 %v3362
    %v3557 = vunpack.c.l.b16 %v3363
    %v3558 = vunpack.c.h.b16 %v3363
    %v3559 = vunpack.c.l.b16 %v3364
    %v3560 = vunpack.c.h.b16 %v3364
    %v3561 = vunpack.c.l.b16 %v3365
    %v3562 = vunpack.c.h.b16 %v3365
    %v3563 = vunpack.c.l.b16 %v3366
    %v3564 = vunpack.c.h.b16 %v3366
    %v3565 = vunpack.c.l.b16 %v3367
    %v3566 = vunpack.c.h.b16 %v3367
    %v3567 = vunpack.c.l.b16 %v3368
    %v3568 = vunpack.c.h.b16 %v3368
    %v3569 = vunpack.c.l.b16 %v3369
    %v3570 = vunpack.c.h.b16 %v3369
    %v3571 = vunpack.c.l.b16 %v3370
    %v3572 = vunpack.c.h.b16 %v3370
    %v3573 = vunpack.c.l.b16 %v3371
    %v3574 = vunpack.c.h.b16 %v3371
    %v3575 = vpack.c.b16 %v3449, %v3447
    %v3576 = vpack.c.b16 %v3450, %v3448
    %v3577 = vpack.c.b16 %v3453, %v3451
    %v3578 = vpack.c.b16 %v3454, %v3452
    %v3579 = vpack.c.b16 %v3457, %v3455
    %v3580 = vpack.c.b16 %v3458, %v3456
    %v3581 = vpack.c.b16 %v3461, %v3459
    %v3582 = vpack.c.b16 %v3462, %v3460
    %v3583 = vpack.c.b16 %v3465, %v3463
    %v3584 = vpack.c.b16 %v3466, %v3464
    %v3585 = vpack.c.b16 %v3469, %v3467
    %v3586 = vpack.c.b16 %v3470, %v3468
    %v3587 = vpack.c.b16 %v3473, %v3471
    %v3588 = vpack.c.b16 %v3474, %v3472
    %v3589 = vpack.c.b16 %v3477, %v3475
    %v3590 = vpack.c.b16 %v3478, %v3476
    %v3591 = vpack.c.b16 %v3481, %v3479
    %v3592 = vpack.c.b16 %v3482, %v3480
    %v3593 = vpack.c.b16 %v3485, %v3483
    %v3594 = vpack.c.b16 %v3486, %v3484
    %v3595 = vpack.c.b16 %v3489, %v3487
    %v3596 = vpack.c.b16 %v3490, %v3488
    %v3597 = vpack.c.b16 %v3493, %v3491
    %v3598 = vpack.c.b16 %v3494, %v3492
    %v3599 = vpack.c.b16 %v3497, %v3495
    %v3600 = vpack.c.b16 %v3498, %v3496
    %v3601 = vpack.c.b16 %v3501, %v3499
    %v3602 = vpack.c.b16 %v3502, %v3500
    %v3603 = vpack.c.b16 %v3505, %v3503
    %v3604 = vpack.c.b16 %v3506, %v3504
    %v3605 = vpack.c.b16 %v3509, %v3507
    %v3606 = vpack.c.b16 %v3510, %v3508
    %v3607 = vpack.c.b16 %v3513, %v3511
    %v3608 = vpack.c.b16 %v3514, %v3512
    %v3609 = vpack.c.b16 %v3517, %v3515
    %v3610 = vpack.c.b16 %v3518, %v3516
    %v3611 = vpack.c.b16 %v3521, %v3519
    %v3612 = vpack.c.b16 %v3522, %v3520
    %v3613 = vpack.c.b16 %v3525, %v3523
    %v3614 = vpack.c.b16 %v3526, %v3524
    %v3615 = vpack.c.b16 %v3529, %v3527
    %v3616 = vpack.c.b16 %v3530, %v3528
    %v3617 = vpack.c.b16 %v3533, %v3531
    %v3618 = vpack.c.b16 %v3534, %v3532
    %v3619 = vpack.c.b16 %v3537, %v3535
    %v3620 = vpack.c.b16 %v3538, %v3536
    %v3621 = vpack.c.b16 %v3541, %v3539
    %v3622 = vpack.c.b16 %v3542, %v3540
    %v3623 = vpack.c.b16 %v3545, %v3543
    %v3624 = vpack.c.b16 %v3546, %v3544
    %v3625 = vpack.c.b16 %v3549, %v3547
    %v3626 = vpack.c.b16 %v3550, %v3548
    %v3627 = vpack.c.b16 %v3553, %v3551
    %v3628 = vpack.c.b16 %v3554, %v3552
    %v3629 = vpack.c.b16 %v3557, %v3555
    %v3630 = vpack.c.b16 %v3558, %v3556
    %v3631 = vpack.c.b16 %v3561, %v3559
    %v3632 = vpack.c.b16 %v3562, %v3560
    %v3633 = vpack.c.b16 %v3565, %v3563
    %v3634 = vpack.c.b16 %v3566, %v3564
    %v3635 = vpack.c.b16 %v3569, %v3567
    %v3636 = vpack.c.b16 %v3570, %v3568
    %v3637 = vpack.c.b16 %v3573, %v3571
    %v3638 = vpack.c.b16 %v3574, %v3572
    %3703 = vmatprep.subr.bf16.mxu0 %v3576
    %3704 = vmatpush1.bf16.msra.mxu0 %v3575
    %3705 = vmatprep.subr.bf16.mxu0 %v3578
    %3706 = vmatpush1.bf16.msra.mxu0 %v3577
    %3707 = vmatprep.subr.bf16.mxu0 %v3580
    %3708 = vmatpush1.bf16.msra.mxu0 %v3579
    %3709 = vmatprep.subr.bf16.mxu0 %v3582
    %3710 = vmatpush1.bf16.msra.mxu0 %v3581
    %3711 = vmatprep.subr.bf16.mxu0 %v3584
    %3712 = vmatpush1.bf16.msra.mxu0 %v3583
    %3713 = vmatprep.subr.bf16.mxu0 %v3586
    %3714 = vmatpush1.bf16.msra.mxu0 %v3585
    %3715 = vmatprep.subr.bf16.mxu0 %v3588
    %3716 = vmatpush1.bf16.msra.mxu0 %v3587
    %3717 = vmatprep.subr.bf16.mxu0 %v3590
    %3718 = vmatpush1.bf16.msra.mxu0 %v3589
    %3719 = vmatprep.subr.bf16.mxu0 %v3592
    %3720 = vmatpush1.bf16.msra.mxu0 %v3591
    %3721 = vmatprep.subr.bf16.mxu0 %v3594
    %3722 = vmatpush1.bf16.msra.mxu0 %v3593
    %3723 = vmatprep.subr.bf16.mxu0 %v3596
    %3724 = vmatpush1.bf16.msra.mxu0 %v3595
    %3725 = vmatprep.subr.bf16.mxu0 %v3598
    %3726 = vmatpush1.bf16.msra.mxu0 %v3597
    %3727 = vmatprep.subr.bf16.mxu0 %v3600
    %3728 = vmatpush1.bf16.msra.mxu0 %v3599
    %3729 = vmatprep.subr.bf16.mxu0 %v3602
    %3730 = vmatpush1.bf16.msra.mxu0 %v3601
    %3731 = vmatprep.subr.bf16.mxu0 %v3604
    %3732 = vmatpush1.bf16.msra.mxu0 %v3603
    %3733 = vmatprep.subr.bf16.mxu0 %v3606
    %3734 = vmatpush1.bf16.msra.mxu0 %v3605
    %3735 = vmatprep.mubr.bf16.mxu0 %v3305
    %3736 = vmatmul.mubr.bf16.gmra.mrb[0].mxu0 %v3304
    %v3737 = vpop.f32.mrb[0].mxu0
    %v3738 = vadd.f32 %v3376, %v3737
    %v3739 = vpop.f32.mrb[0].mxu0
    %v3740 = vadd.f32 %v3380, %v3739
    %v3741 = vpop.f32.mrb[0].mxu0
    %v3742 = vpop.f32.mrb[0].mxu0
    %3743 = vdwg.mxu0
    %3744 = vmatprep.subr.bf16.mxu0 %v3608
    %3745 = vmatpush1.bf16.msra.mxu0 %v3607
    %3746 = vmatprep.subr.bf16.mxu0 %v3610
    %3747 = vmatpush1.bf16.msra.mxu0 %v3609
    %3748 = vmatprep.subr.bf16.mxu0 %v3612
    %3749 = vmatpush1.bf16.msra.mxu0 %v3611
    %3750 = vmatprep.subr.bf16.mxu0 %v3614
    %3751 = vmatpush1.bf16.msra.mxu0 %v3613
    %3752 = vmatprep.subr.bf16.mxu0 %v3616
    %3753 = vmatpush1.bf16.msra.mxu0 %v3615
    %3754 = vmatprep.subr.bf16.mxu0 %v3618
    %3755 = vmatpush1.bf16.msra.mxu0 %v3617
    %3756 = vmatprep.subr.bf16.mxu0 %v3620
    %3757 = vmatpush1.bf16.msra.mxu0 %v3619
    %3758 = vmatprep.subr.bf16.mxu0 %v3622
    %3759 = vmatpush1.bf16.msra.mxu0 %v3621
    %3760 = vmatprep.subr.bf16.mxu0 %v3624
    %3761 = vmatpush1.bf16.msra.mxu0 %v3623
    %3762 = vmatprep.subr.bf16.mxu0 %v3626
    %3763 = vmatpush1.bf16.msra.mxu0 %v3625
    %3764 = vmatprep.subr.bf16.mxu0 %v3628
    %3765 = vmatpush1.bf16.msra.mxu0 %v3627
    %3766 = vmatprep.subr.bf16.mxu0 %v3630
    %3767 = vmatpush1.bf16.msra.mxu0 %v3629
    %3768 = vmatprep.subr.bf16.mxu0 %v3632
    %3769 = vmatpush1.bf16.msra.mxu0 %v3631
    %3770 = vmatprep.subr.bf16.mxu0 %v3634
    %3771 = vmatpush1.bf16.msra.mxu0 %v3633
    %3772 = vmatprep.subr.bf16.mxu0 %v3636
    %3773 = vmatpush1.bf16.msra.mxu0 %v3635
    %3774 = vmatprep.subr.bf16.mxu0 %v3638
    %3775 = vmatpush1.bf16.msra.mxu0 %v3637
    %3776 = vmatprep.mubr.bf16.mxu0 %v3307
    %3777 = vmatmul.mubr.bf16.gmra.mrb[0].mxu0 %v3306
    %v3778 = vpop.f32.mrb[0].mxu0
    %v3779 = vadd.f32 %v3738, %v3778
    %v3780 = vpop.f32.mrb[0].mxu0
    %v3781 = vadd.f32 %v3740, %v3780
    %v3782 = vpop.f32.mrb[0].mxu0
    %v3783 = vpop.f32.mrb[0].mxu0
    %3784 = vdwg.mxu0
    %v3785 = vmax.f32 %v3779, 0.0
    %v3786 = vmax.f32 %v3781, 0.0
    %v3787 = vpack.c.bf16 %v3785, %v3785
    %v3788 = vpack.c.bf16 %v3786, %v3786
    %v3789 = vld [vmem:[%s7] sm:$0xf]
    %v3790 = vld [vmem:[%s7 + $0x4] sm:$0xf]
    %v3791 = vld [vmem:[%s7 + $0x8] sm:$0xf]
    %v3792 = vld [vmem:[%s7 + $0xc] sm:$0xf]
    %v3793 = vld [vmem:[%s7 + $0x10] sm:$0xf]
    %v3794 = vld [vmem:[%s7 + $0x14] sm:$0xf]
    %v3795 = vld [vmem:[%s7 + $0x18] sm:$0xf]
    %v3796 = vld [vmem:[%s7 + $0x1c] sm:$0xf]
    %v3797 = vld [vmem:[%s7 + $0x20] sm:$0xf]
    %v3798 = vld [vmem:[%s7 + $0x24] sm:$0xf]
    %v3799 = vld [vmem:[%s7 + $0x28] sm:$0xf]
    %v3800 = vld [vmem:[%s7 + $0x2c] sm:$0xf]
    %v3801 = vld [vmem:[%s7 + $0x30] sm:$0xf]
    %v3802 = vld [vmem:[%s7 + $0x34] sm:$0xf]
    %v3803 = vld [vmem:[%s7 + $0x38] sm:$0xf]
    %v3804 = vld [vmem:[%s7 + $0x3c] sm:$0xf]
    %v3805 = vld [vmem:[%s7 + $0x40] sm:$0xf]
    %v3806 = vld [vmem:[%s7 + $0x44] sm:$0xf]
    %v3807 = vld [vmem:[%s7 + $0x48] sm:$0xf]
    %v3808 = vld [vmem:[%s7 + $0x4c] sm:$0xf]
    %v3809 = vld [vmem:[%s7 + $0x50] sm:$0xf]
    %v3810 = vld [vmem:[%s7 + $0x54] sm:$0xf]
    %v3811 = vld [vmem:[%s7 + $0x58] sm:$0xf]
    %v3812 = vld [vmem:[%s7 + $0x5c] sm:$0xf]
    %v3813 = vld [vmem:[%s7 + $0x60] sm:$0xf]
    %v3814 = vld [vmem:[%s7 + $0x64] sm:$0xf]
    %v3815 = vld [vmem:[%s7 + $0x68] sm:$0xf]
    %v3816 = vld [vmem:[%s7 + $0x6c] sm:$0xf]
    %v3817 = vld [vmem:[%s7 + $0x70] sm:$0xf]
    %v3818 = vld [vmem:[%s7 + $0x74] sm:$0xf]
    %v3819 = vld [vmem:[%s7 + $0x78] sm:$0xf]
    %v3820 = vld [vmem:[%s7 + $0x7c] sm:$0xf]
    %v3822 = vlaneseq
    %v3823 = vshrl.u32 %v3822, 7
    %v3824 = vsub.s32 0, %v3823
    %v3825 = vrot.slane %v108, %v3824
    %v3859 = vunpack.c.l.b16 %v3789
    %v3860 = vunpack.c.l.b16 %v3790
    %v3861 = vunpack.c.l.b16 %v3791
    %v3862 = vunpack.c.l.b16 %v3792
    %v3863 = vunpack.c.l.b16 %v3793
    %v3864 = vunpack.c.l.b16 %v3794
    %v3865 = vunpack.c.l.b16 %v3795
    %v3866 = vunpack.c.l.b16 %v3796
    %v3867 = vunpack.c.l.b16 %v3797
    %v3868 = vunpack.c.l.b16 %v3798
    %v3869 = vunpack.c.l.b16 %v3799
    %v3870 = vunpack.c.l.b16 %v3800
    %v3871 = vunpack.c.l.b16 %v3801
    %v3872 = vunpack.c.l.b16 %v3802
    %v3873 = vunpack.c.l.b16 %v3803
    %v3874 = vunpack.c.l.b16 %v3804
    %v3875 = vunpack.c.l.b16 %v3805
    %v3876 = vunpack.c.l.b16 %v3806
    %v3877 = vunpack.c.l.b16 %v3807
    %v3878 = vunpack.c.l.b16 %v3808
    %v3879 = vunpack.c.l.b16 %v3809
    %v3880 = vunpack.c.l.b16 %v3810
    %v3881 = vunpack.c.l.b16 %v3811
    %v3882 = vunpack.c.l.b16 %v3812
    %v3883 = vunpack.c.l.b16 %v3813
    %v3884 = vunpack.c.l.b16 %v3814
    %v3885 = vunpack.c.l.b16 %v3815
    %v3886 = vunpack.c.l.b16 %v3816
    %v3887 = vunpack.c.l.b16 %v3817
    %v3888 = vunpack.c.l.b16 %v3818
    %v3889 = vunpack.c.l.b16 %v3819
    %v3890 = vunpack.c.l.b16 %v3820
    %v3891 = vpack.c.b16 %v3860, %v3859
    %v3892 = vpack.c.b16 %v3862, %v3861
    %v3893 = vpack.c.b16 %v3864, %v3863
    %v3894 = vpack.c.b16 %v3866, %v3865
    %v3895 = vpack.c.b16 %v3868, %v3867
    %v3896 = vpack.c.b16 %v3870, %v3869
    %v3897 = vpack.c.b16 %v3872, %v3871
    %v3898 = vpack.c.b16 %v3874, %v3873
    %v3899 = vpack.c.b16 %v3876, %v3875
    %v3900 = vpack.c.b16 %v3878, %v3877
    %v3901 = vpack.c.b16 %v3880, %v3879
    %v3902 = vpack.c.b16 %v3882, %v3881
    %v3903 = vpack.c.b16 %v3884, %v3883
    %v3904 = vpack.c.b16 %v3886, %v3885
    %v3905 = vpack.c.b16 %v3888, %v3887
    %v3906 = vpack.c.b16 %v3890, %v3889
    %3923 = vmatprep.subr.bf16.mxu0 0
    %3924 = vmatpush1.bf16.msra.mxu0 %v3891
    %3925 = vmatprep.subr.bf16.mxu0 0
    %3926 = vmatpush1.bf16.msra.mxu0 %v3892
    %3927 = vmatprep.subr.bf16.mxu0 0
    %3928 = vmatpush1.bf16.msra.mxu0 %v3893
    %3929 = vmatprep.subr.bf16.mxu0 0
    %3930 = vmatpush1.bf16.msra.mxu0 %v3894
    %3931 = vmatprep.subr.bf16.mxu0 0
    %3932 = vmatpush1.bf16.msra.mxu0 %v3895
    %3933 = vmatprep.subr.bf16.mxu0 0
    %3934 = vmatpush1.bf16.msra.mxu0 %v3896
    %3935 = vmatprep.subr.bf16.mxu0 0
    %3936 = vmatpush1.bf16.msra.mxu0 %v3897
    %3937 = vmatprep.subr.bf16.mxu0 0
    %3938 = vmatpush1.bf16.msra.mxu0 %v3898
    %3939 = vmatprep.subr.bf16.mxu0 0
    %3940 = vmatpush1.bf16.msra.mxu0 %v3899
    %3941 = vmatprep.subr.bf16.mxu0 0
    %3942 = vmatpush1.bf16.msra.mxu0 %v3900
    %3943 = vmatprep.subr.bf16.mxu0 0
    %3944 = vmatpush1.bf16.msra.mxu0 %v3901
    %3945 = vmatprep.subr.bf16.mxu0 0
    %3946 = vmatpush1.bf16.msra.mxu0 %v3902
    %3947 = vmatprep.subr.bf16.mxu0 0
    %3948 = vmatpush1.bf16.msra.mxu0 %v3903
    %3949 = vmatprep.subr.bf16.mxu0 0
    %3950 = vmatpush1.bf16.msra.mxu0 %v3904
    %3951 = vmatprep.subr.bf16.mxu0 0
    %3952 = vmatpush1.bf16.msra.mxu0 %v3905
    %3953 = vmatprep.subr.bf16.mxu0 0
    %3954 = vmatpush1.bf16.msra.mxu0 %v3906
    %3955 = vmatprep.mubr.bf16.mxu0 %v3788
    %3956 = vmatmul.mubr.bf16.gmra.mrb[0].mxu0 %v3787
    %v3957 = vpop.f32.mrb[0].mxu0
    %v3958 = vadd.f32 %v3825, %v3957
    %v3959 = vpop.f32.mrb[0].mxu0
    %v3960 = vpop.f32.mrb[0].mxu0
    %v3961 = vpop.f32.mrb[0].mxu0
    %3962 = vdwg.mxu0
    %3963 = vst [vmem:[#allocation11] sm:$0x3] %v3958
    // Predicated region
    $region62: #{tpu_custom_call.1} parent=1 // pred_check
      _
    $region63: #{tpu_custom_call.1} parent=1 // pred_check_branch
      %3965 = sbr.rel (0) target = $region65
    $region64: #{tpu_custom_call.1} parent=1 // pred_region
      %s3967 = ssub.s32 32, 32
      %3968 = vsyncadd [#allocation4], %s3967
      %s3970 = sshll.u32 [#allocation11], 4
      %s3971 = int_to_ptr.vmem [resolvable:$true] %s3970
      %3973 = dma.vmem_to_hbm [thread:$0]  %s3971, 32, %s10, [#allocation4]
    $region65: #{tpu_custom_call.1} parent=1 // pred_fallthru
      _
    // Predicated region
    $region66: #{tpu_custom_call.1} parent=1 // pred_check
      _
    $region67: #{tpu_custom_call.1} parent=1 // pred_check_branch
      %3975 = sbr.rel (0) target = $region69
    $region68: #{tpu_custom_call.1} parent=1 // pred_region
      %3976 = dma.done [#allocation4], 32
    $region69: #{tpu_custom_call.1} parent=1 // pred_fallthru
      _
    %3977 = vsyncpa [#allocation3], 1
    %3978 = vsyncpa [#allocation6], 1
    %3979 = vsyncpa [#allocation9], 1
    %3980 = vsyncpa [#allocation4], 1

</llo_original>
